<compile_context>
chip_gen: v5e
topology: v5e:2x2
jax: 0.10.0
libtpu: 0.0.40
codegen_flags: <defaults>
</compile_context>

<pallas_src>
import functools

import jax
import jax.numpy as jnp
from jax.experimental import pallas as pl
from jax.experimental.pallas import tpu as pltpu


# ---------------------------------------------------------------------------
# Pallas kernel: fused pad(conv) + bias + activation, stride folded in-kernel
# ---------------------------------------------------------------------------
def _conv_block_kernel(x_ref, w_ref, b_ref, o_ref, *, k, tile_oh, wo, cin,
                       stride, activation, fold_taps):
    # x_ref: (1, Hp, Wp, Cin)      bf16  -- whole padded plane of this batch elem
    # w_ref: (k*k*Cin, Cp)         bf16  (fold_taps)   or (k*k, Cin, Cp) bf16
    # b_ref: (1, Cp)               f32
    # o_ref: (1, tile_oh, wo, Cp)  bf16 (or requested out dtype)
    r = pl.program_id(1)
    step = tile_oh * stride
    in_row0 = pl.multiple_of(r * step, step)      # first input row of this tile
    tile_m = tile_oh * wo
    cp = o_ref.shape[-1]

    def tap_slab(dh, dw):
        # Window of the resident plane feeding output tap (dh, dw).
        if stride == 1:
            return x_ref[0, pl.ds(in_row0 + dh, tile_oh), pl.ds(dw, wo), :]
        return x_ref[0, pl.ds(in_row0 + dh, tile_oh, stride=stride),
                     pl.ds(dw, wo, stride=stride), :]

    if fold_taps:
        # Fused im2col: concat the k*k shifted windows along the channel/lane
        # axis -> (tile_m, k*k*Cin), then ONE MXU dot with K = k*k*Cin.
        slabs = [tap_slab(dh, dw) for dh in range(k) for dw in range(k)]
        patches = jnp.concatenate(slabs, axis=-1)          # (tile_oh, wo, kkc)
        x_mat = patches.reshape(tile_m, k * k * cin)        # bf16
        acc = jnp.dot(x_mat, w_ref[...], preferred_element_type=jnp.float32)
    else:
        # Fallback: one small-K dot per tap (previous, known-good formulation).
        acc = jnp.zeros((tile_m, cp), jnp.float32)
        for dh in range(k):
            for dw in range(k):
                x_mat = tap_slab(dh, dw).reshape(tile_m, cin)
                acc = acc + jnp.dot(x_mat, w_ref[dh * k + dw],
                                    preferred_element_type=jnp.float32)

    acc = acc + b_ref[...]                                  # bias in f32
    if activation == "relu":
        acc = jnp.maximum(acc, 0.0)
    elif activation == "lrelu":
        acc = jnp.where(acc > 0.0, acc, 0.2 * acc)          # LeakyReLU(0.2)
    elif activation == "tanh":
        acc = jnp.tanh(acc)
    elif activation == "sigmoid":
        acc = jax.nn.sigmoid(acc)
    elif activation == "selu":
        acc = jax.nn.selu(acc)
    # activation == "none": identity

    o_ref[0] = acc.reshape(tile_oh, wo, cp).astype(o_ref.dtype)


def _round_up(x, m):
    return (x + m - 1) // m * m


def _pick_tile_oh(ho, wo, target_rows=256, force_split=False):
    """Largest divisor of Ho with tile_oh*wo close to target_rows.

    In-kernel reshapes stay layout-trivial only when wo % 8 == 0; otherwise
    fall back to one output row per grid step.  force_split keeps >=2 row
    tiles so both v7x TensorCores get work when the batch axis is 1.
    """
    if wo % 8 != 0:
        return 1
    cap = max(1, target_rows // wo)
    if force_split:
        cap = max(1, min(cap, ho // 2))
    best = 1
    for t in range(1, ho + 1):
        if ho % t == 0 and t <= cap:
            best = t
    return best


# ---------------------------------------------------------------------------
# Wrapper: Conv2dBlock forward (pad -> conv(+bias) -> activation), NCHW API
# ---------------------------------------------------------------------------
def conv2d_block_forward(x_nchw, weight_oihw, bias, *, stride=1, padding=0,
                         norm="none", activation="relu", pad_type="zero",
                         fold_taps=True, out_dtype=jnp.bfloat16,
                         target_rows=256):
    if norm != "none":
        # TODO(synk): bn/instance/ln/adain/group norms and SpectralNorm ('sn')
        # are not implemented in this kernel.
        raise NotImplementedError(f"norm={norm!r} not supported")
    if activation not in ("relu", "lrelu", "tanh", "sigmoid", "selu", "none"):
        # TODO(synk): PReLU needs a learned slope parameter.
        raise NotImplementedError(f"activation={activation!r} not supported")

    cout, cin, k, _ = weight_oihw.shape
    n, _, h, w = x_nchw.shape
    s = int(stride)

    # NCHW -> NHWC (channels on lanes) and bf16 up front (MXU consumes bf16);
    # padding-layer of the module (zero / reflect / replicate) fused here.
    x = jnp.transpose(x_nchw, (0, 2, 3, 1)).astype(jnp.bfloat16)
    mode = {"zero": "constant", "reflect": "reflect", "replicate": "edge"}[pad_type]
    if padding > 0:
        x = jnp.pad(x, ((0, 0), (padding, padding), (padding, padding), (0, 0)),
                    mode=mode)
    hp, wp = h + 2 * padding, w + 2 * padding
    ho, wo = (hp - k) // s + 1, (wp - k) // s + 1

    # Weights: (Cout,Cin,k,k) -> (k,k,Cin,Cout) -> im2col layout, bf16,
    # Cout zero-padded to a multiple of 128 for lane-dense (unmasked) stores.
    cp = _round_up(cout, 128)
    kkc = k * k * cin
    w4 = jnp.transpose(weight_oihw, (2, 3, 1, 0)).astype(jnp.bfloat16)
    w4 = jnp.pad(w4, ((0, 0), (0, 0), (0, 0), (0, cp - cout)))
    w_arr = w4.reshape(kkc, cp) if fold_taps else w4.reshape(k * k, cin, cp)
    b2 = jnp.pad(bias.astype(jnp.float32), (0, cp - cout)).reshape(1, cp)

    tile_oh = _pick_tile_oh(ho, wo, target_rows=target_rows,
                            force_split=(n == 1))
    tile_m = tile_oh * wo
    grid = (n, ho // tile_oh)

    # Explicit VMEM budget: double-buffered plane + params + out tile + working
    # set, with margin, capped at 48 MiB (safe under v7x's 64 MiB physical).
    # TODO(synk): planes larger than this need the manual row-halo DMA path.
    out_itemsize = jnp.dtype(out_dtype).itemsize
    est_bytes = (2 * hp * wp * cin * 2                  # x plane (bf16), 2 bufs
                 + 2 * (kkc * cp * 2 + cp * 4)          # weights + bias, 2 bufs
                 + 2 * tile_m * cp * out_itemsize       # output tile, 2 bufs
                 + 2 * tile_m * (kkc * 2 + cp * 4))     # patches + f32 result
    vmem_limit = int(min(max(2 * est_bytes, 32 * 2 ** 20), 48 * 2 ** 20))

    kern = functools.partial(_conv_block_kernel, k=k, tile_oh=tile_oh, wo=wo,
                             cin=cin, stride=s, activation=activation,
                             fold_taps=fold_taps)
    if fold_taps:
        w_spec = pl.BlockSpec((kkc, cp), lambda b, r: (0, 0))
    else:
        w_spec = pl.BlockSpec((k * k, cin, cp), lambda b, r: (0, 0, 0))

    y = pl.pallas_call(
        kern,
        out_shape=jax.ShapeDtypeStruct((n, ho, wo, cp), out_dtype),
        grid_spec=pltpu.PrefetchScalarGridSpec(
            num_scalar_prefetch=0,
            grid=grid,
            in_specs=[
                # Whole padded plane per batch element; its block index only
                # changes with the batch axis, so it stays resident in VMEM
                # across all row tiles (no re-DMA).
                pl.BlockSpec((1, hp, wp, cin), lambda b, r: (b, 0, 0, 0)),
                w_spec,
                pl.BlockSpec((1, cp), lambda b, r: (0, 0)),
            ],
            out_specs=pl.BlockSpec((1, tile_oh, wo, cp),
                                   lambda b, r: (b, r, 0, 0)),
        ),
        compiler_params=pltpu.CompilerParams(
            dimension_semantics=("parallel", "parallel"),
            vmem_limit_bytes=vmem_limit),
    )(x, w_arr, b2)

    # Single fused epilogue pass: drop Cout padding, NHWC -> NCHW, upcast f32.
    return jnp.transpose(y[..., :cout], (0, 3, 1, 2)).astype(jnp.float32)


# ---------------------------------------------------------------------------
# Demo / self-check
# ---------------------------------------------------------------------------
if __name__ == "__main__":
    key = jax.random.PRNGKey(0)
    kx, kw, kb = jax.random.split(key, 3)

    # Conv2dBlock(input_dim=4, output_dim=32, kernel_size=3, stride=1,
    #             padding=1, norm='none', activation='relu', pad_type='zero')
    N, Cin, H, W = 2, 4, 16, 16
    Cout, K, STRIDE, PAD = 32, 3, 1, 1

    x = jax.random.normal(kx, (N, Cin, H, W), jnp.float32)
    fan_in = Cin * K * K
    bound = float(1.0 / (fan_in ** 0.5))
    w = jax.random.uniform(kw, (Cout, Cin, K, K), jnp.float32, -bound, bound)
    b = jax.random.uniform(kb, (Cout,), jnp.float32, -bound, bound)

    fwd = functools.partial(conv2d_block_forward, stride=STRIDE, padding=PAD,
                            norm="none", activation="relu", pad_type="zero")
    try:
        out = jax.block_until_ready(
            jax.jit(functools.partial(fwd, fold_taps=True))(x, w, b))
    except Exception:
        # TODO(synk): fold_taps relies on Mosaic minor-dim concatenate; fall
        # back to per-tap MXU dots on builds that reject that lowering.
        out = jax.block_until_ready(
            jax.jit(functools.partial(fwd, fold_taps=False))(x, w, b))

    assert out.shape == (N, Cout, H, W), out.shape
    assert out.dtype == jnp.float32
    assert bool(jnp.all(jnp.isfinite(out)))

    # Reference on the same bf16-rounded operands (the kernel feeds the MXU
    # bf16 with f32 accumulation and stores a bf16 result).
    xr = x.astype(jnp.bfloat16).astype(jnp.float32)
    wr = w.astype(jnp.bfloat16).astype(jnp.float32)
    ref = jax.lax.conv_general_dilated(
        xr, wr, window_strides=(STRIDE, STRIDE),
        padding=[(PAD, PAD), (PAD, PAD)],
        dimension_numbers=("NCHW", "OIHW", "NCHW"),
        precision=jax.lax.Precision.HIGHEST)
    ref = jnp.maximum(ref + b.reshape(1, Cout, 1, 1), 0.0)
    err = float(jnp.max(jnp.abs(out - ref)))
    assert jnp.allclose(out, ref, atol=2e-2, rtol=2e-2), err

    print("KERNEL_OK")
</pallas_src>

<mosaic_0001>
module attributes {stable_mosaic.version = 11 : i64} {
  func.func @_conv_block_kernel(%arg0: i32, %arg1: i32, %arg2: memref<1x18x18x4xbf16, #tpu.memory_space<vmem>>, %arg3: memref<36x128xbf16, #tpu.memory_space<vmem>>, %arg4: memref<1x128xf32, #tpu.memory_space<vmem>>, %arg5: memref<1x16x16x128xbf16, #tpu.memory_space<vmem>>) attributes {dimension_semantics = [#tpu.dimension_semantics<parallel>, #tpu.dimension_semantics<parallel>], iteration_bounds = array<i64: 2, 1>, scalar_prefetch = 0 : i64, scratch_operands = 0 : i64, tpu.core_type = #tpu.core_type<tc>, window_params = [{transform_indices = @transform_0, window_bounds = array<i64: 1, 18, 18, 4>}, {pipeline_mode = #tpu.pipeline_mode<synchronous>, transform_indices = @transform_1, window_bounds = array<i64: 36, 128>}, {pipeline_mode = #tpu.pipeline_mode<synchronous>, transform_indices = @transform_2, window_bounds = array<i64: 1, 128>}, {transform_indices = @transform_3, window_bounds = array<i64: 1, 16, 16, 128>}]} {
    %c16_i32 = arith.constant 16 : i32
    %0 = arith.muli %arg1, %c16_i32 : i32
    %1 = tpu.assume_multiple %0, 16 : i32
    %c0_i32 = arith.constant 0 : i32
    %2 = arith.addi %1, %c0_i32 : i32
    %c0 = arith.constant 0 : index
    %3 = arith.index_cast %2 : i32 to index
    %c0_0 = arith.constant 0 : index
    %c0_1 = arith.constant 0 : index
    %4 = vector.load %arg2[%c0, %3, %c0_0, %c0_1] : memref<1x18x18x4xbf16, #tpu.memory_space<vmem>>, vector<1x16x16x4xbf16>
    %5 = vector.shape_cast %4 : vector<1x16x16x4xbf16> to vector<16x16x4xbf16>
    %c0_i32_2 = arith.constant 0 : i32
    %6 = arith.addi %1, %c0_i32_2 : i32
    %c0_3 = arith.constant 0 : index
    %7 = arith.index_cast %6 : i32 to index
    %c1 = arith.constant 1 : index
    %c0_4 = arith.constant 0 : index
    %8 = vector.load %arg2[%c0_3, %7, %c1, %c0_4] : memref<1x18x18x4xbf16, #tpu.memory_space<vmem>>, vector<1x16x16x4xbf16>
    %9 = vector.shape_cast %8 : vector<1x16x16x4xbf16> to vector<16x16x4xbf16>
    %c0_i32_5 = arith.constant 0 : i32
    %10 = arith.addi %1, %c0_i32_5 : i32
    %c0_6 = arith.constant 0 : index
    %11 = arith.index_cast %10 : i32 to index
    %c2 = arith.constant 2 : index
    %c0_7 = arith.constant 0 : index
    %12 = vector.load %arg2[%c0_6, %11, %c2, %c0_7] : memref<1x18x18x4xbf16, #tpu.memory_space<vmem>>, vector<1x16x16x4xbf16>
    %13 = vector.shape_cast %12 : vector<1x16x16x4xbf16> to vector<16x16x4xbf16>
    %c1_i32 = arith.constant 1 : i32
    %14 = arith.addi %1, %c1_i32 : i32
    %c0_8 = arith.constant 0 : index
    %15 = arith.index_cast %14 : i32 to index
    %c0_9 = arith.constant 0 : index
    %c0_10 = arith.constant 0 : index
    %16 = vector.load %arg2[%c0_8, %15, %c0_9, %c0_10] : memref<1x18x18x4xbf16, #tpu.memory_space<vmem>>, vector<1x16x16x4xbf16>
    %17 = vector.shape_cast %16 : vector<1x16x16x4xbf16> to vector<16x16x4xbf16>
    %c1_i32_11 = arith.constant 1 : i32
    %18 = arith.addi %1, %c1_i32_11 : i32
    %c0_12 = arith.constant 0 : index
    %19 = arith.index_cast %18 : i32 to index
    %c1_13 = arith.constant 1 : index
    %c0_14 = arith.constant 0 : index
    %20 = vector.load %arg2[%c0_12, %19, %c1_13, %c0_14] : memref<1x18x18x4xbf16, #tpu.memory_space<vmem>>, vector<1x16x16x4xbf16>
    %21 = vector.shape_cast %20 : vector<1x16x16x4xbf16> to vector<16x16x4xbf16>
    %c1_i32_15 = arith.constant 1 : i32
    %22 = arith.addi %1, %c1_i32_15 : i32
    %c0_16 = arith.constant 0 : index
    %23 = arith.index_cast %22 : i32 to index
    %c2_17 = arith.constant 2 : index
    %c0_18 = arith.constant 0 : index
    %24 = vector.load %arg2[%c0_16, %23, %c2_17, %c0_18] : memref<1x18x18x4xbf16, #tpu.memory_space<vmem>>, vector<1x16x16x4xbf16>
    %25 = vector.shape_cast %24 : vector<1x16x16x4xbf16> to vector<16x16x4xbf16>
    %c2_i32 = arith.constant 2 : i32
    %26 = arith.addi %1, %c2_i32 : i32
    %c0_19 = arith.constant 0 : index
    %27 = arith.index_cast %26 : i32 to index
    %c0_20 = arith.constant 0 : index
    %c0_21 = arith.constant 0 : index
    %28 = vector.load %arg2[%c0_19, %27, %c0_20, %c0_21] : memref<1x18x18x4xbf16, #tpu.memory_space<vmem>>, vector<1x16x16x4xbf16>
    %29 = vector.shape_cast %28 : vector<1x16x16x4xbf16> to vector<16x16x4xbf16>
    %c2_i32_22 = arith.constant 2 : i32
    %30 = arith.addi %1, %c2_i32_22 : i32
    %c0_23 = arith.constant 0 : index
    %31 = arith.index_cast %30 : i32 to index
    %c1_24 = arith.constant 1 : index
    %c0_25 = arith.constant 0 : index
    %32 = vector.load %arg2[%c0_23, %31, %c1_24, %c0_25] : memref<1x18x18x4xbf16, #tpu.memory_space<vmem>>, vector<1x16x16x4xbf16>
    %33 = vector.shape_cast %32 : vector<1x16x16x4xbf16> to vector<16x16x4xbf16>
    %c2_i32_26 = arith.constant 2 : i32
    %34 = arith.addi %1, %c2_i32_26 : i32
    %c0_27 = arith.constant 0 : index
    %35 = arith.index_cast %34 : i32 to index
    %c2_28 = arith.constant 2 : index
    %c0_29 = arith.constant 0 : index
    %36 = vector.load %arg2[%c0_27, %35, %c2_28, %c0_29] : memref<1x18x18x4xbf16, #tpu.memory_space<vmem>>, vector<1x16x16x4xbf16>
    %37 = vector.shape_cast %36 : vector<1x16x16x4xbf16> to vector<16x16x4xbf16>
    %38 = tpu.concatenate %5, %9, %13, %17, %21, %25, %29, %33, %37 in 2 : vector<16x16x4xbf16>, vector<16x16x4xbf16>, vector<16x16x4xbf16>, vector<16x16x4xbf16>, vector<16x16x4xbf16>, vector<16x16x4xbf16>, vector<16x16x4xbf16>, vector<16x16x4xbf16>, vector<16x16x4xbf16> -> vector<16x16x36xbf16>
    %39 = vector.shape_cast %38 : vector<16x16x36xbf16> to vector<256x36xbf16>
    %c0_30 = arith.constant 0 : index
    %c0_31 = arith.constant 0 : index
    %40 = vector.load %arg3[%c0_30, %c0_31] : memref<36x128xbf16, #tpu.memory_space<vmem>>, vector<36x128xbf16>
    %cst = arith.constant dense<0.000000e+00> : vector<256x128xf32>
    %41 = tpu.matmul %39, %40, %cst {dimension_numbers = #tpu.dot_dimension_numbers<[1], [0], [0], [1], [0, 0, 1, 1], [], []>} : vector<256x36xbf16>, vector<36x128xbf16>, vector<256x128xf32> -> vector<256x128xf32>
    %c0_32 = arith.constant 0 : index
    %c0_33 = arith.constant 0 : index
    %42 = vector.load %arg4[%c0_32, %c0_33] : memref<1x128xf32, #tpu.memory_space<vmem>>, vector<1x128xf32>
    %43 = vector.broadcast %42 : vector<1x128xf32> to vector<256x128xf32>
    %44 = arith.addf %41, %43 : vector<256x128xf32>
    %cst_34 = arith.constant 0.000000e+00 : f32
    %45 = vector.broadcast %cst_34 : f32 to vector<256x128xf32>
    %46 = arith.maximumf %44, %45 : vector<256x128xf32>
    %47 = vector.shape_cast %46 : vector<256x128xf32> to vector<16x16x128xf32>
    %48 = arith.truncf %47 : vector<16x16x128xf32> to vector<16x16x128xbf16>
    %c0_35 = arith.constant 0 : index
    %c0_36 = arith.constant 0 : index
    %c0_37 = arith.constant 0 : index
    %c0_38 = arith.constant 0 : index
    %49 = vector.load %arg5[%c0_35, %c0_36, %c0_37, %c0_38] : memref<1x16x16x128xbf16, #tpu.memory_space<vmem>>, vector<1x16x16x128xbf16>
    %50 = vector.shape_cast %49 : vector<1x16x16x128xbf16> to vector<16x16x128xbf16>
    %51 = vector.shape_cast %48 : vector<16x16x128xbf16> to vector<1x16x16x128xbf16>
    tpu.vector_store %arg5[%c0_35, %c0_36, %c0_37, %c0_38], %51 {strides = array<i32>} : memref<1x16x16x128xbf16, #tpu.memory_space<vmem>>, vector<1x16x16x128xbf16>,
    return
  }
  func.func @transform_0(%arg0: i32, %arg1: i32) -> (i32, i32, i32, i32) {
    %c0_i32 = arith.constant 0 : i32
    %c0_i32_0 = arith.constant 0 : i32
    %c0_i32_1 = arith.constant 0 : i32
    %c0_i32_2 = arith.constant 0 : i32
    return %arg0, %c0_i32, %c0_i32_0, %c0_i32_1 : i32, i32, i32, i32
  }
  func.func @transform_1(%arg0: i32, %arg1: i32) -> (i32, i32) {
    %c0_i32 = arith.constant 0 : i32
    %c0_i32_0 = arith.constant 0 : i32
    %c0_i32_1 = arith.constant 0 : i32
    return %c0_i32, %c0_i32_0 : i32, i32
  }
  func.func @transform_2(%arg0: i32, %arg1: i32) -> (i32, i32) {
    %c0_i32 = arith.constant 0 : i32
    %c0_i32_0 = arith.constant 0 : i32
    %c0_i32_1 = arith.constant 0 : i32
    return %c0_i32, %c0_i32_0 : i32, i32
  }
  func.func @transform_3(%arg0: i32, %arg1: i32) -> (i32, i32, i32, i32) {
    %c0_i32 = arith.constant 0 : i32
    %c0_i32_0 = arith.constant 0 : i32
    %c0_i32_1 = arith.constant 0 : i32
    return %arg0, %arg1, %c0_i32, %c0_i32_0 : i32, i32, i32, i32
  }
}

module attributes {stable_mosaic.version = 11 : i64} {
  func.func @_conv_block_kernel(%arg0: i32, %arg1: i32, %arg2: memref<1x18x18x4xbf16, #tpu.memory_space<vmem>>, %arg3: memref<9x4x128xbf16, #tpu.memory_space<vmem>>, %arg4: memref<1x128xf32, #tpu.memory_space<vmem>>, %arg5: memref<1x16x16x128xbf16, #tpu.memory_space<vmem>>) attributes {dimension_semantics = [#tpu.dimension_semantics<parallel>, #tpu.dimension_semantics<parallel>], iteration_bounds = array<i64: 2, 1>, scalar_prefetch = 0 : i64, scratch_operands = 0 : i64, tpu.core_type = #tpu.core_type<tc>, window_params = [{transform_indices = @transform_0, window_bounds = array<i64: 1, 18, 18, 4>}, {pipeline_mode = #tpu.pipeline_mode<synchronous>, transform_indices = @transform_1, window_bounds = array<i64: 9, 4, 128>}, {pipeline_mode = #tpu.pipeline_mode<synchronous>, transform_indices = @transform_2, window_bounds = array<i64: 1, 128>}, {transform_indices = @transform_3, window_bounds = array<i64: 1, 16, 16, 128>}]} {
    %c16_i32 = arith.constant 16 : i32
    %0 = arith.muli %arg1, %c16_i32 : i32
    %1 = tpu.assume_multiple %0, 16 : i32
    %cst = arith.constant 0.000000e+00 : f32
    %2 = vector.broadcast %cst : f32 to vector<256x128xf32>
    %c0_i32 = arith.constant 0 : i32
    %3 = arith.addi %1, %c0_i32 : i32
    %c0 = arith.constant 0 : index
    %4 = arith.index_cast %3 : i32 to index
    %c0_0 = arith.constant 0 : index
    %c0_1 = arith.constant 0 : index
    %5 = vector.load %arg2[%c0, %4, %c0_0, %c0_1] : memref<1x18x18x4xbf16, #tpu.memory_space<vmem>>, vector<1x16x16x4xbf16>
    %6 = vector.shape_cast %5 : vector<1x16x16x4xbf16> to vector<16x16x4xbf16>
    %7 = vector.shape_cast %6 : vector<16x16x4xbf16> to vector<256x4xbf16>
    %c0_2 = arith.constant 0 : index
    %c0_3 = arith.constant 0 : index
    %c0_4 = arith.constant 0 : index
    %8 = vector.load %arg3[%c0_2, %c0_3, %c0_4] : memref<9x4x128xbf16, #tpu.memory_space<vmem>>, vector<1x4x128xbf16>
    %9 = vector.shape_cast %8 : vector<1x4x128xbf16> to vector<4x128xbf16>
    %cst_5 = arith.constant dense<0.000000e+00> : vector<256x128xf32>
    %10 = tpu.matmul %7, %9, %cst_5 {dimension_numbers = #tpu.dot_dimension_numbers<[1], [0], [0], [1], [0, 0, 1, 1], [], []>} : vector<256x4xbf16>, vector<4x128xbf16>, vector<256x128xf32> -> vector<256x128xf32>
    %11 = arith.addf %2, %10 : vector<256x128xf32>
    %c0_i32_6 = arith.constant 0 : i32
    %12 = arith.addi %1, %c0_i32_6 : i32
    %c0_7 = arith.constant 0 : index
    %13 = arith.index_cast %12 : i32 to index
    %c1 = arith.constant 1 : index
    %c0_8 = arith.constant 0 : index
    %14 = vector.load %arg2[%c0_7, %13, %c1, %c0_8] : memref<1x18x18x4xbf16, #tpu.memory_space<vmem>>, vector<1x16x16x4xbf16>
    %15 = vector.shape_cast %14 : vector<1x16x16x4xbf16> to vector<16x16x4xbf16>
    %16 = vector.shape_cast %15 : vector<16x16x4xbf16> to vector<256x4xbf16>
    %c1_9 = arith.constant 1 : index
    %c0_10 = arith.constant 0 : index
    %c0_11 = arith.constant 0 : index
    %17 = vector.load %arg3[%c1_9, %c0_10, %c0_11] : memref<9x4x128xbf16, #tpu.memory_space<vmem>>, vector<1x4x128xbf16>
    %18 = vector.shape_cast %17 : vector<1x4x128xbf16> to vector<4x128xbf16>
    %cst_12 = arith.constant dense<0.000000e+00> : vector<256x128xf32>
    %19 = tpu.matmul %16, %18, %cst_12 {dimension_numbers = #tpu.dot_dimension_numbers<[1], [0], [0], [1], [0, 0, 1, 1], [], []>} : vector<256x4xbf16>, vector<4x128xbf16>, vector<256x128xf32> -> vector<256x128xf32>
    %20 = arith.addf %11, %19 : vector<256x128xf32>
    %c0_i32_13 = arith.constant 0 : i32
    %21 = arith.addi %1, %c0_i32_13 : i32
    %c0_14 = arith.constant 0 : index
    %22 = arith.index_cast %21 : i32 to index
    %c2 = arith.constant 2 : index
    %c0_15 = arith.constant 0 : index
    %23 = vector.load %arg2[%c0_14, %22, %c2, %c0_15] : memref<1x18x18x4xbf16, #tpu.memory_space<vmem>>, vector<1x16x16x4xbf16>
    %24 = vector.shape_cast %23 : vector<1x16x16x4xbf16> to vector<16x16x4xbf16>
    %25 = vector.shape_cast %24 : vector<16x16x4xbf16> to vector<256x4xbf16>
    %c2_16 = arith.constant 2 : index
    %c0_17 = arith.constant 0 : index
    %c0_18 = arith.constant 0 : index
    %26 = vector.load %arg3[%c2_16, %c0_17, %c0_18] : memref<9x4x128xbf16, #tpu.memory_space<vmem>>, vector<1x4x128xbf16>
    %27 = vector.shape_cast %26 : vector<1x4x128xbf16> to vector<4x128xbf16>
    %cst_19 = arith.constant dense<0.000000e+00> : vector<256x128xf32>
    %28 = tpu.matmul %25, %27, %cst_19 {dimension_numbers = #tpu.dot_dimension_numbers<[1], [0], [0], [1], [0, 0, 1, 1], [], []>} : vector<256x4xbf16>, vector<4x128xbf16>, vector<256x128xf32> -> vector<256x128xf32>
    %29 = arith.addf %20, %28 : vector<256x128xf32>
    %c1_i32 = arith.constant 1 : i32
    %30 = arith.addi %1, %c1_i32 : i32
    %c0_20 = arith.constant 0 : index
    %31 = arith.index_cast %30 : i32 to index
    %c0_21 = arith.constant 0 : index
    %c0_22 = arith.constant 0 : index
    %32 = vector.load %arg2[%c0_20, %31, %c0_21, %c0_22] : memref<1x18x18x4xbf16, #tpu.memory_space<vmem>>, vector<1x16x16x4xbf16>
    %33 = vector.shape_cast %32 : vector<1x16x16x4xbf16> to vector<16x16x4xbf16>
    %34 = vector.shape_cast %33 : vector<16x16x4xbf16> to vector<256x4xbf16>
    %c3 = arith.constant 3 : index
    %c0_23 = arith.constant 0 : index
    %c0_24 = arith.constant 0 : index
    %35 = vector.load %arg3[%c3, %c0_23, %c0_24] : memref<9x4x128xbf16, #tpu.memory_space<vmem>>, vector<1x4x128xbf16>
    %36 = vector.shape_cast %35 : vector<1x4x128xbf16> to vector<4x128xbf16>
    %cst_25 = arith.constant dense<0.000000e+00> : vector<256x128xf32>
    %37 = tpu.matmul %34, %36, %cst_25 {dimension_numbers = #tpu.dot_dimension_numbers<[1], [0], [0], [1], [0, 0, 1, 1], [], []>} : vector<256x4xbf16>, vector<4x128xbf16>, vector<256x128xf32> -> vector<256x128xf32>
    %38 = arith.addf %29, %37 : vector<256x128xf32>
    %c1_i32_26 = arith.constant 1 : i32
    %39 = arith.addi %1, %c1_i32_26 : i32
    %c0_27 = arith.constant 0 : index
    %40 = arith.index_cast %39 : i32 to index
    %c1_28 = arith.constant 1 : index
    %c0_29 = arith.constant 0 : index
    %41 = vector.load %arg2[%c0_27, %40, %c1_28, %c0_29] : memref<1x18x18x4xbf16, #tpu.memory_space<vmem>>, vector<1x16x16x4xbf16>
    %42 = vector.shape_cast %41 : vector<1x16x16x4xbf16> to vector<16x16x4xbf16>
    %43 = vector.shape_cast %42 : vector<16x16x4xbf16> to vector<256x4xbf16>
    %c4 = arith.constant 4 : index
    %c0_30 = arith.constant 0 : index
    %c0_31 = arith.constant 0 : index
    %44 = vector.load %arg3[%c4, %c0_30, %c0_31] : memref<9x4x128xbf16, #tpu.memory_space<vmem>>, vector<1x4x128xbf16>
    %45 = vector.shape_cast %44 : vector<1x4x128xbf16> to vector<4x128xbf16>
    %cst_32 = arith.constant dense<0.000000e+00> : vector<256x128xf32>
    %46 = tpu.matmul %43, %45, %cst_32 {dimension_numbers = #tpu.dot_dimension_numbers<[1], [0], [0], [1], [0, 0, 1, 1], [], []>} : vector<256x4xbf16>, vector<4x128xbf16>, vector<256x128xf32> -> vector<256x128xf32>
    %47 = arith.addf %38, %46 : vector<256x128xf32>
    %c1_i32_33 = arith.constant 1 : i32
    %48 = arith.addi %1, %c1_i32_33 : i32
    %c0_34 = arith.constant 0 : index
    %49 = arith.index_cast %48 : i32 to index
    %c2_35 = arith.constant 2 : index
    %c0_36 = arith.constant 0 : index
    %50 = vector.load %arg2[%c0_34, %49, %c2_35, %c0_36] : memref<1x18x18x4xbf16, #tpu.memory_space<vmem>>, vector<1x16x16x4xbf16>
    %51 = vector.shape_cast %50 : vector<1x16x16x4xbf16> to vector<16x16x4xbf16>
    %52 = vector.shape_cast %51 : vector<16x16x4xbf16> to vector<256x4xbf16>
    %c5 = arith.constant 5 : index
    %c0_37 = arith.constant 0 : index
    %c0_38 = arith.constant 0 : index
    %53 = vector.load %arg3[%c5, %c0_37, %c0_38] : memref<9x4x128xbf16, #tpu.memory_space<vmem>>, vector<1x4x128xbf16>
    %54 = vector.shape_cast %53 : vector<1x4x128xbf16> to vector<4x128xbf16>
    %cst_39 = arith.constant dense<0.000000e+00> : vector<256x128xf32>
    %55 = tpu.matmul %52, %54, %cst_39 {dimension_numbers = #tpu.dot_dimension_numbers<[1], [0], [0], [1], [0, 0, 1, 1], [], []>} : vector<256x4xbf16>, vector<4x128xbf16>, vector<256x128xf32> -> vector<256x128xf32>
    %56 = arith.addf %47, %55 : vector<256x128xf32>
    %c2_i32 = arith.constant 2 : i32
    %57 = arith.addi %1, %c2_i32 : i32
    %c0_40 = arith.constant 0 : index
    %58 = arith.index_cast %57 : i32 to index
    %c0_41 = arith.constant 0 : index
    %c0_42 = arith.constant 0 : index
    %59 = vector.load %arg2[%c0_40, %58, %c0_41, %c0_42] : memref<1x18x18x4xbf16, #tpu.memory_space<vmem>>, vector<1x16x16x4xbf16>
    %60 = vector.shape_cast %59 : vector<1x16x16x4xbf16> to vector<16x16x4xbf16>
    %61 = vector.shape_cast %60 : vector<16x16x4xbf16> to vector<256x4xbf16>
    %c6 = arith.constant 6 : index
    %c0_43 = arith.constant 0 : index
    %c0_44 = arith.constant 0 : index
    %62 = vector.load %arg3[%c6, %c0_43, %c0_44] : memref<9x4x128xbf16, #tpu.memory_space<vmem>>, vector<1x4x128xbf16>
    %63 = vector.shape_cast %62 : vector<1x4x128xbf16> to vector<4x128xbf16>
    %cst_45 = arith.constant dense<0.000000e+00> : vector<256x128xf32>
    %64 = tpu.matmul %61, %63, %cst_45 {dimension_numbers = #tpu.dot_dimension_numbers<[1], [0], [0], [1], [0, 0, 1, 1], [], []>} : vector<256x4xbf16>, vector<4x128xbf16>, vector<256x128xf32> -> vector<256x128xf32>
    %65 = arith.addf %56, %64 : vector<256x128xf32>
    %c2_i32_46 = arith.constant 2 : i32
    %66 = arith.addi %1, %c2_i32_46 : i32
    %c0_47 = arith.constant 0 : index
    %67 = arith.index_cast %66 : i32 to index
    %c1_48 = arith.constant 1 : index
    %c0_49 = arith.constant 0 : index
    %68 = vector.load %arg2[%c0_47, %67, %c1_48, %c0_49] : memref<1x18x18x4xbf16, #tpu.memory_space<vmem>>, vector<1x16x16x4xbf16>
    %69 = vector.shape_cast %68 : vector<1x16x16x4xbf16> to vector<16x16x4xbf16>
    %70 = vector.shape_cast %69 : vector<16x16x4xbf16> to vector<256x4xbf16>
    %c7 = arith.constant 7 : index
    %c0_50 = arith.constant 0 : index
    %c0_51 = arith.constant 0 : index
    %71 = vector.load %arg3[%c7, %c0_50, %c0_51] : memref<9x4x128xbf16, #tpu.memory_space<vmem>>, vector<1x4x128xbf16>
    %72 = vector.shape_cast %71 : vector<1x4x128xbf16> to vector<4x128xbf16>
    %cst_52 = arith.constant dense<0.000000e+00> : vector<256x128xf32>
    %73 = tpu.matmul %70, %72, %cst_52 {dimension_numbers = #tpu.dot_dimension_numbers<[1], [0], [0], [1], [0, 0, 1, 1], [], []>} : vector<256x4xbf16>, vector<4x128xbf16>, vector<256x128xf32> -> vector<256x128xf32>
    %74 = arith.addf %65, %73 : vector<256x128xf32>
    %c2_i32_53 = arith.constant 2 : i32
    %75 = arith.addi %1, %c2_i32_53 : i32
    %c0_54 = arith.constant 0 : index
    %76 = arith.index_cast %75 : i32 to index
    %c2_55 = arith.constant 2 : index
    %c0_56 = arith.constant 0 : index
    %77 = vector.load %arg2[%c0_54, %76, %c2_55, %c0_56] : memref<1x18x18x4xbf16, #tpu.memory_space<vmem>>, vector<1x16x16x4xbf16>
    %78 = vector.shape_cast %77 : vector<1x16x16x4xbf16> to vector<16x16x4xbf16>
    %79 = vector.shape_cast %78 : vector<16x16x4xbf16> to vector<256x4xbf16>
    %c8 = arith.constant 8 : index
    %c0_57 = arith.constant 0 : index
    %c0_58 = arith.constant 0 : index
    %80 = vector.load %arg3[%c8, %c0_57, %c0_58] : memref<9x4x128xbf16, #tpu.memory_space<vmem>>, vector<1x4x128xbf16>
    %81 = vector.shape_cast %80 : vector<1x4x128xbf16> to vector<4x128xbf16>
    %cst_59 = arith.constant dense<0.000000e+00> : vector<256x128xf32>
    %82 = tpu.matmul %79, %81, %cst_59 {dimension_numbers = #tpu.dot_dimension_numbers<[1], [0], [0], [1], [0, 0, 1, 1], [], []>} : vector<256x4xbf16>, vector<4x128xbf16>, vector<256x128xf32> -> vector<256x128xf32>
    %83 = arith.addf %74, %82 : vector<256x128xf32>
    %c0_60 = arith.constant 0 : index
    %c0_61 = arith.constant 0 : index
    %84 = vector.load %arg4[%c0_60, %c0_61] : memref<1x128xf32, #tpu.memory_space<vmem>>, vector<1x128xf32>
    %85 = vector.broadcast %84 : vector<1x128xf32> to vector<256x128xf32>
    %86 = arith.addf %83, %85 : vector<256x128xf32>
    %cst_62 = arith.constant 0.000000e+00 : f32
    %87 = vector.broadcast %cst_62 : f32 to vector<256x128xf32>
    %88 = arith.maximumf %86, %87 : vector<256x128xf32>
    %89 = vector.shape_cast %88 : vector<256x128xf32> to vector<16x16x128xf32>
    %90 = arith.truncf %89 : vector<16x16x128xf32> to vector<16x16x128xbf16>
    %c0_63 = arith.constant 0 : index
    %c0_64 = arith.constant 0 : index
    %c0_65 = arith.constant 0 : index
    %c0_66 = arith.constant 0 : index
    %91 = vector.load %arg5[%c0_63, %c0_64, %c0_65, %c0_66] : memref<1x16x16x128xbf16, #tpu.memory_space<vmem>>, vector<1x16x16x128xbf16>
    %92 = vector.shape_cast %91 : vector<1x16x16x128xbf16> to vector<16x16x128xbf16>
    %93 = vector.shape_cast %90 : vector<16x16x128xbf16> to vector<1x16x16x128xbf16>
    tpu.vector_store %arg5[%c0_63, %c0_64, %c0_65, %c0_66], %93 {strides = array<i32>} : memref<1x16x16x128xbf16, #tpu.memory_space<vmem>>, vector<1x16x16x128xbf16>,
    return
  }
  func.func @transform_0(%arg0: i32, %arg1: i32) -> (i32, i32, i32, i32) {
    %c0_i32 = arith.constant 0 : i32
    %c0_i32_0 = arith.constant 0 : i32
    %c0_i32_1 = arith.constant 0 : i32
    %c0_i32_2 = arith.constant 0 : i32
    return %arg0, %c0_i32, %c0_i32_0, %c0_i32_1 : i32, i32, i32, i32
  }
  func.func @transform_1(%arg0: i32, %arg1: i32) -> (i32, i32, i32) {
    %c0_i32 = arith.constant 0 : i32
    %c0_i32_0 = arith.constant 0 : i32
    %c0_i32_1 = arith.constant 0 : i32
    %c0_i32_2 = arith.constant 0 : i32
    return %c0_i32, %c0_i32_0, %c0_i32_1 : i32, i32, i32
  }
  func.func @transform_2(%arg0: i32, %arg1: i32) -> (i32, i32) {
    %c0_i32 = arith.constant 0 : i32
    %c0_i32_0 = arith.constant 0 : i32
    %c0_i32_1 = arith.constant 0 : i32
    return %c0_i32, %c0_i32_0 : i32, i32
  }
  func.func @transform_3(%arg0: i32, %arg1: i32) -> (i32, i32, i32, i32) {
    %c0_i32 = arith.constant 0 : i32
    %c0_i32_0 = arith.constant 0 : i32
    %c0_i32_1 = arith.constant 0 : i32
    return %arg0, %arg1, %c0_i32, %c0_i32_0 : i32, i32, i32, i32
  }
}

</mosaic_0001>

<llo_original>
// kernel: conv2d_block_forward.1
$region0: #{conv2d_block_forward.1}
  #allocation0 [shape = 'u32[]', space=smem, size = 0x4, offset = 0x4, fixed_abs, tag = 'smem constant byte address 0x4 - core index']
  #allocation1 [shape = 'u32[72,128]{1,0:T(1,128)}', space=vmem, size = 0x9000, scoped, tag = 'internal scratch']
  %s0 = inlined_call_operand.vmem [shape: bf16[2,18,18,4], index: 0, kind: input, shape index: {}]
  %s1 = inlined_call_operand.vmem [shape: bf16[36,128], index: 1, kind: input, shape index: {}]
  %s2 = inlined_call_operand.vmem [shape: f32[1,128], index: 2, kind: input, shape index: {}]
  %s3 = inlined_call_operand.vmem [shape: bf16[2,16,16,128], index: 3, kind: output, shape index: {}]
  %s4 = sld [smem:[#allocation0]]
  $region45: #{conv2d_block_forward.1} parent=0
    _
  %s6 = ssub.s32 1, %s4
  %s7 = scalar_select 0, %s6, %s4
  loop: start=0, step=1, limit=4
  $region2: #{conv2d_block_forward.1} parent=0 // loop_pre_header
    _
  $region3: #{conv2d_block_forward.1} parent=0 // loop_header
    %s9 = sphi 0, %s13
    %p10 = scmp.ge.s32.totalorder %s9, 4
    %s16 = sphi 0, %s28
    %s17 = sphi 0, %s24
    %s18 = sphi 0, %s16
    %s19 = sphi 0, %s17
    %s20 = sphi 0, %s18
    %s21 = sphi 0, %s19
    %s31 = sphi 0, %s33
    %s34 = sphi 0, %s31
    %s35 = sphi 0, %s34
    %s51 = sphi 0, %s35
    %s55 = sphi 0, %s55
    %s57 = sphi 0, %s55
    %s58 = sphi 0, %s57
    %s72 = sphi 0, %s58
    %s76 = sphi 0, %s76
    %s78 = sphi 0, %s76
    %s79 = sphi 0, %s78
    %s93 = sphi 0, %s79
    %s101 = sphi 0, %s103
    %s104 = sphi 0, %s101
    %s105 = sphi 0, %s104
    %s121 = sphi 0, %s105
  $region4: #{conv2d_block_forward.1} parent=0 // loop_header_branch
    %12 = sbr.rel (%p10) target = $region8
  $region5: #{conv2d_block_forward.1} parent=0 // loop_body
    %s14 = ssub.s32 %s9, 1
    %s15 = ssub.s32 %s9, 2
    %s22 = sadd.s32 1, %s17
    %p23 = scmp.ge.s32.totalorder %s22, 1
    %s24 = scalar_select %p23, 0, %s22
    %s25 = sadd.s32 1, %s16
    %s26 = scalar_select %p23, %s25, %s16
    %p27 = scmp.ge.s32.totalorder %s26, 2
    %s28 = scalar_select %p27, 0, %s26
    %s29 = ssub.s32 %s16, %s28
    %p30 = scmp.eq.s32.totalorder %s29, 0
    %s32 = sadd.s32 %s31, 1
    %s33 = scalar_select %p30, %s31, %s32
    %p36 = pneg %p30
    %p37 = scmp.eq.s32.totalorder %s9, 1
    %p38 = por %p36, %p37
    %p39 = scmp.ne.s32.totalorder %s31, %s34
    %p40 = scmp.eq.s32.totalorder %s9, 0
    %p41 = por %p39, %p40
    %p42 = scmp.ne.s32.totalorder %s31, %s34
    %p43 = scmp.eq.s32.totalorder %s14, 1
    %p44 = por %p42, %p43
    %p45 = scmp.ne.s32.totalorder %s34, %s35
    %p46 = scmp.eq.s32.totalorder %s14, 0
    %p47 = por %p45, %p46
    %p48 = scmp.ne.s32.totalorder %s34, %s35
    %p49 = scmp.eq.s32.totalorder %s15, 1
    %p50 = por %p48, %p49
    %p52 = scmp.ne.s32.totalorder %s35, %s51
    %p53 = scmp.eq.s32.totalorder %s15, 0
    %p54 = por %p52, %p53
    %s56 = sadd.s32 %s55, 1
    %p59 = scmp.eq.s32.totalorder %s9, 1
    %p60 = scmp.ne.s32.totalorder %s55, %s57
    %p61 = scmp.eq.s32.totalorder %s9, 0
    %p62 = por %p60, %p61
    %p63 = scmp.ne.s32.totalorder %s55, %s57
    %p64 = scmp.eq.s32.totalorder %s14, 1
    %p65 = por %p63, %p64
    %p66 = scmp.ne.s32.totalorder %s57, %s58
    %p67 = scmp.eq.s32.totalorder %s14, 0
    %p68 = por %p66, %p67
    %p69 = scmp.ne.s32.totalorder %s57, %s58
    %p70 = scmp.eq.s32.totalorder %s15, 1
    %p71 = por %p69, %p70
    %p73 = scmp.ne.s32.totalorder %s58, %s72
    %p74 = scmp.eq.s32.totalorder %s15, 0
    %p75 = por %p73, %p74
    %s77 = sadd.s32 %s76, 1
    %p80 = scmp.eq.s32.totalorder %s9, 1
    %p81 = scmp.ne.s32.totalorder %s76, %s78
    %p82 = scmp.eq.s32.totalorder %s9, 0
    %p83 = por %p81, %p82
    %p84 = scmp.ne.s32.totalorder %s76, %s78
    %p85 = scmp.eq.s32.totalorder %s14, 1
    %p86 = por %p84, %p85
    %p87 = scmp.ne.s32.totalorder %s78, %s79
    %p88 = scmp.eq.s32.totalorder %s14, 0
    %p89 = por %p87, %p88
    %p90 = scmp.ne.s32.totalorder %s78, %s79
    %p91 = scmp.eq.s32.totalorder %s15, 1
    %p92 = por %p90, %p91
    %p94 = scmp.ne.s32.totalorder %s79, %s93
    %p95 = scmp.eq.s32.totalorder %s15, 0
    %p96 = por %p94, %p95
    %s97 = ssub.s32 %s16, %s28
    %s98 = ssub.s32 %s17, %s24
    %s99 = sor.u32 %s97, %s98
    %p100 = scmp.eq.s32.totalorder %s99, 0
    %s102 = sadd.s32 %s101, 1
    %s103 = scalar_select %p100, %s101, %s102
    %p106 = pneg %p100
    %p107 = scmp.eq.s32.totalorder %s9, 1
    %p108 = por %p106, %p107
    %p109 = scmp.ne.s32.totalorder %s101, %s104
    %p110 = scmp.eq.s32.totalorder %s9, 0
    %p111 = por %p109, %p110
    %p112 = scmp.ne.s32.totalorder %s101, %s104
    %p113 = scmp.eq.s32.totalorder %s14, 1
    %p114 = por %p112, %p113
    %p115 = scmp.ne.s32.totalorder %s104, %s105
    %p116 = scmp.eq.s32.totalorder %s14, 0
    %p117 = por %p115, %p116
    %p118 = scmp.ne.s32.totalorder %s104, %s105
    %p119 = scmp.eq.s32.totalorder %s15, 1
    %p120 = por %p118, %p119
    %p122 = scmp.ne.s32.totalorder %s105, %s121
    %p123 = scmp.eq.s32.totalorder %s15, 0
    %p124 = por %p122, %p123
    %p125 = scmp.le.s32.totalorder 1, %s9
    %p126 = scmp.lt.s32.totalorder %s9, 3
    %p127 = pnand %p125, %p126
    %p128 = pneg %p127
    // Predicated region
    $region9: #{conv2d_block_forward.1} parent=5 // pred_check
      _
    $region10: #{conv2d_block_forward.1} parent=5 // pred_check_branch
      %130 = sbr.rel (%p127) target = $region12
    $region11: #{conv2d_block_forward.1} parent=5 // pred_region
      %s131 = ssub.s32 %s9, 1
      // Predicated region
      $region13: #{conv2d_block_forward.1} parent=11 // pred_check
        %p132 = pneg %p68
      $region14: #{conv2d_block_forward.1} parent=11 // pred_check_branch
        %134 = sbr.rel (%p132) target = $region16
      $region15: #{conv2d_block_forward.1} parent=11 // pred_region
        _
      $region16: #{conv2d_block_forward.1} parent=11 // pred_fallthru
        _
      // Predicated region
      $region17: #{conv2d_block_forward.1} parent=11 // pred_check
        %p135 = pneg %p89
      $region18: #{conv2d_block_forward.1} parent=11 // pred_check_branch
        %137 = sbr.rel (%p135) target = $region20
      $region19: #{conv2d_block_forward.1} parent=11 // pred_region
        _
      $region20: #{conv2d_block_forward.1} parent=11 // pred_fallthru
        _
    $region12: #{conv2d_block_forward.1} parent=5 // pred_fallthru
      _
    %p138 = scmp.lt.s32.totalorder %s9, 2
    // Predicated region
    $region21: #{conv2d_block_forward.1} parent=5 // pred_check
      %p139 = pneg %p138
    $region22: #{conv2d_block_forward.1} parent=5 // pred_check_branch
      %141 = sbr.rel (%p139) target = $region24
    $region23: #{conv2d_block_forward.1} parent=5 // pred_region
      // Predicated region
      $region25: #{conv2d_block_forward.1} parent=23 // pred_check
        %p142 = pneg %p41
      $region26: #{conv2d_block_forward.1} parent=23 // pred_check_branch
        %144 = sbr.rel (%p142) target = $region28
      $region27: #{conv2d_block_forward.1} parent=23 // pred_region
        %p145 = scmp.lt.s32.totalorder %s16, 1
        %s146 = scalar_select %p145, %s16, 1
        %s147 = smul.addr %s146, 54
        %s148 = smul.addr %s147, 4
        %s149 = scalar_lea.vmem %s0, %s148
      $region28: #{conv2d_block_forward.1} parent=23 // pred_fallthru
        _
    $region24: #{conv2d_block_forward.1} parent=5 // pred_fallthru
      _
    %p150 = scmp.le.s32.totalorder 1, %s9
    %p151 = scmp.lt.s32.totalorder %s9, 3
    %p152 = pnand %p150, %p151
    %p153 = pneg %p152
    // Predicated region
    $region29: #{conv2d_block_forward.1} parent=5 // pred_check
      _
    $region30: #{conv2d_block_forward.1} parent=5 // pred_check_branch
      %155 = sbr.rel (%p152) target = $region32
    $region31: #{conv2d_block_forward.1} parent=5 // pred_region
      %s156 = ssub.s32 %s9, 1
      %p157 = scmp.lt.s32.totalorder %s18, 1
      %s158 = scalar_select %p157, %s18, 1
      %s159 = smul.addr %s158, 54
      %s160 = smul.addr %s159, 4
      %s161 = scalar_lea.vmem %s0, %s160
      %p162 = pneg %p47
      %p163 = pneg %p44
      %p164 = pneg %p68
      %p165 = pneg %p65
      %p166 = pneg %p89
      %p167 = pneg %p86
      %p168 = pneg %p117
      %p169 = pneg %p114
      %s170 = smul.u32 16, %s19
      %p171 = scmp.lt.s32.totalorder %s18, 1
      %s172 = scalar_select %p171, %s18, 1
      %p173 = scmp.lt.s32.totalorder %s170, 15
      %s174 = scalar_select %p173, %s170, 15
      %s175 = smul.addr %s174, 2
      %s176 = smul.addr %s172, 32
      %s177 = sadd.s32 %s175, %s176
      %s178 = smul.addr %s177, 4
      %s179 = scalar_lea.vmem %s3, %s178
      %p180 = scmp.lt.s32.totalorder %s18, 1
      %s181 = scalar_select %p180, %s18, 1
      %s182 = smul.addr %s181, 54
      %s183 = smul.addr %s182, 4
      %s184 = scalar_lea.vmem %s0, %s183
      %s185 = smul.u32 16, %s19
      %p186 = scmp.lt.s32.totalorder %s18, 1
      %s187 = scalar_select %p186, %s18, 1
      %p188 = scmp.lt.s32.totalorder %s185, 15
      %s189 = scalar_select %p188, %s185, 15
      %s190 = smul.addr %s189, 2
      %s191 = smul.addr %s187, 32
      %s192 = sadd.s32 %s190, %s191
      %s193 = smul.addr %s192, 4
      %s194 = scalar_lea.vmem %s3, %s193
      %s195 = smul.u32 16, %s19
      %s197 = smul.u32 %s19, 16
      %s198 = smul.u32 %s197, 3
      %s199 = smul.addr %s198, 4
      %s200 = scalar_lea.vmem %s184, %s199
      %v201 = vld [vmem:[%s200] sm:$0xf]
      %v202 = vld [vmem:[%s200 + $0x4] sm:$0xf]
      %v203 = vld [vmem:[%s200 + $0xc] sm:$0xf]
      %v204 = vld [vmem:[%s200 + $0x10] sm:$0xf]
      %v205 = vld [vmem:[%s200 + $0x18] sm:$0xf]
      %v206 = vld [vmem:[%s200 + $0x1c] sm:$0xf]
      %v207 = vld [vmem:[%s200 + $0x24] sm:$0xf]
      %v208 = vld [vmem:[%s200 + $0x28] sm:$0xf]
      %v209 = vld [vmem:[%s200 + $0x30] sm:$0xf]
      %v210 = vld [vmem:[%s200 + $0x34] sm:$0xf]
      %v211 = vld [vmem:[%s200 + $0x3c] sm:$0xf]
      %v212 = vld [vmem:[%s200 + $0x40] sm:$0xf]
      %v213 = vld [vmem:[%s200 + $0x48] sm:$0xf]
      %v214 = vld [vmem:[%s200 + $0x4c] sm:$0xf]
      %v215 = vld [vmem:[%s200 + $0x54] sm:$0xf]
      %v216 = vld [vmem:[%s200 + $0x58] sm:$0xf]
      %v217 = vld [vmem:[%s200 + $0x60] sm:$0xf]
      %v218 = vld [vmem:[%s200 + $0x64] sm:$0xf]
      %v219 = vld [vmem:[%s200 + $0x6c] sm:$0xf]
      %v220 = vld [vmem:[%s200 + $0x70] sm:$0xf]
      %v221 = vld [vmem:[%s200 + $0x78] sm:$0xf]
      %v222 = vld [vmem:[%s200 + $0x7c] sm:$0xf]
      %v223 = vld [vmem:[%s200 + $0x84] sm:$0xf]
      %v224 = vld [vmem:[%s200 + $0x88] sm:$0xf]
      %v225 = vld [vmem:[%s200 + $0x90] sm:$0xf]
      %v226 = vld [vmem:[%s200 + $0x94] sm:$0xf]
      %v227 = vld [vmem:[%s200 + $0x9c] sm:$0xf]
      %v228 = vld [vmem:[%s200 + $0xa0] sm:$0xf]
      %v229 = vld [vmem:[%s200 + $0xa8] sm:$0xf]
      %v230 = vld [vmem:[%s200 + $0xac] sm:$0xf]
      %v231 = vld [vmem:[%s200 + $0xb4] sm:$0xf]
      %v232 = vld [vmem:[%s200 + $0xb8] sm:$0xf]
      %v233 = vld [vmem:[%s200 + $0x8] sm:$0x1]
      %v234 = vld [vmem:[%s200 + $0x14] sm:$0x1]
      %v235 = vld [vmem:[%s200 + $0x20] sm:$0x1]
      %v236 = vld [vmem:[%s200 + $0x2c] sm:$0x1]
      %v237 = vld [vmem:[%s200 + $0x38] sm:$0x1]
      %v238 = vld [vmem:[%s200 + $0x44] sm:$0x1]
      %v239 = vld [vmem:[%s200 + $0x50] sm:$0x1]
      %v240 = vld [vmem:[%s200 + $0x5c] sm:$0x1]
      %v241 = vld [vmem:[%s200 + $0x68] sm:$0x1]
      %v242 = vld [vmem:[%s200 + $0x74] sm:$0x1]
      %v243 = vld [vmem:[%s200 + $0x80] sm:$0x1]
      %v244 = vld [vmem:[%s200 + $0x8c] sm:$0x1]
      %v245 = vld [vmem:[%s200 + $0x98] sm:$0x1]
      %v246 = vld [vmem:[%s200 + $0xa4] sm:$0x1]
      %v247 = vld [vmem:[%s200 + $0xb0] sm:$0x1]
      %v248 = vld [vmem:[%s200 + $0xbc] sm:$0x1]
      %v249 = vld [vmem:[%s200] sm:$0xe]
      %v250 = vld [vmem:[%s200 + $0xc] sm:$0xe]
      %v251 = vld [vmem:[%s200 + $0x18] sm:$0xe]
      %v252 = vld [vmem:[%s200 + $0x24] sm:$0xe]
      %v253 = vld [vmem:[%s200 + $0x30] sm:$0xe]
      %v254 = vld [vmem:[%s200 + $0x3c] sm:$0xe]
      %v255 = vld [vmem:[%s200 + $0x48] sm:$0xe]
      %v256 = vld [vmem:[%s200 + $0x54] sm:$0xe]
      %v257 = vld [vmem:[%s200 + $0x60] sm:$0xe]
      %v258 = vld [vmem:[%s200 + $0x6c] sm:$0xe]
      %v259 = vld [vmem:[%s200 + $0x78] sm:$0xe]
      %v260 = vld [vmem:[%s200 + $0x84] sm:$0xe]
      %v261 = vld [vmem:[%s200 + $0x90] sm:$0xe]
      %v262 = vld [vmem:[%s200 + $0x9c] sm:$0xe]
      %v263 = vld [vmem:[%s200 + $0xa8] sm:$0xe]
      %v264 = vld [vmem:[%s200 + $0xb4] sm:$0xe]
      %s265 = sadd.s32 %s197, 1
      %s266 = smul.u32 %s265, 3
      %s267 = smul.addr %s266, 4
      %s268 = scalar_lea.vmem %s184, %s267
      %v269 = vld [vmem:[%s268] sm:$0xf]
      %v270 = vld [vmem:[%s268 + $0x4] sm:$0xf]
      %v271 = vld [vmem:[%s268 + $0xc] sm:$0xf]
      %v272 = vld [vmem:[%s268 + $0x10] sm:$0xf]
      %v273 = vld [vmem:[%s268 + $0x18] sm:$0xf]
      %v274 = vld [vmem:[%s268 + $0x1c] sm:$0xf]
      %v275 = vld [vmem:[%s268 + $0x24] sm:$0xf]
      %v276 = vld [vmem:[%s268 + $0x28] sm:$0xf]
      %v277 = vld [vmem:[%s268 + $0x30] sm:$0xf]
      %v278 = vld [vmem:[%s268 + $0x34] sm:$0xf]
      %v279 = vld [vmem:[%s268 + $0x3c] sm:$0xf]
      %v280 = vld [vmem:[%s268 + $0x40] sm:$0xf]
      %v281 = vld [vmem:[%s268 + $0x48] sm:$0xf]
      %v282 = vld [vmem:[%s268 + $0x4c] sm:$0xf]
      %v283 = vld [vmem:[%s268 + $0x54] sm:$0xf]
      %v284 = vld [vmem:[%s268 + $0x58] sm:$0xf]
      %v285 = vld [vmem:[%s268 + $0x60] sm:$0xf]
      %v286 = vld [vmem:[%s268 + $0x64] sm:$0xf]
      %v287 = vld [vmem:[%s268 + $0x6c] sm:$0xf]
      %v288 = vld [vmem:[%s268 + $0x70] sm:$0xf]
      %v289 = vld [vmem:[%s268 + $0x78] sm:$0xf]
      %v290 = vld [vmem:[%s268 + $0x7c] sm:$0xf]
      %v291 = vld [vmem:[%s268 + $0x84] sm:$0xf]
      %v292 = vld [vmem:[%s268 + $0x88] sm:$0xf]
      %v293 = vld [vmem:[%s268 + $0x90] sm:$0xf]
      %v294 = vld [vmem:[%s268 + $0x94] sm:$0xf]
      %v295 = vld [vmem:[%s268 + $0x9c] sm:$0xf]
      %v296 = vld [vmem:[%s268 + $0xa0] sm:$0xf]
      %v297 = vld [vmem:[%s268 + $0xa8] sm:$0xf]
      %v298 = vld [vmem:[%s268 + $0xac] sm:$0xf]
      %v299 = vld [vmem:[%s268 + $0xb4] sm:$0xf]
      %v300 = vld [vmem:[%s268 + $0xb8] sm:$0xf]
      %v301 = vld [vmem:[%s268 + $0x8] sm:$0x1]
      %v302 = vld [vmem:[%s268 + $0x14] sm:$0x1]
      %v303 = vld [vmem:[%s268 + $0x20] sm:$0x1]
      %v304 = vld [vmem:[%s268 + $0x2c] sm:$0x1]
      %v305 = vld [vmem:[%s268 + $0x38] sm:$0x1]
      %v306 = vld [vmem:[%s268 + $0x44] sm:$0x1]
      %v307 = vld [vmem:[%s268 + $0x50] sm:$0x1]
      %v308 = vld [vmem:[%s268 + $0x5c] sm:$0x1]
      %v309 = vld [vmem:[%s268 + $0x68] sm:$0x1]
      %v310 = vld [vmem:[%s268 + $0x74] sm:$0x1]
      %v311 = vld [vmem:[%s268 + $0x80] sm:$0x1]
      %v312 = vld [vmem:[%s268 + $0x8c] sm:$0x1]
      %v313 = vld [vmem:[%s268 + $0x98] sm:$0x1]
      %v314 = vld [vmem:[%s268 + $0xa4] sm:$0x1]
      %v315 = vld [vmem:[%s268 + $0xb0] sm:$0x1]
      %v316 = vld [vmem:[%s268 + $0xbc] sm:$0x1]
      %v317 = vld [vmem:[%s268] sm:$0xe]
      %v318 = vld [vmem:[%s268 + $0xc] sm:$0xe]
      %v319 = vld [vmem:[%s268 + $0x18] sm:$0xe]
      %v320 = vld [vmem:[%s268 + $0x24] sm:$0xe]
      %v321 = vld [vmem:[%s268 + $0x30] sm:$0xe]
      %v322 = vld [vmem:[%s268 + $0x3c] sm:$0xe]
      %v323 = vld [vmem:[%s268 + $0x48] sm:$0xe]
      %v324 = vld [vmem:[%s268 + $0x54] sm:$0xe]
      %v325 = vld [vmem:[%s268 + $0x60] sm:$0xe]
      %v326 = vld [vmem:[%s268 + $0x6c] sm:$0xe]
      %v327 = vld [vmem:[%s268 + $0x78] sm:$0xe]
      %v328 = vld [vmem:[%s268 + $0x84] sm:$0xe]
      %v329 = vld [vmem:[%s268 + $0x90] sm:$0xe]
      %v330 = vld [vmem:[%s268 + $0x9c] sm:$0xe]
      %v331 = vld [vmem:[%s268 + $0xa8] sm:$0xe]
      %v332 = vld [vmem:[%s268 + $0xb4] sm:$0xe]
      %s333 = sadd.s32 %s197, 2
      %s334 = smul.u32 %s333, 3
      %s335 = smul.addr %s334, 4
      %s336 = scalar_lea.vmem %s184, %s335
      %v337 = vld [vmem:[%s336] sm:$0xf]
      %v338 = vld [vmem:[%s336 + $0x4] sm:$0xf]
      %v339 = vld [vmem:[%s336 + $0xc] sm:$0xf]
      %v340 = vld [vmem:[%s336 + $0x10] sm:$0xf]
      %v341 = vld [vmem:[%s336 + $0x18] sm:$0xf]
      %v342 = vld [vmem:[%s336 + $0x1c] sm:$0xf]
      %v343 = vld [vmem:[%s336 + $0x24] sm:$0xf]
      %v344 = vld [vmem:[%s336 + $0x28] sm:$0xf]
      %v345 = vld [vmem:[%s336 + $0x30] sm:$0xf]
      %v346 = vld [vmem:[%s336 + $0x34] sm:$0xf]
      %v347 = vld [vmem:[%s336 + $0x3c] sm:$0xf]
      %v348 = vld [vmem:[%s336 + $0x40] sm:$0xf]
      %v349 = vld [vmem:[%s336 + $0x48] sm:$0xf]
      %v350 = vld [vmem:[%s336 + $0x4c] sm:$0xf]
      %v351 = vld [vmem:[%s336 + $0x54] sm:$0xf]
      %v352 = vld [vmem:[%s336 + $0x58] sm:$0xf]
      %v353 = vld [vmem:[%s336 + $0x60] sm:$0xf]
      %v354 = vld [vmem:[%s336 + $0x64] sm:$0xf]
      %v355 = vld [vmem:[%s336 + $0x6c] sm:$0xf]
      %v356 = vld [vmem:[%s336 + $0x70] sm:$0xf]
      %v357 = vld [vmem:[%s336 + $0x78] sm:$0xf]
      %v358 = vld [vmem:[%s336 + $0x7c] sm:$0xf]
      %v359 = vld [vmem:[%s336 + $0x84] sm:$0xf]
      %v360 = vld [vmem:[%s336 + $0x88] sm:$0xf]
      %v361 = vld [vmem:[%s336 + $0x90] sm:$0xf]
      %v362 = vld [vmem:[%s336 + $0x94] sm:$0xf]
      %v363 = vld [vmem:[%s336 + $0x9c] sm:$0xf]
      %v364 = vld [vmem:[%s336 + $0xa0] sm:$0xf]
      %v365 = vld [vmem:[%s336 + $0xa8] sm:$0xf]
      %v366 = vld [vmem:[%s336 + $0xac] sm:$0xf]
      %v367 = vld [vmem:[%s336 + $0xb4] sm:$0xf]
      %v368 = vld [vmem:[%s336 + $0xb8] sm:$0xf]
      %v369 = vld [vmem:[%s336 + $0x8] sm:$0x1]
      %v370 = vld [vmem:[%s336 + $0x14] sm:$0x1]
      %v371 = vld [vmem:[%s336 + $0x20] sm:$0x1]
      %v372 = vld [vmem:[%s336 + $0x2c] sm:$0x1]
      %v373 = vld [vmem:[%s336 + $0x38] sm:$0x1]
      %v374 = vld [vmem:[%s336 + $0x44] sm:$0x1]
      %v375 = vld [vmem:[%s336 + $0x50] sm:$0x1]
      %v376 = vld [vmem:[%s336 + $0x5c] sm:$0x1]
      %v377 = vld [vmem:[%s336 + $0x68] sm:$0x1]
      %v378 = vld [vmem:[%s336 + $0x74] sm:$0x1]
      %v379 = vld [vmem:[%s336 + $0x80] sm:$0x1]
      %v380 = vld [vmem:[%s336 + $0x8c] sm:$0x1]
      %v381 = vld [vmem:[%s336 + $0x98] sm:$0x1]
      %v382 = vld [vmem:[%s336 + $0xa4] sm:$0x1]
      %v383 = vld [vmem:[%s336 + $0xb0] sm:$0x1]
      %v384 = vld [vmem:[%s336 + $0xbc] sm:$0x1]
      %v385 = vld [vmem:[%s336] sm:$0xe]
      %v386 = vld [vmem:[%s336 + $0xc] sm:$0xe]
      %v387 = vld [vmem:[%s336 + $0x18] sm:$0xe]
      %v388 = vld [vmem:[%s336 + $0x24] sm:$0xe]
      %v389 = vld [vmem:[%s336 + $0x30] sm:$0xe]
      %v390 = vld [vmem:[%s336 + $0x3c] sm:$0xe]
      %v391 = vld [vmem:[%s336 + $0x48] sm:$0xe]
      %v392 = vld [vmem:[%s336 + $0x54] sm:$0xe]
      %v393 = vld [vmem:[%s336 + $0x60] sm:$0xe]
      %v394 = vld [vmem:[%s336 + $0x6c] sm:$0xe]
      %v395 = vld [vmem:[%s336 + $0x78] sm:$0xe]
      %v396 = vld [vmem:[%s336 + $0x84] sm:$0xe]
      %v397 = vld [vmem:[%s336 + $0x90] sm:$0xe]
      %v398 = vld [vmem:[%s336 + $0x9c] sm:$0xe]
      %v399 = vld [vmem:[%s336 + $0xa8] sm:$0xe]
      %v400 = vld [vmem:[%s336 + $0xb4] sm:$0xe]
      %v433 = vunpack.c.l.b16 %v201
      %v434 = vunpack.c.l.b16 %v202
      %v435 = vunpack.c.l.b16 %v203
      %v436 = vunpack.c.l.b16 %v204
      %v437 = vunpack.c.l.b16 %v205
      %v438 = vunpack.c.l.b16 %v206
      %v439 = vunpack.c.l.b16 %v207
      %v440 = vunpack.c.l.b16 %v208
      %v441 = vunpack.c.l.b16 %v209
      %v442 = vunpack.c.l.b16 %v210
      %v443 = vunpack.c.l.b16 %v211
      %v444 = vunpack.c.l.b16 %v212
      %v445 = vunpack.c.l.b16 %v213
      %v446 = vunpack.c.l.b16 %v214
      %v447 = vunpack.c.l.b16 %v215
      %v448 = vunpack.c.l.b16 %v216
      %v449 = vunpack.c.l.b16 %v217
      %v450 = vunpack.c.l.b16 %v218
      %v451 = vunpack.c.l.b16 %v219
      %v452 = vunpack.c.l.b16 %v220
      %v453 = vunpack.c.l.b16 %v221
      %v454 = vunpack.c.l.b16 %v222
      %v455 = vunpack.c.l.b16 %v223
      %v456 = vunpack.c.l.b16 %v224
      %v457 = vunpack.c.l.b16 %v225
      %v458 = vunpack.c.l.b16 %v226
      %v459 = vunpack.c.l.b16 %v227
      %v460 = vunpack.c.l.b16 %v228
      %v461 = vunpack.c.l.b16 %v229
      %v462 = vunpack.c.l.b16 %v230
      %v463 = vunpack.c.l.b16 %v231
      %v464 = vunpack.c.l.b16 %v232
      %v465 = vpack.c.b16 %v434, %v433
      %v466 = vpack.c.b16 %v436, %v435
      %v467 = vpack.c.b16 %v438, %v437
      %v468 = vpack.c.b16 %v440, %v439
      %v469 = vpack.c.b16 %v442, %v441
      %v470 = vpack.c.b16 %v444, %v443
      %v471 = vpack.c.b16 %v446, %v445
      %v472 = vpack.c.b16 %v448, %v447
      %v473 = vpack.c.b16 %v450, %v449
      %v474 = vpack.c.b16 %v452, %v451
      %v475 = vpack.c.b16 %v454, %v453
      %v476 = vpack.c.b16 %v456, %v455
      %v477 = vpack.c.b16 %v458, %v457
      %v478 = vpack.c.b16 %v460, %v459
      %v479 = vpack.c.b16 %v462, %v461
      %v480 = vpack.c.b16 %v464, %v463
      %v497 = vunpack.c.l.b16 %v233
      %v498 = vunpack.c.l.b16 %v234
      %v499 = vunpack.c.l.b16 %v235
      %v500 = vunpack.c.l.b16 %v236
      %v501 = vunpack.c.l.b16 %v237
      %v502 = vunpack.c.l.b16 %v238
      %v503 = vunpack.c.l.b16 %v239
      %v504 = vunpack.c.l.b16 %v240
      %v505 = vunpack.c.l.b16 %v241
      %v506 = vunpack.c.l.b16 %v242
      %v507 = vunpack.c.l.b16 %v243
      %v508 = vunpack.c.l.b16 %v244
      %v509 = vunpack.c.l.b16 %v245
      %v510 = vunpack.c.l.b16 %v246
      %v511 = vunpack.c.l.b16 %v247
      %v512 = vunpack.c.l.b16 %v248
      %v513 = vpack.c.b16 %v497, %v497
      %v514 = vpack.c.b16 %v498, %v498
      %v515 = vpack.c.b16 %v499, %v499
      %v516 = vpack.c.b16 %v500, %v500
      %v517 = vpack.c.b16 %v501, %v501
      %v518 = vpack.c.b16 %v502, %v502
      %v519 = vpack.c.b16 %v503, %v503
      %v520 = vpack.c.b16 %v504, %v504
      %v521 = vpack.c.b16 %v505, %v505
      %v522 = vpack.c.b16 %v506, %v506
      %v523 = vpack.c.b16 %v507, %v507
      %v524 = vpack.c.b16 %v508, %v508
      %v525 = vpack.c.b16 %v509, %v509
      %v526 = vpack.c.b16 %v510, %v510
      %v527 = vpack.c.b16 %v511, %v511
      %v528 = vpack.c.b16 %v512, %v512
      %vm529 = vsmask.f32 7424
      %v531 = vshrl.u32 %v465, 16
      %v533 = vshll.u32 %v465, 16
      %v535 = vrot.slane %v533, 1
      %v536 = vor.u32 %v531, %v535
      %v538 = vshll.u32 %v513, 16
      %v540 = vrot.slane %v538, 1
      %v541 = vsel %vm529, %v536, %v540
      %v543 = vshrl.u32 %v466, 16
      %v545 = vshll.u32 %v466, 16
      %v547 = vrot.slane %v545, 1
      %v548 = vor.u32 %v543, %v547
      %v550 = vshll.u32 %v514, 16
      %v552 = vrot.slane %v550, 1
      %v553 = vsel %vm529, %v548, %v552
      %v555 = vshrl.u32 %v467, 16
      %v557 = vshll.u32 %v467, 16
      %v559 = vrot.slane %v557, 1
      %v560 = vor.u32 %v555, %v559
      %v562 = vshll.u32 %v515, 16
      %v564 = vrot.slane %v562, 1
      %v565 = vsel %vm529, %v560, %v564
      %v567 = vshrl.u32 %v468, 16
      %v569 = vshll.u32 %v468, 16
      %v571 = vrot.slane %v569, 1
      %v572 = vor.u32 %v567, %v571
      %v574 = vshll.u32 %v516, 16
      %v576 = vrot.slane %v574, 1
      %v577 = vsel %vm529, %v572, %v576
      %v579 = vshrl.u32 %v469, 16
      %v581 = vshll.u32 %v469, 16
      %v583 = vrot.slane %v581, 1
      %v584 = vor.u32 %v579, %v583
      %v586 = vshll.u32 %v517, 16
      %v588 = vrot.slane %v586, 1
      %v589 = vsel %vm529, %v584, %v588
      %v591 = vshrl.u32 %v470, 16
      %v593 = vshll.u32 %v470, 16
      %v595 = vrot.slane %v593, 1
      %v596 = vor.u32 %v591, %v595
      %v598 = vshll.u32 %v518, 16
      %v600 = vrot.slane %v598, 1
      %v601 = vsel %vm529, %v596, %v600
      %v603 = vshrl.u32 %v471, 16
      %v605 = vshll.u32 %v471, 16
      %v607 = vrot.slane %v605, 1
      %v608 = vor.u32 %v603, %v607
      %v610 = vshll.u32 %v519, 16
      %v612 = vrot.slane %v610, 1
      %v613 = vsel %vm529, %v608, %v612
      %v615 = vshrl.u32 %v472, 16
      %v617 = vshll.u32 %v472, 16
      %v619 = vrot.slane %v617, 1
      %v620 = vor.u32 %v615, %v619
      %v622 = vshll.u32 %v520, 16
      %v624 = vrot.slane %v622, 1
      %v625 = vsel %vm529, %v620, %v624
      %v627 = vshrl.u32 %v473, 16
      %v629 = vshll.u32 %v473, 16
      %v631 = vrot.slane %v629, 1
      %v632 = vor.u32 %v627, %v631
      %v634 = vshll.u32 %v521, 16
      %v636 = vrot.slane %v634, 1
      %v637 = vsel %vm529, %v632, %v636
      %v639 = vshrl.u32 %v474, 16
      %v641 = vshll.u32 %v474, 16
      %v643 = vrot.slane %v641, 1
      %v644 = vor.u32 %v639, %v643
      %v646 = vshll.u32 %v522, 16
      %v648 = vrot.slane %v646, 1
      %v649 = vsel %vm529, %v644, %v648
      %v651 = vshrl.u32 %v475, 16
      %v653 = vshll.u32 %v475, 16
      %v655 = vrot.slane %v653, 1
      %v656 = vor.u32 %v651, %v655
      %v658 = vshll.u32 %v523, 16
      %v660 = vrot.slane %v658, 1
      %v661 = vsel %vm529, %v656, %v660
      %v663 = vshrl.u32 %v476, 16
      %v665 = vshll.u32 %v476, 16
      %v667 = vrot.slane %v665, 1
      %v668 = vor.u32 %v663, %v667
      %v670 = vshll.u32 %v524, 16
      %v672 = vrot.slane %v670, 1
      %v673 = vsel %vm529, %v668, %v672
      %v675 = vshrl.u32 %v477, 16
      %v677 = vshll.u32 %v477, 16
      %v679 = vrot.slane %v677, 1
      %v680 = vor.u32 %v675, %v679
      %v682 = vshll.u32 %v525, 16
      %v684 = vrot.slane %v682, 1
      %v685 = vsel %vm529, %v680, %v684
      %v687 = vshrl.u32 %v478, 16
      %v689 = vshll.u32 %v478, 16
      %v691 = vrot.slane %v689, 1
      %v692 = vor.u32 %v687, %v691
      %v694 = vshll.u32 %v526, 16
      %v696 = vrot.slane %v694, 1
      %v697 = vsel %vm529, %v692, %v696
      %v699 = vshrl.u32 %v479, 16
      %v701 = vshll.u32 %v479, 16
      %v703 = vrot.slane %v701, 1
      %v704 = vor.u32 %v699, %v703
      %v706 = vshll.u32 %v527, 16
      %v708 = vrot.slane %v706, 1
      %v709 = vsel %vm529, %v704, %v708
      %v711 = vshrl.u32 %v480, 16
      %v713 = vshll.u32 %v480, 16
      %v715 = vrot.slane %v713, 1
      %v716 = vor.u32 %v711, %v715
      %v718 = vshll.u32 %v528, 16
      %v720 = vrot.slane %v718, 1
      %v721 = vsel %vm529, %v716, %v720
      %722 = vrot.lane.b32.xlu0 %v541, 4
      %v723 = vpop.permute.xlu0 %722
      %724 = vrot.lane.b32.xlu0 %v553, 4
      %v725 = vpop.permute.xlu0 %724
      %726 = vrot.lane.b32.xlu0 %v565, 4
      %v727 = vpop.permute.xlu0 %726
      %728 = vrot.lane.b32.xlu0 %v577, 4
      %v729 = vpop.permute.xlu0 %728
      %730 = vrot.lane.b32.xlu0 %v589, 4
      %v731 = vpop.permute.xlu0 %730
      %732 = vrot.lane.b32.xlu0 %v601, 4
      %v733 = vpop.permute.xlu0 %732
      %734 = vrot.lane.b32.xlu0 %v613, 4
      %v735 = vpop.permute.xlu0 %734
      %736 = vrot.lane.b32.xlu0 %v625, 4
      %v737 = vpop.permute.xlu0 %736
      %738 = vrot.lane.b32.xlu0 %v637, 4
      %v739 = vpop.permute.xlu0 %738
      %740 = vrot.lane.b32.xlu0 %v649, 4
      %v741 = vpop.permute.xlu0 %740
      %742 = vrot.lane.b32.xlu0 %v661, 4
      %v743 = vpop.permute.xlu0 %742
      %744 = vrot.lane.b32.xlu0 %v673, 4
      %v745 = vpop.permute.xlu0 %744
      %746 = vrot.lane.b32.xlu0 %v685, 4
      %v747 = vpop.permute.xlu0 %746
      %748 = vrot.lane.b32.xlu0 %v697, 4
      %v749 = vpop.permute.xlu0 %748
      %750 = vrot.lane.b32.xlu0 %v709, 4
      %v751 = vpop.permute.xlu0 %750
      %752 = vrot.lane.b32.xlu0 %v721, 4
      %v753 = vpop.permute.xlu0 %752
      %v770 = vunpack.c.l.b16 %v249
      %v771 = vunpack.c.l.b16 %v250
      %v772 = vunpack.c.l.b16 %v251
      %v773 = vunpack.c.l.b16 %v252
      %v774 = vunpack.c.l.b16 %v253
      %v775 = vunpack.c.l.b16 %v254
      %v776 = vunpack.c.l.b16 %v255
      %v777 = vunpack.c.l.b16 %v256
      %v778 = vunpack.c.l.b16 %v257
      %v779 = vunpack.c.l.b16 %v258
      %v780 = vunpack.c.l.b16 %v259
      %v781 = vunpack.c.l.b16 %v260
      %v782 = vunpack.c.l.b16 %v261
      %v783 = vunpack.c.l.b16 %v262
      %v784 = vunpack.c.l.b16 %v263
      %v785 = vunpack.c.l.b16 %v264
      %v786 = vpack.c.b16 %v434, %v770
      %v787 = vpack.c.b16 %v436, %v771
      %v788 = vpack.c.b16 %v438, %v772
      %v789 = vpack.c.b16 %v440, %v773
      %v790 = vpack.c.b16 %v442, %v774
      %v791 = vpack.c.b16 %v444, %v775
      %v792 = vpack.c.b16 %v446, %v776
      %v793 = vpack.c.b16 %v448, %v777
      %v794 = vpack.c.b16 %v450, %v778
      %v795 = vpack.c.b16 %v452, %v779
      %v796 = vpack.c.b16 %v454, %v780
      %v797 = vpack.c.b16 %v456, %v781
      %v798 = vpack.c.b16 %v458, %v782
      %v799 = vpack.c.b16 %v460, %v783
      %v800 = vpack.c.b16 %v462, %v784
      %v801 = vpack.c.b16 %v464, %v785
      %vm802 = vcmask 1046528
      %v803 = vrot.slane %v786, 1
      %v804 = vrot.slane %v513, 1
      %v805 = vsel %vm802, %v803, %v804
      %v806 = vrot.slane %v787, 1
      %v807 = vrot.slane %v514, 1
      %v808 = vsel %vm802, %v806, %v807
      %v809 = vrot.slane %v788, 1
      %v810 = vrot.slane %v515, 1
      %v811 = vsel %vm802, %v809, %v810
      %v812 = vrot.slane %v789, 1
      %v813 = vrot.slane %v516, 1
      %v814 = vsel %vm802, %v812, %v813
      %v815 = vrot.slane %v790, 1
      %v816 = vrot.slane %v517, 1
      %v817 = vsel %vm802, %v815, %v816
      %v818 = vrot.slane %v791, 1
      %v819 = vrot.slane %v518, 1
      %v820 = vsel %vm802, %v818, %v819
      %v821 = vrot.slane %v792, 1
      %v822 = vrot.slane %v519, 1
      %v823 = vsel %vm802, %v821, %v822
      %v824 = vrot.slane %v793, 1
      %v825 = vrot.slane %v520, 1
      %v826 = vsel %vm802, %v824, %v825
      %v827 = vrot.slane %v794, 1
      %v828 = vrot.slane %v521, 1
      %v829 = vsel %vm802, %v827, %v828
      %v830 = vrot.slane %v795, 1
      %v831 = vrot.slane %v522, 1
      %v832 = vsel %vm802, %v830, %v831
      %v833 = vrot.slane %v796, 1
      %v834 = vrot.slane %v523, 1
      %v835 = vsel %vm802, %v833, %v834
      %v836 = vrot.slane %v797, 1
      %v837 = vrot.slane %v524, 1
      %v838 = vsel %vm802, %v836, %v837
      %v839 = vrot.slane %v798, 1
      %v840 = vrot.slane %v525, 1
      %v841 = vsel %vm802, %v839, %v840
      %v842 = vrot.slane %v799, 1
      %v843 = vrot.slane %v526, 1
      %v844 = vsel %vm802, %v842, %v843
      %v845 = vrot.slane %v800, 1
      %v846 = vrot.slane %v527, 1
      %v847 = vsel %vm802, %v845, %v846
      %v848 = vrot.slane %v801, 1
      %v849 = vrot.slane %v528, 1
      %v850 = vsel %vm802, %v848, %v849
      %851 = vrot.lane.b32.xlu0 %v805, 8
      %v852 = vpop.permute.xlu0 %851
      %853 = vrot.lane.b32.xlu0 %v808, 8
      %v854 = vpop.permute.xlu0 %853
      %855 = vrot.lane.b32.xlu0 %v811, 8
      %v856 = vpop.permute.xlu0 %855
      %857 = vrot.lane.b32.xlu0 %v814, 8
      %v858 = vpop.permute.xlu0 %857
      %859 = vrot.lane.b32.xlu0 %v817, 8
      %v860 = vpop.permute.xlu0 %859
      %861 = vrot.lane.b32.xlu0 %v820, 8
      %v862 = vpop.permute.xlu0 %861
      %863 = vrot.lane.b32.xlu0 %v823, 8
      %v864 = vpop.permute.xlu0 %863
      %865 = vrot.lane.b32.xlu0 %v826, 8
      %v866 = vpop.permute.xlu0 %865
      %867 = vrot.lane.b32.xlu0 %v829, 8
      %v868 = vpop.permute.xlu0 %867
      %869 = vrot.lane.b32.xlu0 %v832, 8
      %v870 = vpop.permute.xlu0 %869
      %871 = vrot.lane.b32.xlu0 %v835, 8
      %v872 = vpop.permute.xlu0 %871
      %873 = vrot.lane.b32.xlu0 %v838, 8
      %v874 = vpop.permute.xlu0 %873
      %875 = vrot.lane.b32.xlu0 %v841, 8
      %v876 = vpop.permute.xlu0 %875
      %877 = vrot.lane.b32.xlu0 %v844, 8
      %v878 = vpop.permute.xlu0 %877
      %879 = vrot.lane.b32.xlu0 %v847, 8
      %v880 = vpop.permute.xlu0 %879
      %881 = vrot.lane.b32.xlu0 %v850, 8
      %v882 = vpop.permute.xlu0 %881
      %v915 = vunpack.c.l.b16 %v269
      %v916 = vunpack.c.l.b16 %v270
      %v917 = vunpack.c.l.b16 %v271
      %v918 = vunpack.c.l.b16 %v272
      %v919 = vunpack.c.l.b16 %v273
      %v920 = vunpack.c.l.b16 %v274
      %v921 = vunpack.c.l.b16 %v275
      %v922 = vunpack.c.l.b16 %v276
      %v923 = vunpack.c.l.b16 %v277
      %v924 = vunpack.c.l.b16 %v278
      %v925 = vunpack.c.l.b16 %v279
      %v926 = vunpack.c.l.b16 %v280
      %v927 = vunpack.c.l.b16 %v281
      %v928 = vunpack.c.l.b16 %v282
      %v929 = vunpack.c.l.b16 %v283
      %v930 = vunpack.c.l.b16 %v284
      %v931 = vunpack.c.l.b16 %v285
      %v932 = vunpack.c.l.b16 %v286
      %v933 = vunpack.c.l.b16 %v287
      %v934 = vunpack.c.l.b16 %v288
      %v935 = vunpack.c.l.b16 %v289
      %v936 = vunpack.c.l.b16 %v290
      %v937 = vunpack.c.l.b16 %v291
      %v938 = vunpack.c.l.b16 %v292
      %v939 = vunpack.c.l.b16 %v293
      %v940 = vunpack.c.l.b16 %v294
      %v941 = vunpack.c.l.b16 %v295
      %v942 = vunpack.c.l.b16 %v296
      %v943 = vunpack.c.l.b16 %v297
      %v944 = vunpack.c.l.b16 %v298
      %v945 = vunpack.c.l.b16 %v299
      %v946 = vunpack.c.l.b16 %v300
      %v947 = vpack.c.b16 %v916, %v915
      %v948 = vpack.c.b16 %v918, %v917
      %v949 = vpack.c.b16 %v920, %v919
      %v950 = vpack.c.b16 %v922, %v921
      %v951 = vpack.c.b16 %v924, %v923
      %v952 = vpack.c.b16 %v926, %v925
      %v953 = vpack.c.b16 %v928, %v927
      %v954 = vpack.c.b16 %v930, %v929
      %v955 = vpack.c.b16 %v932, %v931
      %v956 = vpack.c.b16 %v934, %v933
      %v957 = vpack.c.b16 %v936, %v935
      %v958 = vpack.c.b16 %v938, %v937
      %v959 = vpack.c.b16 %v940, %v939
      %v960 = vpack.c.b16 %v942, %v941
      %v961 = vpack.c.b16 %v944, %v943
      %v962 = vpack.c.b16 %v946, %v945
      %963 = vrot.lane.b32.xlu0 %v947, 12
      %v964 = vpop.permute.xlu0 %963
      %965 = vrot.lane.b32.xlu0 %v948, 12
      %v966 = vpop.permute.xlu0 %965
      %967 = vrot.lane.b32.xlu0 %v949, 12
      %v968 = vpop.permute.xlu0 %967
      %969 = vrot.lane.b32.xlu0 %v950, 12
      %v970 = vpop.permute.xlu0 %969
      %971 = vrot.lane.b32.xlu0 %v951, 12
      %v972 = vpop.permute.xlu0 %971
      %973 = vrot.lane.b32.xlu0 %v952, 12
      %v974 = vpop.permute.xlu0 %973
      %975 = vrot.lane.b32.xlu0 %v953, 12
      %v976 = vpop.permute.xlu0 %975
      %977 = vrot.lane.b32.xlu0 %v954, 12
      %v978 = vpop.permute.xlu0 %977
      %979 = vrot.lane.b32.xlu0 %v955, 12
      %v980 = vpop.permute.xlu0 %979
      %981 = vrot.lane.b32.xlu0 %v956, 12
      %v982 = vpop.permute.xlu0 %981
      %983 = vrot.lane.b32.xlu0 %v957, 12
      %v984 = vpop.permute.xlu0 %983
      %985 = vrot.lane.b32.xlu0 %v958, 12
      %v986 = vpop.permute.xlu0 %985
      %987 = vrot.lane.b32.xlu0 %v959, 12
      %v988 = vpop.permute.xlu0 %987
      %989 = vrot.lane.b32.xlu0 %v960, 12
      %v990 = vpop.permute.xlu0 %989
      %991 = vrot.lane.b32.xlu0 %v961, 12
      %v992 = vpop.permute.xlu0 %991
      %993 = vrot.lane.b32.xlu0 %v962, 12
      %v994 = vpop.permute.xlu0 %993
      %v1011 = vunpack.c.l.b16 %v301
      %v1012 = vunpack.c.l.b16 %v302
      %v1013 = vunpack.c.l.b16 %v303
      %v1014 = vunpack.c.l.b16 %v304
      %v1015 = vunpack.c.l.b16 %v305
      %v1016 = vunpack.c.l.b16 %v306
      %v1017 = vunpack.c.l.b16 %v307
      %v1018 = vunpack.c.l.b16 %v308
      %v1019 = vunpack.c.l.b16 %v309
      %v1020 = vunpack.c.l.b16 %v310
      %v1021 = vunpack.c.l.b16 %v311
      %v1022 = vunpack.c.l.b16 %v312
      %v1023 = vunpack.c.l.b16 %v313
      %v1024 = vunpack.c.l.b16 %v314
      %v1025 = vunpack.c.l.b16 %v315
      %v1026 = vunpack.c.l.b16 %v316
      %v1027 = vpack.c.b16 %v1011, %v1011
      %v1028 = vpack.c.b16 %v1012, %v1012
      %v1029 = vpack.c.b16 %v1013, %v1013
      %v1030 = vpack.c.b16 %v1014, %v1014
      %v1031 = vpack.c.b16 %v1015, %v1015
      %v1032 = vpack.c.b16 %v1016, %v1016
      %v1033 = vpack.c.b16 %v1017, %v1017
      %v1034 = vpack.c.b16 %v1018, %v1018
      %v1035 = vpack.c.b16 %v1019, %v1019
      %v1036 = vpack.c.b16 %v1020, %v1020
      %v1037 = vpack.c.b16 %v1021, %v1021
      %v1038 = vpack.c.b16 %v1022, %v1022
      %v1039 = vpack.c.b16 %v1023, %v1023
      %v1040 = vpack.c.b16 %v1024, %v1024
      %v1041 = vpack.c.b16 %v1025, %v1025
      %v1042 = vpack.c.b16 %v1026, %v1026
      %v1044 = vshrl.u32 %v947, 16
      %v1046 = vshll.u32 %v947, 16
      %v1048 = vrot.slane %v1046, 1
      %v1049 = vor.u32 %v1044, %v1048
      %v1051 = vshll.u32 %v1027, 16
      %v1053 = vrot.slane %v1051, 1
      %v1054 = vsel %vm529, %v1049, %v1053
      %v1056 = vshrl.u32 %v948, 16
      %v1058 = vshll.u32 %v948, 16
      %v1060 = vrot.slane %v1058, 1
      %v1061 = vor.u32 %v1056, %v1060
      %v1063 = vshll.u32 %v1028, 16
      %v1065 = vrot.slane %v1063, 1
      %v1066 = vsel %vm529, %v1061, %v1065
      %v1068 = vshrl.u32 %v949, 16
      %v1070 = vshll.u32 %v949, 16
      %v1072 = vrot.slane %v1070, 1
      %v1073 = vor.u32 %v1068, %v1072
      %v1075 = vshll.u32 %v1029, 16
      %v1077 = vrot.slane %v1075, 1
      %v1078 = vsel %vm529, %v1073, %v1077
      %v1080 = vshrl.u32 %v950, 16
      %v1082 = vshll.u32 %v950, 16
      %v1084 = vrot.slane %v1082, 1
      %v1085 = vor.u32 %v1080, %v1084
      %v1087 = vshll.u32 %v1030, 16
      %v1089 = vrot.slane %v1087, 1
      %v1090 = vsel %vm529, %v1085, %v1089
      %v1092 = vshrl.u32 %v951, 16
      %v1094 = vshll.u32 %v951, 16
      %v1096 = vrot.slane %v1094, 1
      %v1097 = vor.u32 %v1092, %v1096
      %v1099 = vshll.u32 %v1031, 16
      %v1101 = vrot.slane %v1099, 1
      %v1102 = vsel %vm529, %v1097, %v1101
      %v1104 = vshrl.u32 %v952, 16
      %v1106 = vshll.u32 %v952, 16
      %v1108 = vrot.slane %v1106, 1
      %v1109 = vor.u32 %v1104, %v1108
      %v1111 = vshll.u32 %v1032, 16
      %v1113 = vrot.slane %v1111, 1
      %v1114 = vsel %vm529, %v1109, %v1113
      %v1116 = vshrl.u32 %v953, 16
      %v1118 = vshll.u32 %v953, 16
      %v1120 = vrot.slane %v1118, 1
      %v1121 = vor.u32 %v1116, %v1120
      %v1123 = vshll.u32 %v1033, 16
      %v1125 = vrot.slane %v1123, 1
      %v1126 = vsel %vm529, %v1121, %v1125
      %v1128 = vshrl.u32 %v954, 16
      %v1130 = vshll.u32 %v954, 16
      %v1132 = vrot.slane %v1130, 1
      %v1133 = vor.u32 %v1128, %v1132
      %v1135 = vshll.u32 %v1034, 16
      %v1137 = vrot.slane %v1135, 1
      %v1138 = vsel %vm529, %v1133, %v1137
      %v1140 = vshrl.u32 %v955, 16
      %v1142 = vshll.u32 %v955, 16
      %v1144 = vrot.slane %v1142, 1
      %v1145 = vor.u32 %v1140, %v1144
      %v1147 = vshll.u32 %v1035, 16
      %v1149 = vrot.slane %v1147, 1
      %v1150 = vsel %vm529, %v1145, %v1149
      %v1152 = vshrl.u32 %v956, 16
      %v1154 = vshll.u32 %v956, 16
      %v1156 = vrot.slane %v1154, 1
      %v1157 = vor.u32 %v1152, %v1156
      %v1159 = vshll.u32 %v1036, 16
      %v1161 = vrot.slane %v1159, 1
      %v1162 = vsel %vm529, %v1157, %v1161
      %v1164 = vshrl.u32 %v957, 16
      %v1166 = vshll.u32 %v957, 16
      %v1168 = vrot.slane %v1166, 1
      %v1169 = vor.u32 %v1164, %v1168
      %v1171 = vshll.u32 %v1037, 16
      %v1173 = vrot.slane %v1171, 1
      %v1174 = vsel %vm529, %v1169, %v1173
      %v1176 = vshrl.u32 %v958, 16
      %v1178 = vshll.u32 %v958, 16
      %v1180 = vrot.slane %v1178, 1
      %v1181 = vor.u32 %v1176, %v1180
      %v1183 = vshll.u32 %v1038, 16
      %v1185 = vrot.slane %v1183, 1
      %v1186 = vsel %vm529, %v1181, %v1185
      %v1188 = vshrl.u32 %v959, 16
      %v1190 = vshll.u32 %v959, 16
      %v1192 = vrot.slane %v1190, 1
      %v1193 = vor.u32 %v1188, %v1192
      %v1195 = vshll.u32 %v1039, 16
      %v1197 = vrot.slane %v1195, 1
      %v1198 = vsel %vm529, %v1193, %v1197
      %v1200 = vshrl.u32 %v960, 16
      %v1202 = vshll.u32 %v960, 16
      %v1204 = vrot.slane %v1202, 1
      %v1205 = vor.u32 %v1200, %v1204
      %v1207 = vshll.u32 %v1040, 16
      %v1209 = vrot.slane %v1207, 1
      %v1210 = vsel %vm529, %v1205, %v1209
      %v1212 = vshrl.u32 %v961, 16
      %v1214 = vshll.u32 %v961, 16
      %v1216 = vrot.slane %v1214, 1
      %v1217 = vor.u32 %v1212, %v1216
      %v1219 = vshll.u32 %v1041, 16
      %v1221 = vrot.slane %v1219, 1
      %v1222 = vsel %vm529, %v1217, %v1221
      %v1224 = vshrl.u32 %v962, 16
      %v1226 = vshll.u32 %v962, 16
      %v1228 = vrot.slane %v1226, 1
      %v1229 = vor.u32 %v1224, %v1228
      %v1231 = vshll.u32 %v1042, 16
      %v1233 = vrot.slane %v1231, 1
      %v1234 = vsel %vm529, %v1229, %v1233
      %1235 = vrot.lane.b32.xlu0 %v1054, 16
      %v1236 = vpop.permute.xlu0 %1235
      %1237 = vrot.lane.b32.xlu0 %v1066, 16
      %v1238 = vpop.permute.xlu0 %1237
      %1239 = vrot.lane.b32.xlu0 %v1078, 16
      %v1240 = vpop.permute.xlu0 %1239
      %1241 = vrot.lane.b32.xlu0 %v1090, 16
      %v1242 = vpop.permute.xlu0 %1241
      %1243 = vrot.lane.b32.xlu0 %v1102, 16
      %v1244 = vpop.permute.xlu0 %1243
      %1245 = vrot.lane.b32.xlu0 %v1114, 16
      %v1246 = vpop.permute.xlu0 %1245
      %1247 = vrot.lane.b32.xlu0 %v1126, 16
      %v1248 = vpop.permute.xlu0 %1247
      %1249 = vrot.lane.b32.xlu0 %v1138, 16
      %v1250 = vpop.permute.xlu0 %1249
      %1251 = vrot.lane.b32.xlu0 %v1150, 16
      %v1252 = vpop.permute.xlu0 %1251
      %1253 = vrot.lane.b32.xlu0 %v1162, 16
      %v1254 = vpop.permute.xlu0 %1253
      %1255 = vrot.lane.b32.xlu0 %v1174, 16
      %v1256 = vpop.permute.xlu0 %1255
      %1257 = vrot.lane.b32.xlu0 %v1186, 16
      %v1258 = vpop.permute.xlu0 %1257
      %1259 = vrot.lane.b32.xlu0 %v1198, 16
      %v1260 = vpop.permute.xlu0 %1259
      %1261 = vrot.lane.b32.xlu0 %v1210, 16
      %v1262 = vpop.permute.xlu0 %1261
      %1263 = vrot.lane.b32.xlu0 %v1222, 16
      %v1264 = vpop.permute.xlu0 %1263
      %1265 = vrot.lane.b32.xlu0 %v1234, 16
      %v1266 = vpop.permute.xlu0 %1265
      %v1283 = vunpack.c.l.b16 %v317
      %v1284 = vunpack.c.l.b16 %v318
      %v1285 = vunpack.c.l.b16 %v319
      %v1286 = vunpack.c.l.b16 %v320
      %v1287 = vunpack.c.l.b16 %v321
      %v1288 = vunpack.c.l.b16 %v322
      %v1289 = vunpack.c.l.b16 %v323
      %v1290 = vunpack.c.l.b16 %v324
      %v1291 = vunpack.c.l.b16 %v325
      %v1292 = vunpack.c.l.b16 %v326
      %v1293 = vunpack.c.l.b16 %v327
      %v1294 = vunpack.c.l.b16 %v328
      %v1295 = vunpack.c.l.b16 %v329
      %v1296 = vunpack.c.l.b16 %v330
      %v1297 = vunpack.c.l.b16 %v331
      %v1298 = vunpack.c.l.b16 %v332
      %v1299 = vpack.c.b16 %v916, %v1283
      %v1300 = vpack.c.b16 %v918, %v1284
      %v1301 = vpack.c.b16 %v920, %v1285
      %v1302 = vpack.c.b16 %v922, %v1286
      %v1303 = vpack.c.b16 %v924, %v1287
      %v1304 = vpack.c.b16 %v926, %v1288
      %v1305 = vpack.c.b16 %v928, %v1289
      %v1306 = vpack.c.b16 %v930, %v1290
      %v1307 = vpack.c.b16 %v932, %v1291
      %v1308 = vpack.c.b16 %v934, %v1292
      %v1309 = vpack.c.b16 %v936, %v1293
      %v1310 = vpack.c.b16 %v938, %v1294
      %v1311 = vpack.c.b16 %v940, %v1295
      %v1312 = vpack.c.b16 %v942, %v1296
      %v1313 = vpack.c.b16 %v944, %v1297
      %v1314 = vpack.c.b16 %v946, %v1298
      %v1315 = vrot.slane %v1299, 1
      %v1316 = vrot.slane %v1027, 1
      %v1317 = vsel %vm802, %v1315, %v1316
      %v1318 = vrot.slane %v1300, 1
      %v1319 = vrot.slane %v1028, 1
      %v1320 = vsel %vm802, %v1318, %v1319
      %v1321 = vrot.slane %v1301, 1
      %v1322 = vrot.slane %v1029, 1
      %v1323 = vsel %vm802, %v1321, %v1322
      %v1324 = vrot.slane %v1302, 1
      %v1325 = vrot.slane %v1030, 1
      %v1326 = vsel %vm802, %v1324, %v1325
      %v1327 = vrot.slane %v1303, 1
      %v1328 = vrot.slane %v1031, 1
      %v1329 = vsel %vm802, %v1327, %v1328
      %v1330 = vrot.slane %v1304, 1
      %v1331 = vrot.slane %v1032, 1
      %v1332 = vsel %vm802, %v1330, %v1331
      %v1333 = vrot.slane %v1305, 1
      %v1334 = vrot.slane %v1033, 1
      %v1335 = vsel %vm802, %v1333, %v1334
      %v1336 = vrot.slane %v1306, 1
      %v1337 = vrot.slane %v1034, 1
      %v1338 = vsel %vm802, %v1336, %v1337
      %v1339 = vrot.slane %v1307, 1
      %v1340 = vrot.slane %v1035, 1
      %v1341 = vsel %vm802, %v1339, %v1340
      %v1342 = vrot.slane %v1308, 1
      %v1343 = vrot.slane %v1036, 1
      %v1344 = vsel %vm802, %v1342, %v1343
      %v1345 = vrot.slane %v1309, 1
      %v1346 = vrot.slane %v1037, 1
      %v1347 = vsel %vm802, %v1345, %v1346
      %v1348 = vrot.slane %v1310, 1
      %v1349 = vrot.slane %v1038, 1
      %v1350 = vsel %vm802, %v1348, %v1349
      %v1351 = vrot.slane %v1311, 1
      %v1352 = vrot.slane %v1039, 1
      %v1353 = vsel %vm802, %v1351, %v1352
      %v1354 = vrot.slane %v1312, 1
      %v1355 = vrot.slane %v1040, 1
      %v1356 = vsel %vm802, %v1354, %v1355
      %v1357 = vrot.slane %v1313, 1
      %v1358 = vrot.slane %v1041, 1
      %v1359 = vsel %vm802, %v1357, %v1358
      %v1360 = vrot.slane %v1314, 1
      %v1361 = vrot.slane %v1042, 1
      %v1362 = vsel %vm802, %v1360, %v1361
      %1363 = vrot.lane.b32.xlu0 %v1317, 20
      %v1364 = vpop.permute.xlu0 %1363
      %1365 = vrot.lane.b32.xlu0 %v1320, 20
      %v1366 = vpop.permute.xlu0 %1365
      %1367 = vrot.lane.b32.xlu0 %v1323, 20
      %v1368 = vpop.permute.xlu0 %1367
      %1369 = vrot.lane.b32.xlu0 %v1326, 20
      %v1370 = vpop.permute.xlu0 %1369
      %1371 = vrot.lane.b32.xlu0 %v1329, 20
      %v1372 = vpop.permute.xlu0 %1371
      %1373 = vrot.lane.b32.xlu0 %v1332, 20
      %v1374 = vpop.permute.xlu0 %1373
      %1375 = vrot.lane.b32.xlu0 %v1335, 20
      %v1376 = vpop.permute.xlu0 %1375
      %1377 = vrot.lane.b32.xlu0 %v1338, 20
      %v1378 = vpop.permute.xlu0 %1377
      %1379 = vrot.lane.b32.xlu0 %v1341, 20
      %v1380 = vpop.permute.xlu0 %1379
      %1381 = vrot.lane.b32.xlu0 %v1344, 20
      %v1382 = vpop.permute.xlu0 %1381
      %1383 = vrot.lane.b32.xlu0 %v1347, 20
      %v1384 = vpop.permute.xlu0 %1383
      %1385 = vrot.lane.b32.xlu0 %v1350, 20
      %v1386 = vpop.permute.xlu0 %1385
      %1387 = vrot.lane.b32.xlu0 %v1353, 20
      %v1388 = vpop.permute.xlu0 %1387
      %1389 = vrot.lane.b32.xlu0 %v1356, 20
      %v1390 = vpop.permute.xlu0 %1389
      %1391 = vrot.lane.b32.xlu0 %v1359, 20
      %v1392 = vpop.permute.xlu0 %1391
      %1393 = vrot.lane.b32.xlu0 %v1362, 20
      %v1394 = vpop.permute.xlu0 %1393
      %v1427 = vunpack.c.l.b16 %v337
      %v1428 = vunpack.c.l.b16 %v338
      %v1429 = vunpack.c.l.b16 %v339
      %v1430 = vunpack.c.l.b16 %v340
      %v1431 = vunpack.c.l.b16 %v341
      %v1432 = vunpack.c.l.b16 %v342
      %v1433 = vunpack.c.l.b16 %v343
      %v1434 = vunpack.c.l.b16 %v344
      %v1435 = vunpack.c.l.b16 %v345
      %v1436 = vunpack.c.l.b16 %v346
      %v1437 = vunpack.c.l.b16 %v347
      %v1438 = vunpack.c.l.b16 %v348
      %v1439 = vunpack.c.l.b16 %v349
      %v1440 = vunpack.c.l.b16 %v350
      %v1441 = vunpack.c.l.b16 %v351
      %v1442 = vunpack.c.l.b16 %v352
      %v1443 = vunpack.c.l.b16 %v353
      %v1444 = vunpack.c.l.b16 %v354
      %v1445 = vunpack.c.l.b16 %v355
      %v1446 = vunpack.c.l.b16 %v356
      %v1447 = vunpack.c.l.b16 %v357
      %v1448 = vunpack.c.l.b16 %v358
      %v1449 = vunpack.c.l.b16 %v359
      %v1450 = vunpack.c.l.b16 %v360
      %v1451 = vunpack.c.l.b16 %v361
      %v1452 = vunpack.c.l.b16 %v362
      %v1453 = vunpack.c.l.b16 %v363
      %v1454 = vunpack.c.l.b16 %v364
      %v1455 = vunpack.c.l.b16 %v365
      %v1456 = vunpack.c.l.b16 %v366
      %v1457 = vunpack.c.l.b16 %v367
      %v1458 = vunpack.c.l.b16 %v368
      %v1459 = vpack.c.b16 %v1428, %v1427
      %v1460 = vpack.c.b16 %v1430, %v1429
      %v1461 = vpack.c.b16 %v1432, %v1431
      %v1462 = vpack.c.b16 %v1434, %v1433
      %v1463 = vpack.c.b16 %v1436, %v1435
      %v1464 = vpack.c.b16 %v1438, %v1437
      %v1465 = vpack.c.b16 %v1440, %v1439
      %v1466 = vpack.c.b16 %v1442, %v1441
      %v1467 = vpack.c.b16 %v1444, %v1443
      %v1468 = vpack.c.b16 %v1446, %v1445
      %v1469 = vpack.c.b16 %v1448, %v1447
      %v1470 = vpack.c.b16 %v1450, %v1449
      %v1471 = vpack.c.b16 %v1452, %v1451
      %v1472 = vpack.c.b16 %v1454, %v1453
      %v1473 = vpack.c.b16 %v1456, %v1455
      %v1474 = vpack.c.b16 %v1458, %v1457
      %1475 = vrot.lane.b32.xlu0 %v1459, 24
      %v1476 = vpop.permute.xlu0 %1475
      %1477 = vrot.lane.b32.xlu0 %v1460, 24
      %v1478 = vpop.permute.xlu0 %1477
      %1479 = vrot.lane.b32.xlu0 %v1461, 24
      %v1480 = vpop.permute.xlu0 %1479
      %1481 = vrot.lane.b32.xlu0 %v1462, 24
      %v1482 = vpop.permute.xlu0 %1481
      %1483 = vrot.lane.b32.xlu0 %v1463, 24
      %v1484 = vpop.permute.xlu0 %1483
      %1485 = vrot.lane.b32.xlu0 %v1464, 24
      %v1486 = vpop.permute.xlu0 %1485
      %1487 = vrot.lane.b32.xlu0 %v1465, 24
      %v1488 = vpop.permute.xlu0 %1487
      %1489 = vrot.lane.b32.xlu0 %v1466, 24
      %v1490 = vpop.permute.xlu0 %1489
      %1491 = vrot.lane.b32.xlu0 %v1467, 24
      %v1492 = vpop.permute.xlu0 %1491
      %1493 = vrot.lane.b32.xlu0 %v1468, 24
      %v1494 = vpop.permute.xlu0 %1493
      %1495 = vrot.lane.b32.xlu0 %v1469, 24
      %v1496 = vpop.permute.xlu0 %1495
      %1497 = vrot.lane.b32.xlu0 %v1470, 24
      %v1498 = vpop.permute.xlu0 %1497
      %1499 = vrot.lane.b32.xlu0 %v1471, 24
      %v1500 = vpop.permute.xlu0 %1499
      %1501 = vrot.lane.b32.xlu0 %v1472, 24
      %v1502 = vpop.permute.xlu0 %1501
      %1503 = vrot.lane.b32.xlu0 %v1473, 24
      %v1504 = vpop.permute.xlu0 %1503
      %1505 = vrot.lane.b32.xlu0 %v1474, 24
      %v1506 = vpop.permute.xlu0 %1505
      %v1523 = vunpack.c.l.b16 %v369
      %v1524 = vunpack.c.l.b16 %v370
      %v1525 = vunpack.c.l.b16 %v371
      %v1526 = vunpack.c.l.b16 %v372
      %v1527 = vunpack.c.l.b16 %v373
      %v1528 = vunpack.c.l.b16 %v374
      %v1529 = vunpack.c.l.b16 %v375
      %v1530 = vunpack.c.l.b16 %v376
      %v1531 = vunpack.c.l.b16 %v377
      %v1532 = vunpack.c.l.b16 %v378
      %v1533 = vunpack.c.l.b16 %v379
      %v1534 = vunpack.c.l.b16 %v380
      %v1535 = vunpack.c.l.b16 %v381
      %v1536 = vunpack.c.l.b16 %v382
      %v1537 = vunpack.c.l.b16 %v383
      %v1538 = vunpack.c.l.b16 %v384
      %v1539 = vpack.c.b16 %v1523, %v1523
      %v1540 = vpack.c.b16 %v1524, %v1524
      %v1541 = vpack.c.b16 %v1525, %v1525
      %v1542 = vpack.c.b16 %v1526, %v1526
      %v1543 = vpack.c.b16 %v1527, %v1527
      %v1544 = vpack.c.b16 %v1528, %v1528
      %v1545 = vpack.c.b16 %v1529, %v1529
      %v1546 = vpack.c.b16 %v1530, %v1530
      %v1547 = vpack.c.b16 %v1531, %v1531
      %v1548 = vpack.c.b16 %v1532, %v1532
      %v1549 = vpack.c.b16 %v1533, %v1533
      %v1550 = vpack.c.b16 %v1534, %v1534
      %v1551 = vpack.c.b16 %v1535, %v1535
      %v1552 = vpack.c.b16 %v1536, %v1536
      %v1553 = vpack.c.b16 %v1537, %v1537
      %v1554 = vpack.c.b16 %v1538, %v1538
      %v1556 = vshrl.u32 %v1459, 16
      %v1558 = vshll.u32 %v1459, 16
      %v1560 = vrot.slane %v1558, 1
      %v1561 = vor.u32 %v1556, %v1560
      %v1563 = vshll.u32 %v1539, 16
      %v1565 = vrot.slane %v1563, 1
      %v1566 = vsel %vm529, %v1561, %v1565
      %v1568 = vshrl.u32 %v1460, 16
      %v1570 = vshll.u32 %v1460, 16
      %v1572 = vrot.slane %v1570, 1
      %v1573 = vor.u32 %v1568, %v1572
      %v1575 = vshll.u32 %v1540, 16
      %v1577 = vrot.slane %v1575, 1
      %v1578 = vsel %vm529, %v1573, %v1577
      %v1580 = vshrl.u32 %v1461, 16
      %v1582 = vshll.u32 %v1461, 16
      %v1584 = vrot.slane %v1582, 1
      %v1585 = vor.u32 %v1580, %v1584
      %v1587 = vshll.u32 %v1541, 16
      %v1589 = vrot.slane %v1587, 1
      %v1590 = vsel %vm529, %v1585, %v1589
      %v1592 = vshrl.u32 %v1462, 16
      %v1594 = vshll.u32 %v1462, 16
      %v1596 = vrot.slane %v1594, 1
      %v1597 = vor.u32 %v1592, %v1596
      %v1599 = vshll.u32 %v1542, 16
      %v1601 = vrot.slane %v1599, 1
      %v1602 = vsel %vm529, %v1597, %v1601
      %v1604 = vshrl.u32 %v1463, 16
      %v1606 = vshll.u32 %v1463, 16
      %v1608 = vrot.slane %v1606, 1
      %v1609 = vor.u32 %v1604, %v1608
      %v1611 = vshll.u32 %v1543, 16
      %v1613 = vrot.slane %v1611, 1
      %v1614 = vsel %vm529, %v1609, %v1613
      %v1616 = vshrl.u32 %v1464, 16
      %v1618 = vshll.u32 %v1464, 16
      %v1620 = vrot.slane %v1618, 1
      %v1621 = vor.u32 %v1616, %v1620
      %v1623 = vshll.u32 %v1544, 16
      %v1625 = vrot.slane %v1623, 1
      %v1626 = vsel %vm529, %v1621, %v1625
      %v1628 = vshrl.u32 %v1465, 16
      %v1630 = vshll.u32 %v1465, 16
      %v1632 = vrot.slane %v1630, 1
      %v1633 = vor.u32 %v1628, %v1632
      %v1635 = vshll.u32 %v1545, 16
      %v1637 = vrot.slane %v1635, 1
      %v1638 = vsel %vm529, %v1633, %v1637
      %v1640 = vshrl.u32 %v1466, 16
      %v1642 = vshll.u32 %v1466, 16
      %v1644 = vrot.slane %v1642, 1
      %v1645 = vor.u32 %v1640, %v1644
      %v1647 = vshll.u32 %v1546, 16
      %v1649 = vrot.slane %v1647, 1
      %v1650 = vsel %vm529, %v1645, %v1649
      %v1652 = vshrl.u32 %v1467, 16
      %v1654 = vshll.u32 %v1467, 16
      %v1656 = vrot.slane %v1654, 1
      %v1657 = vor.u32 %v1652, %v1656
      %v1659 = vshll.u32 %v1547, 16
      %v1661 = vrot.slane %v1659, 1
      %v1662 = vsel %vm529, %v1657, %v1661
      %v1664 = vshrl.u32 %v1468, 16
      %v1666 = vshll.u32 %v1468, 16
      %v1668 = vrot.slane %v1666, 1
      %v1669 = vor.u32 %v1664, %v1668
      %v1671 = vshll.u32 %v1548, 16
      %v1673 = vrot.slane %v1671, 1
      %v1674 = vsel %vm529, %v1669, %v1673
      %v1676 = vshrl.u32 %v1469, 16
      %v1678 = vshll.u32 %v1469, 16
      %v1680 = vrot.slane %v1678, 1
      %v1681 = vor.u32 %v1676, %v1680
      %v1683 = vshll.u32 %v1549, 16
      %v1685 = vrot.slane %v1683, 1
      %v1686 = vsel %vm529, %v1681, %v1685
      %v1688 = vshrl.u32 %v1470, 16
      %v1690 = vshll.u32 %v1470, 16
      %v1692 = vrot.slane %v1690, 1
      %v1693 = vor.u32 %v1688, %v1692
      %v1695 = vshll.u32 %v1550, 16
      %v1697 = vrot.slane %v1695, 1
      %v1698 = vsel %vm529, %v1693, %v1697
      %v1700 = vshrl.u32 %v1471, 16
      %v1702 = vshll.u32 %v1471, 16
      %v1704 = vrot.slane %v1702, 1
      %v1705 = vor.u32 %v1700, %v1704
      %v1707 = vshll.u32 %v1551, 16
      %v1709 = vrot.slane %v1707, 1
      %v1710 = vsel %vm529, %v1705, %v1709
      %v1712 = vshrl.u32 %v1472, 16
      %v1714 = vshll.u32 %v1472, 16
      %v1716 = vrot.slane %v1714, 1
      %v1717 = vor.u32 %v1712, %v1716
      %v1719 = vshll.u32 %v1552, 16
      %v1721 = vrot.slane %v1719, 1
      %v1722 = vsel %vm529, %v1717, %v1721
      %v1724 = vshrl.u32 %v1473, 16
      %v1726 = vshll.u32 %v1473, 16
      %v1728 = vrot.slane %v1726, 1
      %v1729 = vor.u32 %v1724, %v1728
      %v1731 = vshll.u32 %v1553, 16
      %v1733 = vrot.slane %v1731, 1
      %v1734 = vsel %vm529, %v1729, %v1733
      %v1736 = vshrl.u32 %v1474, 16
      %v1738 = vshll.u32 %v1474, 16
      %v1740 = vrot.slane %v1738, 1
      %v1741 = vor.u32 %v1736, %v1740
      %v1743 = vshll.u32 %v1554, 16
      %v1745 = vrot.slane %v1743, 1
      %v1746 = vsel %vm529, %v1741, %v1745
      %1747 = vrot.lane.b32.xlu0 %v1566, 28
      %v1748 = vpop.permute.xlu0 %1747
      %1749 = vrot.lane.b32.xlu0 %v1578, 28
      %v1750 = vpop.permute.xlu0 %1749
      %1751 = vrot.lane.b32.xlu0 %v1590, 28
      %v1752 = vpop.permute.xlu0 %1751
      %1753 = vrot.lane.b32.xlu0 %v1602, 28
      %v1754 = vpop.permute.xlu0 %1753
      %1755 = vrot.lane.b32.xlu0 %v1614, 28
      %v1756 = vpop.permute.xlu0 %1755
      %1757 = vrot.lane.b32.xlu0 %v1626, 28
      %v1758 = vpop.permute.xlu0 %1757
      %1759 = vrot.lane.b32.xlu0 %v1638, 28
      %v1760 = vpop.permute.xlu0 %1759
      %1761 = vrot.lane.b32.xlu0 %v1650, 28
      %v1762 = vpop.permute.xlu0 %1761
      %1763 = vrot.lane.b32.xlu0 %v1662, 28
      %v1764 = vpop.permute.xlu0 %1763
      %1765 = vrot.lane.b32.xlu0 %v1674, 28
      %v1766 = vpop.permute.xlu0 %1765
      %1767 = vrot.lane.b32.xlu0 %v1686, 28
      %v1768 = vpop.permute.xlu0 %1767
      %1769 = vrot.lane.b32.xlu0 %v1698, 28
      %v1770 = vpop.permute.xlu0 %1769
      %1771 = vrot.lane.b32.xlu0 %v1710, 28
      %v1772 = vpop.permute.xlu0 %1771
      %1773 = vrot.lane.b32.xlu0 %v1722, 28
      %v1774 = vpop.permute.xlu0 %1773
      %1775 = vrot.lane.b32.xlu0 %v1734, 28
      %v1776 = vpop.permute.xlu0 %1775
      %1777 = vrot.lane.b32.xlu0 %v1746, 28
      %v1778 = vpop.permute.xlu0 %1777
      %v1795 = vunpack.c.l.b16 %v385
      %v1796 = vunpack.c.l.b16 %v386
      %v1797 = vunpack.c.l.b16 %v387
      %v1798 = vunpack.c.l.b16 %v388
      %v1799 = vunpack.c.l.b16 %v389
      %v1800 = vunpack.c.l.b16 %v390
      %v1801 = vunpack.c.l.b16 %v391
      %v1802 = vunpack.c.l.b16 %v392
      %v1803 = vunpack.c.l.b16 %v393
      %v1804 = vunpack.c.l.b16 %v394
      %v1805 = vunpack.c.l.b16 %v395
      %v1806 = vunpack.c.l.b16 %v396
      %v1807 = vunpack.c.l.b16 %v397
      %v1808 = vunpack.c.l.b16 %v398
      %v1809 = vunpack.c.l.b16 %v399
      %v1810 = vunpack.c.l.b16 %v400
      %v1811 = vpack.c.b16 %v1428, %v1795
      %v1812 = vpack.c.b16 %v1430, %v1796
      %v1813 = vpack.c.b16 %v1432, %v1797
      %v1814 = vpack.c.b16 %v1434, %v1798
      %v1815 = vpack.c.b16 %v1436, %v1799
      %v1816 = vpack.c.b16 %v1438, %v1800
      %v1817 = vpack.c.b16 %v1440, %v1801
      %v1818 = vpack.c.b16 %v1442, %v1802
      %v1819 = vpack.c.b16 %v1444, %v1803
      %v1820 = vpack.c.b16 %v1446, %v1804
      %v1821 = vpack.c.b16 %v1448, %v1805
      %v1822 = vpack.c.b16 %v1450, %v1806
      %v1823 = vpack.c.b16 %v1452, %v1807
      %v1824 = vpack.c.b16 %v1454, %v1808
      %v1825 = vpack.c.b16 %v1456, %v1809
      %v1826 = vpack.c.b16 %v1458, %v1810
      %v1827 = vrot.slane %v1811, 1
      %v1828 = vrot.slane %v1539, 1
      %v1829 = vsel %vm802, %v1827, %v1828
      %v1830 = vrot.slane %v1812, 1
      %v1831 = vrot.slane %v1540, 1
      %v1832 = vsel %vm802, %v1830, %v1831
      %v1833 = vrot.slane %v1813, 1
      %v1834 = vrot.slane %v1541, 1
      %v1835 = vsel %vm802, %v1833, %v1834
      %v1836 = vrot.slane %v1814, 1
      %v1837 = vrot.slane %v1542, 1
      %v1838 = vsel %vm802, %v1836, %v1837
      %v1839 = vrot.slane %v1815, 1
      %v1840 = vrot.slane %v1543, 1
      %v1841 = vsel %vm802, %v1839, %v1840
      %v1842 = vrot.slane %v1816, 1
      %v1843 = vrot.slane %v1544, 1
      %v1844 = vsel %vm802, %v1842, %v1843
      %v1845 = vrot.slane %v1817, 1
      %v1846 = vrot.slane %v1545, 1
      %v1847 = vsel %vm802, %v1845, %v1846
      %v1848 = vrot.slane %v1818, 1
      %v1849 = vrot.slane %v1546, 1
      %v1850 = vsel %vm802, %v1848, %v1849
      %v1851 = vrot.slane %v1819, 1
      %v1852 = vrot.slane %v1547, 1
      %v1853 = vsel %vm802, %v1851, %v1852
      %v1854 = vrot.slane %v1820, 1
      %v1855 = vrot.slane %v1548, 1
      %v1856 = vsel %vm802, %v1854, %v1855
      %v1857 = vrot.slane %v1821, 1
      %v1858 = vrot.slane %v1549, 1
      %v1859 = vsel %vm802, %v1857, %v1858
      %v1860 = vrot.slane %v1822, 1
      %v1861 = vrot.slane %v1550, 1
      %v1862 = vsel %vm802, %v1860, %v1861
      %v1863 = vrot.slane %v1823, 1
      %v1864 = vrot.slane %v1551, 1
      %v1865 = vsel %vm802, %v1863, %v1864
      %v1866 = vrot.slane %v1824, 1
      %v1867 = vrot.slane %v1552, 1
      %v1868 = vsel %vm802, %v1866, %v1867
      %v1869 = vrot.slane %v1825, 1
      %v1870 = vrot.slane %v1553, 1
      %v1871 = vsel %vm802, %v1869, %v1870
      %v1872 = vrot.slane %v1826, 1
      %v1873 = vrot.slane %v1554, 1
      %v1874 = vsel %vm802, %v1872, %v1873
      %1875 = vrot.lane.b32.xlu0 %v1829, 32
      %v1876 = vpop.permute.xlu0 %1875
      %1877 = vrot.lane.b32.xlu0 %v1832, 32
      %v1878 = vpop.permute.xlu0 %1877
      %1879 = vrot.lane.b32.xlu0 %v1835, 32
      %v1880 = vpop.permute.xlu0 %1879
      %1881 = vrot.lane.b32.xlu0 %v1838, 32
      %v1882 = vpop.permute.xlu0 %1881
      %1883 = vrot.lane.b32.xlu0 %v1841, 32
      %v1884 = vpop.permute.xlu0 %1883
      %1885 = vrot.lane.b32.xlu0 %v1844, 32
      %v1886 = vpop.permute.xlu0 %1885
      %1887 = vrot.lane.b32.xlu0 %v1847, 32
      %v1888 = vpop.permute.xlu0 %1887
      %1889 = vrot.lane.b32.xlu0 %v1850, 32
      %v1890 = vpop.permute.xlu0 %1889
      %1891 = vrot.lane.b32.xlu0 %v1853, 32
      %v1892 = vpop.permute.xlu0 %1891
      %1893 = vrot.lane.b32.xlu0 %v1856, 32
      %v1894 = vpop.permute.xlu0 %1893
      %1895 = vrot.lane.b32.xlu0 %v1859, 32
      %v1896 = vpop.permute.xlu0 %1895
      %1897 = vrot.lane.b32.xlu0 %v1862, 32
      %v1898 = vpop.permute.xlu0 %1897
      %1899 = vrot.lane.b32.xlu0 %v1865, 32
      %v1900 = vpop.permute.xlu0 %1899
      %1901 = vrot.lane.b32.xlu0 %v1868, 32
      %v1902 = vpop.permute.xlu0 %1901
      %1903 = vrot.lane.b32.xlu0 %v1871, 32
      %v1904 = vpop.permute.xlu0 %1903
      %1905 = vrot.lane.b32.xlu0 %v1874, 32
      %v1906 = vpop.permute.xlu0 %1905
      %vm1907 = vcmask 31744
      %v1909 = vsel %vm1907, %v465, %v723
      %v1911 = vsel %vm1907, %v466, %v725
      %v1913 = vsel %vm1907, %v467, %v727
      %v1915 = vsel %vm1907, %v468, %v729
      %v1917 = vsel %vm1907, %v469, %v731
      %v1919 = vsel %vm1907, %v470, %v733
      %v1921 = vsel %vm1907, %v471, %v735
      %v1923 = vsel %vm1907, %v472, %v737
      %v1925 = vsel %vm1907, %v473, %v739
      %v1927 = vsel %vm1907, %v474, %v741
      %v1929 = vsel %vm1907, %v475, %v743
      %v1931 = vsel %vm1907, %v476, %v745
      %v1933 = vsel %vm1907, %v477, %v747
      %v1935 = vsel %vm1907, %v478, %v749
      %v1937 = vsel %vm1907, %v479, %v751
      %v1939 = vsel %vm1907, %v480, %v753
      %vm1940 = vcmask 64512
      %v1942 = vsel %vm1940, %v1909, %v852
      %v1944 = vsel %vm1940, %v1911, %v854
      %v1946 = vsel %vm1940, %v1913, %v856
      %v1948 = vsel %vm1940, %v1915, %v858
      %v1950 = vsel %vm1940, %v1917, %v860
      %v1952 = vsel %vm1940, %v1919, %v862
      %v1954 = vsel %vm1940, %v1921, %v864
      %v1956 = vsel %vm1940, %v1923, %v866
      %v1958 = vsel %vm1940, %v1925, %v868
      %v1960 = vsel %vm1940, %v1927, %v870
      %v1962 = vsel %vm1940, %v1929, %v872
      %v1964 = vsel %vm1940, %v1931, %v874
      %v1966 = vsel %vm1940, %v1933, %v876
      %v1968 = vsel %vm1940, %v1935, %v878
      %v1970 = vsel %vm1940, %v1937, %v880
      %v1972 = vsel %vm1940, %v1939, %v882
      %vm1973 = vcmask 97280
      %v1975 = vsel %vm1973, %v1942, %v964
      %v1977 = vsel %vm1973, %v1944, %v966
      %v1979 = vsel %vm1973, %v1946, %v968
      %v1981 = vsel %vm1973, %v1948, %v970
      %v1983 = vsel %vm1973, %v1950, %v972
      %v1985 = vsel %vm1973, %v1952, %v974
      %v1987 = vsel %vm1973, %v1954, %v976
      %v1989 = vsel %vm1973, %v1956, %v978
      %v1991 = vsel %vm1973, %v1958, %v980
      %v1993 = vsel %vm1973, %v1960, %v982
      %v1995 = vsel %vm1973, %v1962, %v984
      %v1997 = vsel %vm1973, %v1964, %v986
      %v1999 = vsel %vm1973, %v1966, %v988
      %v2001 = vsel %vm1973, %v1968, %v990
      %v2003 = vsel %vm1973, %v1970, %v992
      %v2005 = vsel %vm1973, %v1972, %v994
      %vm2006 = vcmask 130048
      %v2008 = vsel %vm2006, %v1975, %v1236
      %v2010 = vsel %vm2006, %v1977, %v1238
      %v2012 = vsel %vm2006, %v1979, %v1240
      %v2014 = vsel %vm2006, %v1981, %v1242
      %v2016 = vsel %vm2006, %v1983, %v1244
      %v2018 = vsel %vm2006, %v1985, %v1246
      %v2020 = vsel %vm2006, %v1987, %v1248
      %v2022 = vsel %vm2006, %v1989, %v1250
      %v2024 = vsel %vm2006, %v1991, %v1252
      %v2026 = vsel %vm2006, %v1993, %v1254
      %v2028 = vsel %vm2006, %v1995, %v1256
      %v2030 = vsel %vm2006, %v1997, %v1258
      %v2032 = vsel %vm2006, %v1999, %v1260
      %v2034 = vsel %vm2006, %v2001, %v1262
      %v2036 = vsel %vm2006, %v2003, %v1264
      %v2038 = vsel %vm2006, %v2005, %v1266
      %vm2039 = vcmask 162816
      %v2041 = vsel %vm2039, %v2008, %v1364
      %v2043 = vsel %vm2039, %v2010, %v1366
      %v2045 = vsel %vm2039, %v2012, %v1368
      %v2047 = vsel %vm2039, %v2014, %v1370
      %v2049 = vsel %vm2039, %v2016, %v1372
      %v2051 = vsel %vm2039, %v2018, %v1374
      %v2053 = vsel %vm2039, %v2020, %v1376
      %v2055 = vsel %vm2039, %v2022, %v1378
      %v2057 = vsel %vm2039, %v2024, %v1380
      %v2059 = vsel %vm2039, %v2026, %v1382
      %v2061 = vsel %vm2039, %v2028, %v1384
      %v2063 = vsel %vm2039, %v2030, %v1386
      %v2065 = vsel %vm2039, %v2032, %v1388
      %v2067 = vsel %vm2039, %v2034, %v1390
      %v2069 = vsel %vm2039, %v2036, %v1392
      %v2071 = vsel %vm2039, %v2038, %v1394
      %vm2072 = vcmask 195584
      %v2074 = vsel %vm2072, %v2041, %v1476
      %v2076 = vsel %vm2072, %v2043, %v1478
      %v2078 = vsel %vm2072, %v2045, %v1480
      %v2080 = vsel %vm2072, %v2047, %v1482
      %v2082 = vsel %vm2072, %v2049, %v1484
      %v2084 = vsel %vm2072, %v2051, %v1486
      %v2086 = vsel %vm2072, %v2053, %v1488
      %v2088 = vsel %vm2072, %v2055, %v1490
      %v2090 = vsel %vm2072, %v2057, %v1492
      %v2092 = vsel %vm2072, %v2059, %v1494
      %v2094 = vsel %vm2072, %v2061, %v1496
      %v2096 = vsel %vm2072, %v2063, %v1498
      %v2098 = vsel %vm2072, %v2065, %v1500
      %v2100 = vsel %vm2072, %v2067, %v1502
      %v2102 = vsel %vm2072, %v2069, %v1504
      %v2104 = vsel %vm2072, %v2071, %v1506
      %vm2105 = vcmask 228352
      %v2107 = vsel %vm2105, %v2074, %v1748
      %v2109 = vsel %vm2105, %v2076, %v1750
      %v2111 = vsel %vm2105, %v2078, %v1752
      %v2113 = vsel %vm2105, %v2080, %v1754
      %v2115 = vsel %vm2105, %v2082, %v1756
      %v2117 = vsel %vm2105, %v2084, %v1758
      %v2119 = vsel %vm2105, %v2086, %v1760
      %v2121 = vsel %vm2105, %v2088, %v1762
      %v2123 = vsel %vm2105, %v2090, %v1764
      %v2125 = vsel %vm2105, %v2092, %v1766
      %v2127 = vsel %vm2105, %v2094, %v1768
      %v2129 = vsel %vm2105, %v2096, %v1770
      %v2131 = vsel %vm2105, %v2098, %v1772
      %v2133 = vsel %vm2105, %v2100, %v1774
      %v2135 = vsel %vm2105, %v2102, %v1776
      %v2137 = vsel %vm2105, %v2104, %v1778
      %vm2138 = vcmask 261120
      %v2140 = vsel %vm2138, %v2107, %v1876
      %v2142 = vsel %vm2138, %v2109, %v1878
      %v2144 = vsel %vm2138, %v2111, %v1880
      %v2146 = vsel %vm2138, %v2113, %v1882
      %v2148 = vsel %vm2138, %v2115, %v1884
      %v2150 = vsel %vm2138, %v2117, %v1886
      %v2152 = vsel %vm2138, %v2119, %v1888
      %v2154 = vsel %vm2138, %v2121, %v1890
      %v2156 = vsel %vm2138, %v2123, %v1892
      %v2158 = vsel %vm2138, %v2125, %v1894
      %v2160 = vsel %vm2138, %v2127, %v1896
      %v2162 = vsel %vm2138, %v2129, %v1898
      %v2164 = vsel %vm2138, %v2131, %v1900
      %v2166 = vsel %vm2138, %v2133, %v1902
      %v2168 = vsel %vm2138, %v2135, %v1904
      %v2170 = vsel %vm2138, %v2137, %v1906
      %v2171 = vld [vmem:[%s1] sm:$0xf]
      %v2172 = vld [vmem:[%s1 + $0x4] sm:$0xf]
      %v2173 = vld [vmem:[%s1 + $0x8] sm:$0xf]
      %v2174 = vld [vmem:[%s1 + $0xc] sm:$0xf]
      %v2175 = vld [vmem:[%s1 + $0x10] sm:$0x3]
      %v2176 = vld [vmem:[%s2] sm:$0x1]
      %v2178 = vperm.slane %v2176, 0
      %v2185 = vunpack.c.l.b16 %v2171
      %v2186 = vunpack.c.l.b16 %v2172
      %v2187 = vunpack.c.l.b16 %v2173
      %v2188 = vunpack.c.l.b16 %v2174
      %v2189 = vunpack.c.l.b16 %v2175
      %v2190 = vpack.c.b16 %v2186, %v2185
      %v2191 = vpack.c.b16 %v2188, %v2187
      %v2192 = vpack.c.b16 %v2189, %v2189
      %vm2195 = vcmask 293888
      %v2196 = vsel %vm2195, %v2140, 0
      %v2198 = vsel %vm2195, %v2142, 0
      %v2200 = vsel %vm2195, %v2144, 0
      %v2202 = vsel %vm2195, %v2146, 0
      %v2204 = vsel %vm2195, %v2148, 0
      %v2206 = vsel %vm2195, %v2150, 0
      %v2208 = vsel %vm2195, %v2152, 0
      %v2210 = vsel %vm2195, %v2154, 0
      %v2212 = vsel %vm2195, %v2156, 0
      %v2214 = vsel %vm2195, %v2158, 0
      %v2216 = vsel %vm2195, %v2160, 0
      %v2218 = vsel %vm2195, %v2162, 0
      %v2220 = vsel %vm2195, %v2164, 0
      %v2222 = vsel %vm2195, %v2166, 0
      %v2224 = vsel %vm2195, %v2168, 0
      %v2226 = vsel %vm2195, %v2170, 0
      %vm2228 = vcmask 1041408
      %v2230 = vsel %vm2228, %v2192, 0
      %2232 = vmatpush.bf16.msra.mxu0 0
      %2233 = vmatpush.bf16.msra.mxu0 0
      %2234 = vmatpush.bf16.msra.mxu0 0
      %2235 = vmatpush.bf16.msra.mxu0 0
      %2236 = vmatpush.bf16.msra.mxu0 0
      %2237 = vmatpush.bf16.msra.mxu0 %v2230
      %2238 = vmatpush.bf16.msra.mxu0 %v2191
      %2239 = vmatpush.bf16.msra.mxu0 %v2190
      %2240 = vmatmul.bf16.gmra.mxu0 %v2196
      %v2241 = vpop.f32.mrf.mxu0
      %v2242 = vadd.f32 %v2178, %v2241
      %v2243 = vpop.f32.mrf.mxu0
      %v2244 = vadd.f32 %v2178, %v2243
      %2245 = vmatmul.bf16.gmra.mxu0 %v2198
      %v2246 = vpop.f32.mrf.mxu0
      %v2247 = vadd.f32 %v2178, %v2246
      %v2248 = vpop.f32.mrf.mxu0
      %v2249 = vadd.f32 %v2178, %v2248
      %2250 = vmatmul.bf16.gmra.mxu0 %v2200
      %v2251 = vpop.f32.mrf.mxu0
      %v2252 = vadd.f32 %v2178, %v2251
      %v2253 = vpop.f32.mrf.mxu0
      %v2254 = vadd.f32 %v2178, %v2253
      %2255 = vmatmul.bf16.gmra.mxu0 %v2202
      %v2256 = vpop.f32.mrf.mxu0
      %v2257 = vadd.f32 %v2178, %v2256
      %v2258 = vpop.f32.mrf.mxu0
      %v2259 = vadd.f32 %v2178, %v2258
      %2260 = vmatmul.bf16.gmra.mxu0 %v2204
      %v2261 = vpop.f32.mrf.mxu0
      %v2262 = vadd.f32 %v2178, %v2261
      %v2263 = vpop.f32.mrf.mxu0
      %v2264 = vadd.f32 %v2178, %v2263
      %2265 = vmatmul.bf16.gmra.mxu0 %v2206
      %v2266 = vpop.f32.mrf.mxu0
      %v2267 = vadd.f32 %v2178, %v2266
      %v2268 = vpop.f32.mrf.mxu0
      %v2269 = vadd.f32 %v2178, %v2268
      %2270 = vmatmul.bf16.gmra.mxu0 %v2208
      %v2271 = vpop.f32.mrf.mxu0
      %v2272 = vadd.f32 %v2178, %v2271
      %v2273 = vpop.f32.mrf.mxu0
      %v2274 = vadd.f32 %v2178, %v2273
      %2275 = vmatmul.bf16.gmra.mxu0 %v2210
      %v2276 = vpop.f32.mrf.mxu0
      %v2277 = vadd.f32 %v2178, %v2276
      %v2278 = vpop.f32.mrf.mxu0
      %v2279 = vadd.f32 %v2178, %v2278
      %2280 = vmatmul.bf16.gmra.mxu0 %v2212
      %v2281 = vpop.f32.mrf.mxu0
      %v2282 = vadd.f32 %v2178, %v2281
      %v2283 = vpop.f32.mrf.mxu0
      %v2284 = vadd.f32 %v2178, %v2283
      %2285 = vmatmul.bf16.gmra.mxu0 %v2214
      %v2286 = vpop.f32.mrf.mxu0
      %v2287 = vadd.f32 %v2178, %v2286
      %v2288 = vpop.f32.mrf.mxu0
      %v2289 = vadd.f32 %v2178, %v2288
      %2290 = vmatmul.bf16.gmra.mxu0 %v2216
      %v2291 = vpop.f32.mrf.mxu0
      %v2292 = vadd.f32 %v2178, %v2291
      %v2293 = vpop.f32.mrf.mxu0
      %v2294 = vadd.f32 %v2178, %v2293
      %2295 = vmatmul.bf16.gmra.mxu0 %v2218
      %v2296 = vpop.f32.mrf.mxu0
      %v2297 = vadd.f32 %v2178, %v2296
      %v2298 = vpop.f32.mrf.mxu0
      %v2299 = vadd.f32 %v2178, %v2298
      %2300 = vmatmul.bf16.gmra.mxu0 %v2220
      %v2301 = vpop.f32.mrf.mxu0
      %v2302 = vadd.f32 %v2178, %v2301
      %v2303 = vpop.f32.mrf.mxu0
      %v2304 = vadd.f32 %v2178, %v2303
      %2305 = vmatmul.bf16.gmra.mxu0 %v2222
      %v2306 = vpop.f32.mrf.mxu0
      %v2307 = vadd.f32 %v2178, %v2306
      %v2308 = vpop.f32.mrf.mxu0
      %v2309 = vadd.f32 %v2178, %v2308
      %2310 = vmatmul.bf16.gmra.mxu0 %v2224
      %v2311 = vpop.f32.mrf.mxu0
      %v2312 = vadd.f32 %v2178, %v2311
      %v2313 = vpop.f32.mrf.mxu0
      %v2314 = vadd.f32 %v2178, %v2313
      %2315 = vmatmul.bf16.gmra.mxu0 %v2226
      %v2316 = vpop.f32.mrf.mxu0
      %v2317 = vadd.f32 %v2178, %v2316
      %v2318 = vpop.f32.mrf.mxu0
      %v2319 = vadd.f32 %v2178, %v2318
      %2320 = vdwg.mxu0
      %v2321 = vmax.f32 %v2242, 0.0
      %v2322 = vmax.f32 %v2244, 0.0
      %v2323 = vmax.f32 %v2247, 0.0
      %v2324 = vmax.f32 %v2249, 0.0
      %v2325 = vmax.f32 %v2252, 0.0
      %v2326 = vmax.f32 %v2254, 0.0
      %v2327 = vmax.f32 %v2257, 0.0
      %v2328 = vmax.f32 %v2259, 0.0
      %v2329 = vmax.f32 %v2262, 0.0
      %v2330 = vmax.f32 %v2264, 0.0
      %v2331 = vmax.f32 %v2267, 0.0
      %v2332 = vmax.f32 %v2269, 0.0
      %v2333 = vmax.f32 %v2272, 0.0
      %v2334 = vmax.f32 %v2274, 0.0
      %v2335 = vmax.f32 %v2277, 0.0
      %v2336 = vmax.f32 %v2279, 0.0
      %v2337 = vmax.f32 %v2282, 0.0
      %v2338 = vmax.f32 %v2284, 0.0
      %v2339 = vmax.f32 %v2287, 0.0
      %v2340 = vmax.f32 %v2289, 0.0
      %v2341 = vmax.f32 %v2292, 0.0
      %v2342 = vmax.f32 %v2294, 0.0
      %v2343 = vmax.f32 %v2297, 0.0
      %v2344 = vmax.f32 %v2299, 0.0
      %v2345 = vmax.f32 %v2302, 0.0
      %v2346 = vmax.f32 %v2304, 0.0
      %v2347 = vmax.f32 %v2307, 0.0
      %v2348 = vmax.f32 %v2309, 0.0
      %v2349 = vmax.f32 %v2312, 0.0
      %v2350 = vmax.f32 %v2314, 0.0
      %v2351 = vmax.f32 %v2317, 0.0
      %v2352 = vmax.f32 %v2319, 0.0
      %v2353 = vpack.c.bf16 %v2321, %v2321
      %v2354 = vpack.c.bf16 %v2322, %v2322
      %v2355 = vpack.c.bf16 %v2323, %v2323
      %v2356 = vpack.c.bf16 %v2324, %v2324
      %v2357 = vpack.c.bf16 %v2325, %v2325
      %v2358 = vpack.c.bf16 %v2326, %v2326
      %v2359 = vpack.c.bf16 %v2327, %v2327
      %v2360 = vpack.c.bf16 %v2328, %v2328
      %v2361 = vpack.c.bf16 %v2329, %v2329
      %v2362 = vpack.c.bf16 %v2330, %v2330
      %v2363 = vpack.c.bf16 %v2331, %v2331
      %v2364 = vpack.c.bf16 %v2332, %v2332
      %v2365 = vpack.c.bf16 %v2333, %v2333
      %v2366 = vpack.c.bf16 %v2334, %v2334
      %v2367 = vpack.c.bf16 %v2335, %v2335
      %v2368 = vpack.c.bf16 %v2336, %v2336
      %v2369 = vpack.c.bf16 %v2337, %v2337
      %v2370 = vpack.c.bf16 %v2338, %v2338
      %v2371 = vpack.c.bf16 %v2339, %v2339
      %v2372 = vpack.c.bf16 %v2340, %v2340
      %v2373 = vpack.c.bf16 %v2341, %v2341
      %v2374 = vpack.c.bf16 %v2342, %v2342
      %v2375 = vpack.c.bf16 %v2343, %v2343
      %v2376 = vpack.c.bf16 %v2344, %v2344
      %v2377 = vpack.c.bf16 %v2345, %v2345
      %v2378 = vpack.c.bf16 %v2346, %v2346
      %v2379 = vpack.c.bf16 %v2347, %v2347
      %v2380 = vpack.c.bf16 %v2348, %v2348
      %v2381 = vpack.c.bf16 %v2349, %v2349
      %v2382 = vpack.c.bf16 %v2350, %v2350
      %v2383 = vpack.c.bf16 %v2351, %v2351
      %v2384 = vpack.c.bf16 %v2352, %v2352
      %2385 = vst [vmem:[%s194] sm:$0xf] %v2353
      %2386 = vst [vmem:[%s194 + $0x4] sm:$0xf] %v2354
      %2387 = vst [vmem:[%s194 + $0x8] sm:$0xf] %v2355
      %2388 = vst [vmem:[%s194 + $0xc] sm:$0xf] %v2356
      %2389 = vst [vmem:[%s194 + $0x10] sm:$0xf] %v2357
      %2390 = vst [vmem:[%s194 + $0x14] sm:$0xf] %v2358
      %2391 = vst [vmem:[%s194 + $0x18] sm:$0xf] %v2359
      %2392 = vst [vmem:[%s194 + $0x1c] sm:$0xf] %v2360
      %2393 = vst [vmem:[%s194 + $0x20] sm:$0xf] %v2361
      %2394 = vst [vmem:[%s194 + $0x24] sm:$0xf] %v2362
      %2395 = vst [vmem:[%s194 + $0x28] sm:$0xf] %v2363
      %2396 = vst [vmem:[%s194 + $0x2c] sm:$0xf] %v2364
      %2397 = vst [vmem:[%s194 + $0x30] sm:$0xf] %v2365
      %2398 = vst [vmem:[%s194 + $0x34] sm:$0xf] %v2366
      %2399 = vst [vmem:[%s194 + $0x38] sm:$0xf] %v2367
      %2400 = vst [vmem:[%s194 + $0x3c] sm:$0xf] %v2368
      %2401 = vst [vmem:[%s194 + $0x40] sm:$0xf] %v2369
      %2402 = vst [vmem:[%s194 + $0x44] sm:$0xf] %v2370
      %2403 = vst [vmem:[%s194 + $0x48] sm:$0xf] %v2371
      %2404 = vst [vmem:[%s194 + $0x4c] sm:$0xf] %v2372
      %2405 = vst [vmem:[%s194 + $0x50] sm:$0xf] %v2373
      %2406 = vst [vmem:[%s194 + $0x54] sm:$0xf] %v2374
      %2407 = vst [vmem:[%s194 + $0x58] sm:$0xf] %v2375
      %2408 = vst [vmem:[%s194 + $0x5c] sm:$0xf] %v2376
      %2409 = vst [vmem:[%s194 + $0x60] sm:$0xf] %v2377
      %2410 = vst [vmem:[%s194 + $0x64] sm:$0xf] %v2378
      %2411 = vst [vmem:[%s194 + $0x68] sm:$0xf] %v2379
      %2412 = vst [vmem:[%s194 + $0x6c] sm:$0xf] %v2380
      %2413 = vst [vmem:[%s194 + $0x70] sm:$0xf] %v2381
      %2414 = vst [vmem:[%s194 + $0x74] sm:$0xf] %v2382
      %2415 = vst [vmem:[%s194 + $0x78] sm:$0xf] %v2383
      %2416 = vst [vmem:[%s194 + $0x7c] sm:$0xf] %v2384
      %s2417 = smul.u32 16, %s19
      %p2418 = scmp.lt.s32.totalorder %s18, 1
      %s2419 = scalar_select %p2418, %s18, 1
      %p2420 = scmp.lt.s32.totalorder %s2417, 15
      %s2421 = scalar_select %p2420, %s2417, 15
      %s2422 = smul.addr %s2421, 2
      %s2423 = smul.addr %s2419, 32
      %s2424 = sadd.s32 %s2422, %s2423
      %s2425 = smul.addr %s2424, 4
      %s2426 = scalar_lea.vmem %s3, %s2425
      // Predicated region
      $region33: #{conv2d_block_forward.1} parent=31 // pred_check
        %p2427 = pneg %p114
      $region34: #{conv2d_block_forward.1} parent=31 // pred_check_branch
        %2429 = sbr.rel (%p2427) target = $region36
      $region35: #{conv2d_block_forward.1} parent=31 // pred_region
        %s2430 = smul.u32 16, %s19
      $region36: #{conv2d_block_forward.1} parent=31 // pred_fallthru
        _
    $region32: #{conv2d_block_forward.1} parent=5 // pred_fallthru
      _
    %p2431 = scmp.le.s32.totalorder 2, %s9
    // Predicated region
    $region37: #{conv2d_block_forward.1} parent=5 // pred_check
      %p2432 = pneg %p2431
    $region38: #{conv2d_block_forward.1} parent=5 // pred_check_branch
      %2434 = sbr.rel (%p2432) target = $region40
    $region39: #{conv2d_block_forward.1} parent=5 // pred_region
      %s2435 = ssub.s32 %s9, 2
      // Predicated region
      $region41: #{conv2d_block_forward.1} parent=39 // pred_check
        %p2436 = pneg %p120
      $region42: #{conv2d_block_forward.1} parent=39 // pred_check_branch
        %2438 = sbr.rel (%p2436) target = $region44
      $region43: #{conv2d_block_forward.1} parent=39 // pred_region
        %s2439 = smul.u32 16, %s21
        %p2440 = scmp.lt.s32.totalorder %s20, 1
        %s2441 = scalar_select %p2440, %s20, 1
        %p2442 = scmp.lt.s32.totalorder %s2439, 15
        %s2443 = scalar_select %p2442, %s2439, 15
        %s2444 = smul.addr %s2443, 2
        %s2445 = smul.addr %s2441, 32
        %s2446 = sadd.s32 %s2444, %s2445
        %s2447 = smul.addr %s2446, 4
        %s2448 = scalar_lea.vmem %s3, %s2447
      $region44: #{conv2d_block_forward.1} parent=39 // pred_fallthru
        _
    $region40: #{conv2d_block_forward.1} parent=5 // pred_fallthru
      _
  $region6: #{conv2d_block_forward.1} parent=0 // loop_footer
    %s13 = sadd.s32 1, %s9
  $region7: #{conv2d_block_forward.1} parent=0 // loop_footer_branch
    %8 = sbr.rel target = $region3
  $region8: #{conv2d_block_forward.1} parent=0 // loop_exit
    _

// kernel: conv2d_block_forward.1
$region0: #{conv2d_block_forward.1}
  #allocation0 [shape = 'u32[]', space=smem, size = 0x4, offset = 0x4, fixed_abs, tag = 'smem constant byte address 0x4 - core index']
  #allocation1 [shape = 'u32[72,128]{1,0:T(1,128)}', space=vmem, size = 0x9000, scoped, tag = 'internal scratch']
  %s0 = inlined_call_operand.vmem [shape: bf16[2,18,18,4], index: 0, kind: input, shape index: {}]
  %s1 = inlined_call_operand.vmem [shape: bf16[9,4,128], index: 1, kind: input, shape index: {}]
  %s2 = inlined_call_operand.vmem [shape: f32[1,128], index: 2, kind: input, shape index: {}]
  %s3 = inlined_call_operand.vmem [shape: bf16[2,16,16,128], index: 3, kind: output, shape index: {}]
  %s4 = sld [smem:[#allocation0]]
  $region45: #{conv2d_block_forward.1} parent=0
    _
  %s6 = ssub.s32 1, %s4
  %s7 = scalar_select 0, %s6, %s4
  loop: start=0, step=1, limit=4
  $region2: #{conv2d_block_forward.1} parent=0 // loop_pre_header
    _
  $region3: #{conv2d_block_forward.1} parent=0 // loop_header
    %s9 = sphi 0, %s13
    %p10 = scmp.ge.s32.totalorder %s9, 4
    %s16 = sphi 0, %s28
    %s17 = sphi 0, %s24
    %s18 = sphi 0, %s16
    %s19 = sphi 0, %s17
    %s20 = sphi 0, %s18
    %s21 = sphi 0, %s19
    %s31 = sphi 0, %s33
    %s34 = sphi 0, %s31
    %s35 = sphi 0, %s34
    %s51 = sphi 0, %s35
    %s55 = sphi 0, %s55
    %s57 = sphi 0, %s55
    %s58 = sphi 0, %s57
    %s72 = sphi 0, %s58
    %s76 = sphi 0, %s76
    %s78 = sphi 0, %s76
    %s79 = sphi 0, %s78
    %s93 = sphi 0, %s79
    %s101 = sphi 0, %s103
    %s104 = sphi 0, %s101
    %s105 = sphi 0, %s104
    %s121 = sphi 0, %s105
  $region4: #{conv2d_block_forward.1} parent=0 // loop_header_branch
    %12 = sbr.rel (%p10) target = $region8
  $region5: #{conv2d_block_forward.1} parent=0 // loop_body
    %s14 = ssub.s32 %s9, 1
    %s15 = ssub.s32 %s9, 2
    %s22 = sadd.s32 1, %s17
    %p23 = scmp.ge.s32.totalorder %s22, 1
    %s24 = scalar_select %p23, 0, %s22
    %s25 = sadd.s32 1, %s16
    %s26 = scalar_select %p23, %s25, %s16
    %p27 = scmp.ge.s32.totalorder %s26, 2
    %s28 = scalar_select %p27, 0, %s26
    %s29 = ssub.s32 %s16, %s28
    %p30 = scmp.eq.s32.totalorder %s29, 0
    %s32 = sadd.s32 %s31, 1
    %s33 = scalar_select %p30, %s31, %s32
    %p36 = pneg %p30
    %p37 = scmp.eq.s32.totalorder %s9, 1
    %p38 = por %p36, %p37
    %p39 = scmp.ne.s32.totalorder %s31, %s34
    %p40 = scmp.eq.s32.totalorder %s9, 0
    %p41 = por %p39, %p40
    %p42 = scmp.ne.s32.totalorder %s31, %s34
    %p43 = scmp.eq.s32.totalorder %s14, 1
    %p44 = por %p42, %p43
    %p45 = scmp.ne.s32.totalorder %s34, %s35
    %p46 = scmp.eq.s32.totalorder %s14, 0
    %p47 = por %p45, %p46
    %p48 = scmp.ne.s32.totalorder %s34, %s35
    %p49 = scmp.eq.s32.totalorder %s15, 1
    %p50 = por %p48, %p49
    %p52 = scmp.ne.s32.totalorder %s35, %s51
    %p53 = scmp.eq.s32.totalorder %s15, 0
    %p54 = por %p52, %p53
    %s56 = sadd.s32 %s55, 1
    %p59 = scmp.eq.s32.totalorder %s9, 1
    %p60 = scmp.ne.s32.totalorder %s55, %s57
    %p61 = scmp.eq.s32.totalorder %s9, 0
    %p62 = por %p60, %p61
    %p63 = scmp.ne.s32.totalorder %s55, %s57
    %p64 = scmp.eq.s32.totalorder %s14, 1
    %p65 = por %p63, %p64
    %p66 = scmp.ne.s32.totalorder %s57, %s58
    %p67 = scmp.eq.s32.totalorder %s14, 0
    %p68 = por %p66, %p67
    %p69 = scmp.ne.s32.totalorder %s57, %s58
    %p70 = scmp.eq.s32.totalorder %s15, 1
    %p71 = por %p69, %p70
    %p73 = scmp.ne.s32.totalorder %s58, %s72
    %p74 = scmp.eq.s32.totalorder %s15, 0
    %p75 = por %p73, %p74
    %s77 = sadd.s32 %s76, 1
    %p80 = scmp.eq.s32.totalorder %s9, 1
    %p81 = scmp.ne.s32.totalorder %s76, %s78
    %p82 = scmp.eq.s32.totalorder %s9, 0
    %p83 = por %p81, %p82
    %p84 = scmp.ne.s32.totalorder %s76, %s78
    %p85 = scmp.eq.s32.totalorder %s14, 1
    %p86 = por %p84, %p85
    %p87 = scmp.ne.s32.totalorder %s78, %s79
    %p88 = scmp.eq.s32.totalorder %s14, 0
    %p89 = por %p87, %p88
    %p90 = scmp.ne.s32.totalorder %s78, %s79
    %p91 = scmp.eq.s32.totalorder %s15, 1
    %p92 = por %p90, %p91
    %p94 = scmp.ne.s32.totalorder %s79, %s93
    %p95 = scmp.eq.s32.totalorder %s15, 0
    %p96 = por %p94, %p95
    %s97 = ssub.s32 %s16, %s28
    %s98 = ssub.s32 %s17, %s24
    %s99 = sor.u32 %s97, %s98
    %p100 = scmp.eq.s32.totalorder %s99, 0
    %s102 = sadd.s32 %s101, 1
    %s103 = scalar_select %p100, %s101, %s102
    %p106 = pneg %p100
    %p107 = scmp.eq.s32.totalorder %s9, 1
    %p108 = por %p106, %p107
    %p109 = scmp.ne.s32.totalorder %s101, %s104
    %p110 = scmp.eq.s32.totalorder %s9, 0
    %p111 = por %p109, %p110
    %p112 = scmp.ne.s32.totalorder %s101, %s104
    %p113 = scmp.eq.s32.totalorder %s14, 1
    %p114 = por %p112, %p113
    %p115 = scmp.ne.s32.totalorder %s104, %s105
    %p116 = scmp.eq.s32.totalorder %s14, 0
    %p117 = por %p115, %p116
    %p118 = scmp.ne.s32.totalorder %s104, %s105
    %p119 = scmp.eq.s32.totalorder %s15, 1
    %p120 = por %p118, %p119
    %p122 = scmp.ne.s32.totalorder %s105, %s121
    %p123 = scmp.eq.s32.totalorder %s15, 0
    %p124 = por %p122, %p123
    %p125 = scmp.le.s32.totalorder 1, %s9
    %p126 = scmp.lt.s32.totalorder %s9, 3
    %p127 = pnand %p125, %p126
    %p128 = pneg %p127
    // Predicated region
    $region9: #{conv2d_block_forward.1} parent=5 // pred_check
      _
    $region10: #{conv2d_block_forward.1} parent=5 // pred_check_branch
      %130 = sbr.rel (%p127) target = $region12
    $region11: #{conv2d_block_forward.1} parent=5 // pred_region
      %s131 = ssub.s32 %s9, 1
      // Predicated region
      $region13: #{conv2d_block_forward.1} parent=11 // pred_check
        %p132 = pneg %p68
      $region14: #{conv2d_block_forward.1} parent=11 // pred_check_branch
        %134 = sbr.rel (%p132) target = $region16
      $region15: #{conv2d_block_forward.1} parent=11 // pred_region
        _
      $region16: #{conv2d_block_forward.1} parent=11 // pred_fallthru
        _
      // Predicated region
      $region17: #{conv2d_block_forward.1} parent=11 // pred_check
        %p135 = pneg %p89
      $region18: #{conv2d_block_forward.1} parent=11 // pred_check_branch
        %137 = sbr.rel (%p135) target = $region20
      $region19: #{conv2d_block_forward.1} parent=11 // pred_region
        _
      $region20: #{conv2d_block_forward.1} parent=11 // pred_fallthru
        _
    $region12: #{conv2d_block_forward.1} parent=5 // pred_fallthru
      _
    %p138 = scmp.lt.s32.totalorder %s9, 2
    // Predicated region
    $region21: #{conv2d_block_forward.1} parent=5 // pred_check
      %p139 = pneg %p138
    $region22: #{conv2d_block_forward.1} parent=5 // pred_check_branch
      %141 = sbr.rel (%p139) target = $region24
    $region23: #{conv2d_block_forward.1} parent=5 // pred_region
      // Predicated region
      $region25: #{conv2d_block_forward.1} parent=23 // pred_check
        %p142 = pneg %p41
      $region26: #{conv2d_block_forward.1} parent=23 // pred_check_branch
        %144 = sbr.rel (%p142) target = $region28
      $region27: #{conv2d_block_forward.1} parent=23 // pred_region
        %p145 = scmp.lt.s32.totalorder %s16, 1
        %s146 = scalar_select %p145, %s16, 1
        %s147 = smul.addr %s146, 54
        %s148 = smul.addr %s147, 4
        %s149 = scalar_lea.vmem %s0, %s148
      $region28: #{conv2d_block_forward.1} parent=23 // pred_fallthru
        _
    $region24: #{conv2d_block_forward.1} parent=5 // pred_fallthru
      _
    %p150 = scmp.le.s32.totalorder 1, %s9
    %p151 = scmp.lt.s32.totalorder %s9, 3
    %p152 = pnand %p150, %p151
    %p153 = pneg %p152
    // Predicated region
    $region29: #{conv2d_block_forward.1} parent=5 // pred_check
      _
    $region30: #{conv2d_block_forward.1} parent=5 // pred_check_branch
      %155 = sbr.rel (%p152) target = $region32
    $region31: #{conv2d_block_forward.1} parent=5 // pred_region
      %s156 = ssub.s32 %s9, 1
      %p157 = scmp.lt.s32.totalorder %s18, 1
      %s158 = scalar_select %p157, %s18, 1
      %s159 = smul.addr %s158, 54
      %s160 = smul.addr %s159, 4
      %s161 = scalar_lea.vmem %s0, %s160
      %p162 = pneg %p47
      %p163 = pneg %p44
      %p164 = pneg %p68
      %p165 = pneg %p65
      %p166 = pneg %p89
      %p167 = pneg %p86
      %p168 = pneg %p117
      %p169 = pneg %p114
      %s170 = smul.u32 16, %s19
      %p171 = scmp.lt.s32.totalorder %s18, 1
      %s172 = scalar_select %p171, %s18, 1
      %p173 = scmp.lt.s32.totalorder %s170, 15
      %s174 = scalar_select %p173, %s170, 15
      %s175 = smul.addr %s174, 2
      %s176 = smul.addr %s172, 32
      %s177 = sadd.s32 %s175, %s176
      %s178 = smul.addr %s177, 4
      %s179 = scalar_lea.vmem %s3, %s178
      %p180 = scmp.lt.s32.totalorder %s18, 1
      %s181 = scalar_select %p180, %s18, 1
      %s182 = smul.addr %s181, 54
      %s183 = smul.addr %s182, 4
      %s184 = scalar_lea.vmem %s0, %s183
      %s185 = smul.u32 16, %s19
      %p186 = scmp.lt.s32.totalorder %s18, 1
      %s187 = scalar_select %p186, %s18, 1
      %p188 = scmp.lt.s32.totalorder %s185, 15
      %s189 = scalar_select %p188, %s185, 15
      %s190 = smul.addr %s189, 2
      %s191 = smul.addr %s187, 32
      %s192 = sadd.s32 %s190, %s191
      %s193 = smul.addr %s192, 4
      %s194 = scalar_lea.vmem %s3, %s193
      %s195 = smul.u32 16, %s19
      %s197 = smul.u32 %s19, 16
      %s198 = smul.u32 %s197, 3
      %s199 = smul.addr %s198, 4
      %s200 = scalar_lea.vmem %s184, %s199
      %v201 = vld [vmem:[%s200] sm:$0xf]
      %v202 = vld [vmem:[%s200 + $0x4] sm:$0xf]
      %v203 = vld [vmem:[%s200 + $0xc] sm:$0xf]
      %v204 = vld [vmem:[%s200 + $0x10] sm:$0xf]
      %v205 = vld [vmem:[%s200 + $0x18] sm:$0xf]
      %v206 = vld [vmem:[%s200 + $0x1c] sm:$0xf]
      %v207 = vld [vmem:[%s200 + $0x24] sm:$0xf]
      %v208 = vld [vmem:[%s200 + $0x28] sm:$0xf]
      %v209 = vld [vmem:[%s200 + $0x30] sm:$0xf]
      %v210 = vld [vmem:[%s200 + $0x34] sm:$0xf]
      %v211 = vld [vmem:[%s200 + $0x3c] sm:$0xf]
      %v212 = vld [vmem:[%s200 + $0x40] sm:$0xf]
      %v213 = vld [vmem:[%s200 + $0x48] sm:$0xf]
      %v214 = vld [vmem:[%s200 + $0x4c] sm:$0xf]
      %v215 = vld [vmem:[%s200 + $0x54] sm:$0xf]
      %v216 = vld [vmem:[%s200 + $0x58] sm:$0xf]
      %v217 = vld [vmem:[%s200 + $0x60] sm:$0xf]
      %v218 = vld [vmem:[%s200 + $0x64] sm:$0xf]
      %v219 = vld [vmem:[%s200 + $0x6c] sm:$0xf]
      %v220 = vld [vmem:[%s200 + $0x70] sm:$0xf]
      %v221 = vld [vmem:[%s200 + $0x78] sm:$0xf]
      %v222 = vld [vmem:[%s200 + $0x7c] sm:$0xf]
      %v223 = vld [vmem:[%s200 + $0x84] sm:$0xf]
      %v224 = vld [vmem:[%s200 + $0x88] sm:$0xf]
      %v225 = vld [vmem:[%s200 + $0x90] sm:$0xf]
      %v226 = vld [vmem:[%s200 + $0x94] sm:$0xf]
      %v227 = vld [vmem:[%s200 + $0x9c] sm:$0xf]
      %v228 = vld [vmem:[%s200 + $0xa0] sm:$0xf]
      %v229 = vld [vmem:[%s200 + $0xa8] sm:$0xf]
      %v230 = vld [vmem:[%s200 + $0xac] sm:$0xf]
      %v231 = vld [vmem:[%s200 + $0xb4] sm:$0xf]
      %v232 = vld [vmem:[%s200 + $0xb8] sm:$0xf]
      %v233 = vld [vmem:[%s1] sm:$0x3]
      %v234 = vld [vmem:[%s200 + $0x8] sm:$0x1]
      %v235 = vld [vmem:[%s200 + $0x14] sm:$0x1]
      %v236 = vld [vmem:[%s200 + $0x20] sm:$0x1]
      %v237 = vld [vmem:[%s200 + $0x2c] sm:$0x1]
      %v238 = vld [vmem:[%s200 + $0x38] sm:$0x1]
      %v239 = vld [vmem:[%s200 + $0x44] sm:$0x1]
      %v240 = vld [vmem:[%s200 + $0x50] sm:$0x1]
      %v241 = vld [vmem:[%s200 + $0x5c] sm:$0x1]
      %v242 = vld [vmem:[%s200 + $0x68] sm:$0x1]
      %v243 = vld [vmem:[%s200 + $0x74] sm:$0x1]
      %v244 = vld [vmem:[%s200 + $0x80] sm:$0x1]
      %v245 = vld [vmem:[%s200 + $0x8c] sm:$0x1]
      %v246 = vld [vmem:[%s200 + $0x98] sm:$0x1]
      %v247 = vld [vmem:[%s200 + $0xa4] sm:$0x1]
      %v248 = vld [vmem:[%s200 + $0xb0] sm:$0x1]
      %v249 = vld [vmem:[%s200 + $0xbc] sm:$0x1]
      %vm250 = vsmask.f32 3328
      %vm251 = vsmask.f32 7440
      %vm252 = vmor %vm250, %vm251
      %v254 = vshrl.u32 %v201, 16
      %v256 = vrot.slane %v254, 4
      %v257 = vshll.u32 %v201, 16
      %v259 = vrot.slane %v257, 5
      %v260 = vor.u32 %v256, %v259
      %v261 = vrot.slane %v260, 4
      %v263 = vshll.u32 %v202, 16
      %v265 = vrot.slane %v263, 5
      %v266 = vsel %vm252, %v261, %v265
      %v267 = vshrl.u32 %v202, 16
      %v269 = vrot.slane %v267, 4
      %v270 = vor.u32 %v269, %v265
      %v271 = vrot.slane %v270, 4
      %v273 = vshll.u32 %v234, 16
      %v275 = vrot.slane %v273, 5
      %v276 = vsel %vm252, %v271, %v275
      %v278 = vshrl.u32 %v203, 16
      %v280 = vrot.slane %v278, 4
      %v281 = vshll.u32 %v203, 16
      %v283 = vrot.slane %v281, 5
      %v284 = vor.u32 %v280, %v283
      %v285 = vrot.slane %v284, 4
      %v287 = vshll.u32 %v204, 16
      %v289 = vrot.slane %v287, 5
      %v290 = vsel %vm252, %v285, %v289
      %v291 = vshrl.u32 %v204, 16
      %v293 = vrot.slane %v291, 4
      %v294 = vor.u32 %v293, %v289
      %v295 = vrot.slane %v294, 4
      %v297 = vshll.u32 %v235, 16
      %v299 = vrot.slane %v297, 5
      %v300 = vsel %vm252, %v295, %v299
      %v302 = vshrl.u32 %v205, 16
      %v304 = vrot.slane %v302, 4
      %v305 = vshll.u32 %v205, 16
      %v307 = vrot.slane %v305, 5
      %v308 = vor.u32 %v304, %v307
      %v309 = vrot.slane %v308, 4
      %v311 = vshll.u32 %v206, 16
      %v313 = vrot.slane %v311, 5
      %v314 = vsel %vm252, %v309, %v313
      %v315 = vshrl.u32 %v206, 16
      %v317 = vrot.slane %v315, 4
      %v318 = vor.u32 %v317, %v313
      %v319 = vrot.slane %v318, 4
      %v321 = vshll.u32 %v236, 16
      %v323 = vrot.slane %v321, 5
      %v324 = vsel %vm252, %v319, %v323
      %v326 = vshrl.u32 %v207, 16
      %v328 = vrot.slane %v326, 4
      %v329 = vshll.u32 %v207, 16
      %v331 = vrot.slane %v329, 5
      %v332 = vor.u32 %v328, %v331
      %v333 = vrot.slane %v332, 4
      %v335 = vshll.u32 %v208, 16
      %v337 = vrot.slane %v335, 5
      %v338 = vsel %vm252, %v333, %v337
      %v339 = vshrl.u32 %v208, 16
      %v341 = vrot.slane %v339, 4
      %v342 = vor.u32 %v341, %v337
      %v343 = vrot.slane %v342, 4
      %v345 = vshll.u32 %v237, 16
      %v347 = vrot.slane %v345, 5
      %v348 = vsel %vm252, %v343, %v347
      %v350 = vshrl.u32 %v209, 16
      %v352 = vrot.slane %v350, 4
      %v353 = vshll.u32 %v209, 16
      %v355 = vrot.slane %v353, 5
      %v356 = vor.u32 %v352, %v355
      %v357 = vrot.slane %v356, 4
      %v359 = vshll.u32 %v210, 16
      %v361 = vrot.slane %v359, 5
      %v362 = vsel %vm252, %v357, %v361
      %v363 = vshrl.u32 %v210, 16
      %v365 = vrot.slane %v363, 4
      %v366 = vor.u32 %v365, %v361
      %v367 = vrot.slane %v366, 4
      %v369 = vshll.u32 %v238, 16
      %v371 = vrot.slane %v369, 5
      %v372 = vsel %vm252, %v367, %v371
      %v374 = vshrl.u32 %v211, 16
      %v376 = vrot.slane %v374, 4
      %v377 = vshll.u32 %v211, 16
      %v379 = vrot.slane %v377, 5
      %v380 = vor.u32 %v376, %v379
      %v381 = vrot.slane %v380, 4
      %v383 = vshll.u32 %v212, 16
      %v385 = vrot.slane %v383, 5
      %v386 = vsel %vm252, %v381, %v385
      %v387 = vshrl.u32 %v212, 16
      %v389 = vrot.slane %v387, 4
      %v390 = vor.u32 %v389, %v385
      %v391 = vrot.slane %v390, 4
      %v393 = vshll.u32 %v239, 16
      %v395 = vrot.slane %v393, 5
      %v396 = vsel %vm252, %v391, %v395
      %v398 = vshrl.u32 %v213, 16
      %v400 = vrot.slane %v398, 4
      %v401 = vshll.u32 %v213, 16
      %v403 = vrot.slane %v401, 5
      %v404 = vor.u32 %v400, %v403
      %v405 = vrot.slane %v404, 4
      %v407 = vshll.u32 %v214, 16
      %v409 = vrot.slane %v407, 5
      %v410 = vsel %vm252, %v405, %v409
      %v411 = vshrl.u32 %v214, 16
      %v413 = vrot.slane %v411, 4
      %v414 = vor.u32 %v413, %v409
      %v415 = vrot.slane %v414, 4
      %v417 = vshll.u32 %v240, 16
      %v419 = vrot.slane %v417, 5
      %v420 = vsel %vm252, %v415, %v419
      %v422 = vshrl.u32 %v215, 16
      %v424 = vrot.slane %v422, 4
      %v425 = vshll.u32 %v215, 16
      %v427 = vrot.slane %v425, 5
      %v428 = vor.u32 %v424, %v427
      %v429 = vrot.slane %v428, 4
      %v431 = vshll.u32 %v216, 16
      %v433 = vrot.slane %v431, 5
      %v434 = vsel %vm252, %v429, %v433
      %v435 = vshrl.u32 %v216, 16
      %v437 = vrot.slane %v435, 4
      %v438 = vor.u32 %v437, %v433
      %v439 = vrot.slane %v438, 4
      %v441 = vshll.u32 %v241, 16
      %v443 = vrot.slane %v441, 5
      %v444 = vsel %vm252, %v439, %v443
      %v446 = vshrl.u32 %v217, 16
      %v448 = vrot.slane %v446, 4
      %v449 = vshll.u32 %v217, 16
      %v451 = vrot.slane %v449, 5
      %v452 = vor.u32 %v448, %v451
      %v453 = vrot.slane %v452, 4
      %v455 = vshll.u32 %v218, 16
      %v457 = vrot.slane %v455, 5
      %v458 = vsel %vm252, %v453, %v457
      %v459 = vshrl.u32 %v218, 16
      %v461 = vrot.slane %v459, 4
      %v462 = vor.u32 %v461, %v457
      %v463 = vrot.slane %v462, 4
      %v465 = vshll.u32 %v242, 16
      %v467 = vrot.slane %v465, 5
      %v468 = vsel %vm252, %v463, %v467
      %v470 = vshrl.u32 %v219, 16
      %v472 = vrot.slane %v470, 4
      %v473 = vshll.u32 %v219, 16
      %v475 = vrot.slane %v473, 5
      %v476 = vor.u32 %v472, %v475
      %v477 = vrot.slane %v476, 4
      %v479 = vshll.u32 %v220, 16
      %v481 = vrot.slane %v479, 5
      %v482 = vsel %vm252, %v477, %v481
      %v483 = vshrl.u32 %v220, 16
      %v485 = vrot.slane %v483, 4
      %v486 = vor.u32 %v485, %v481
      %v487 = vrot.slane %v486, 4
      %v489 = vshll.u32 %v243, 16
      %v491 = vrot.slane %v489, 5
      %v492 = vsel %vm252, %v487, %v491
      %v494 = vshrl.u32 %v221, 16
      %v496 = vrot.slane %v494, 4
      %v497 = vshll.u32 %v221, 16
      %v499 = vrot.slane %v497, 5
      %v500 = vor.u32 %v496, %v499
      %v501 = vrot.slane %v500, 4
      %v503 = vshll.u32 %v222, 16
      %v505 = vrot.slane %v503, 5
      %v506 = vsel %vm252, %v501, %v505
      %v507 = vshrl.u32 %v222, 16
      %v509 = vrot.slane %v507, 4
      %v510 = vor.u32 %v509, %v505
      %v511 = vrot.slane %v510, 4
      %v513 = vshll.u32 %v244, 16
      %v515 = vrot.slane %v513, 5
      %v516 = vsel %vm252, %v511, %v515
      %v518 = vshrl.u32 %v223, 16
      %v520 = vrot.slane %v518, 4
      %v521 = vshll.u32 %v223, 16
      %v523 = vrot.slane %v521, 5
      %v524 = vor.u32 %v520, %v523
      %v525 = vrot.slane %v524, 4
      %v527 = vshll.u32 %v224, 16
      %v529 = vrot.slane %v527, 5
      %v530 = vsel %vm252, %v525, %v529
      %v531 = vshrl.u32 %v224, 16
      %v533 = vrot.slane %v531, 4
      %v534 = vor.u32 %v533, %v529
      %v535 = vrot.slane %v534, 4
      %v537 = vshll.u32 %v245, 16
      %v539 = vrot.slane %v537, 5
      %v540 = vsel %vm252, %v535, %v539
      %v542 = vshrl.u32 %v225, 16
      %v544 = vrot.slane %v542, 4
      %v545 = vshll.u32 %v225, 16
      %v547 = vrot.slane %v545, 5
      %v548 = vor.u32 %v544, %v547
      %v549 = vrot.slane %v548, 4
      %v551 = vshll.u32 %v226, 16
      %v553 = vrot.slane %v551, 5
      %v554 = vsel %vm252, %v549, %v553
      %v555 = vshrl.u32 %v226, 16
      %v557 = vrot.slane %v555, 4
      %v558 = vor.u32 %v557, %v553
      %v559 = vrot.slane %v558, 4
      %v561 = vshll.u32 %v246, 16
      %v563 = vrot.slane %v561, 5
      %v564 = vsel %vm252, %v559, %v563
      %v566 = vshrl.u32 %v227, 16
      %v568 = vrot.slane %v566, 4
      %v569 = vshll.u32 %v227, 16
      %v571 = vrot.slane %v569, 5
      %v572 = vor.u32 %v568, %v571
      %v573 = vrot.slane %v572, 4
      %v575 = vshll.u32 %v228, 16
      %v577 = vrot.slane %v575, 5
      %v578 = vsel %vm252, %v573, %v577
      %v579 = vshrl.u32 %v228, 16
      %v581 = vrot.slane %v579, 4
      %v582 = vor.u32 %v581, %v577
      %v583 = vrot.slane %v582, 4
      %v585 = vshll.u32 %v247, 16
      %v587 = vrot.slane %v585, 5
      %v588 = vsel %vm252, %v583, %v587
      %v590 = vshrl.u32 %v229, 16
      %v592 = vrot.slane %v590, 4
      %v593 = vshll.u32 %v229, 16
      %v595 = vrot.slane %v593, 5
      %v596 = vor.u32 %v592, %v595
      %v597 = vrot.slane %v596, 4
      %v599 = vshll.u32 %v230, 16
      %v601 = vrot.slane %v599, 5
      %v602 = vsel %vm252, %v597, %v601
      %v603 = vshrl.u32 %v230, 16
      %v605 = vrot.slane %v603, 4
      %v606 = vor.u32 %v605, %v601
      %v607 = vrot.slane %v606, 4
      %v609 = vshll.u32 %v248, 16
      %v611 = vrot.slane %v609, 5
      %v612 = vsel %vm252, %v607, %v611
      %v614 = vshrl.u32 %v231, 16
      %v616 = vrot.slane %v614, 4
      %v617 = vshll.u32 %v231, 16
      %v619 = vrot.slane %v617, 5
      %v620 = vor.u32 %v616, %v619
      %v621 = vrot.slane %v620, 4
      %v623 = vshll.u32 %v232, 16
      %v625 = vrot.slane %v623, 5
      %v626 = vsel %vm252, %v621, %v625
      %v627 = vshrl.u32 %v232, 16
      %v629 = vrot.slane %v627, 4
      %v630 = vor.u32 %v629, %v625
      %v631 = vrot.slane %v630, 4
      %v633 = vshll.u32 %v249, 16
      %v635 = vrot.slane %v633, 5
      %v636 = vsel %vm252, %v631, %v635
      %s637 = scalar_lea.vmem %s1, 2
      %v638 = vld [vmem:[%s637] sm:$0x3]
      %v639 = vunpack.c.l.b16 %v266
      %v640 = vunpack.c.l.b16 %v276
      %v641 = vunpack.c.l.b16 %v290
      %v642 = vunpack.c.l.b16 %v300
      %v643 = vunpack.c.l.b16 %v314
      %v644 = vunpack.c.l.b16 %v324
      %v645 = vunpack.c.l.b16 %v338
      %v646 = vunpack.c.l.b16 %v348
      %v647 = vunpack.c.l.b16 %v362
      %v648 = vunpack.c.l.b16 %v372
      %v649 = vunpack.c.l.b16 %v386
      %v650 = vunpack.c.l.b16 %v396
      %v651 = vunpack.c.l.b16 %v410
      %v652 = vunpack.c.l.b16 %v420
      %v653 = vunpack.c.l.b16 %v434
      %v654 = vunpack.c.l.b16 %v444
      %v655 = vunpack.c.l.b16 %v458
      %v656 = vunpack.c.l.b16 %v468
      %v657 = vunpack.c.l.b16 %v482
      %v658 = vunpack.c.l.b16 %v492
      %v659 = vunpack.c.l.b16 %v506
      %v660 = vunpack.c.l.b16 %v516
      %v661 = vunpack.c.l.b16 %v530
      %v662 = vunpack.c.l.b16 %v540
      %v663 = vunpack.c.l.b16 %v554
      %v664 = vunpack.c.l.b16 %v564
      %v665 = vunpack.c.l.b16 %v578
      %v666 = vunpack.c.l.b16 %v588
      %v667 = vunpack.c.l.b16 %v602
      %v668 = vunpack.c.l.b16 %v612
      %v669 = vunpack.c.l.b16 %v626
      %v670 = vunpack.c.l.b16 %v636
      %v671 = vpack.c.b16 %v640, %v639
      %v672 = vpack.c.b16 %v642, %v641
      %v673 = vpack.c.b16 %v644, %v643
      %v674 = vpack.c.b16 %v646, %v645
      %v675 = vpack.c.b16 %v648, %v647
      %v676 = vpack.c.b16 %v650, %v649
      %v677 = vpack.c.b16 %v652, %v651
      %v678 = vpack.c.b16 %v654, %v653
      %v679 = vpack.c.b16 %v656, %v655
      %v680 = vpack.c.b16 %v658, %v657
      %v681 = vpack.c.b16 %v660, %v659
      %v682 = vpack.c.b16 %v662, %v661
      %v683 = vpack.c.b16 %v664, %v663
      %v684 = vpack.c.b16 %v666, %v665
      %v685 = vpack.c.b16 %v668, %v667
      %v686 = vpack.c.b16 %v670, %v669
      %vm687 = vcmask 31744
      %v689 = vsel %vm687, %v671, 0
      %v692 = vsel %vm687, %v672, 0
      %v695 = vsel %vm687, %v673, 0
      %v698 = vsel %vm687, %v674, 0
      %v701 = vsel %vm687, %v675, 0
      %v704 = vsel %vm687, %v676, 0
      %v707 = vsel %vm687, %v677, 0
      %v710 = vsel %vm687, %v678, 0
      %v713 = vsel %vm687, %v679, 0
      %v716 = vsel %vm687, %v680, 0
      %v719 = vsel %vm687, %v681, 0
      %v722 = vsel %vm687, %v682, 0
      %v725 = vsel %vm687, %v683, 0
      %v728 = vsel %vm687, %v684, 0
      %v731 = vsel %vm687, %v685, 0
      %v734 = vsel %vm687, %v686, 0
      %vm736 = vcmask 1041408
      %v738 = vsel %vm736, %v638, 0
      %740 = vmatpush.bf16.msra.mxu0 0
      %741 = vmatpush.bf16.msra.mxu0 0
      %742 = vmatpush.bf16.msra.mxu0 0
      %743 = vmatpush.bf16.msra.mxu0 0
      %744 = vmatpush.bf16.msra.mxu0 0
      %745 = vmatpush.bf16.msra.mxu0 0
      %746 = vmatpush.bf16.msra.mxu0 0
      %747 = vmatpush.bf16.msra.mxu0 %v738
      %748 = vmatmul.bf16.gmra.mxu0 %v689
      %v749 = vpop.f32.mrf.mxu0
      %v750 = vadd.f32 0.0, %v749
      %v751 = vpop.f32.mrf.mxu0
      %v752 = vadd.f32 0.0, %v751
      %753 = vmatmul.bf16.gmra.mxu0 %v692
      %v754 = vpop.f32.mrf.mxu0
      %v755 = vadd.f32 0.0, %v754
      %v756 = vpop.f32.mrf.mxu0
      %v757 = vadd.f32 0.0, %v756
      %758 = vmatmul.bf16.gmra.mxu0 %v695
      %v759 = vpop.f32.mrf.mxu0
      %v760 = vadd.f32 0.0, %v759
      %v761 = vpop.f32.mrf.mxu0
      %v762 = vadd.f32 0.0, %v761
      %763 = vmatmul.bf16.gmra.mxu0 %v698
      %v764 = vpop.f32.mrf.mxu0
      %v765 = vadd.f32 0.0, %v764
      %v766 = vpop.f32.mrf.mxu0
      %v767 = vadd.f32 0.0, %v766
      %768 = vmatmul.bf16.gmra.mxu0 %v701
      %v769 = vpop.f32.mrf.mxu0
      %v770 = vadd.f32 0.0, %v769
      %v771 = vpop.f32.mrf.mxu0
      %v772 = vadd.f32 0.0, %v771
      %773 = vmatmul.bf16.gmra.mxu0 %v704
      %v774 = vpop.f32.mrf.mxu0
      %v775 = vadd.f32 0.0, %v774
      %v776 = vpop.f32.mrf.mxu0
      %v777 = vadd.f32 0.0, %v776
      %778 = vmatmul.bf16.gmra.mxu0 %v707
      %v779 = vpop.f32.mrf.mxu0
      %v780 = vadd.f32 0.0, %v779
      %v781 = vpop.f32.mrf.mxu0
      %v782 = vadd.f32 0.0, %v781
      %783 = vmatmul.bf16.gmra.mxu0 %v710
      %v784 = vpop.f32.mrf.mxu0
      %v785 = vadd.f32 0.0, %v784
      %v786 = vpop.f32.mrf.mxu0
      %v787 = vadd.f32 0.0, %v786
      %788 = vmatmul.bf16.gmra.mxu0 %v713
      %v789 = vpop.f32.mrf.mxu0
      %v790 = vadd.f32 0.0, %v789
      %v791 = vpop.f32.mrf.mxu0
      %v792 = vadd.f32 0.0, %v791
      %793 = vmatmul.bf16.gmra.mxu0 %v716
      %v794 = vpop.f32.mrf.mxu0
      %v795 = vadd.f32 0.0, %v794
      %v796 = vpop.f32.mrf.mxu0
      %v797 = vadd.f32 0.0, %v796
      %798 = vmatmul.bf16.gmra.mxu0 %v719
      %v799 = vpop.f32.mrf.mxu0
      %v800 = vadd.f32 0.0, %v799
      %v801 = vpop.f32.mrf.mxu0
      %v802 = vadd.f32 0.0, %v801
      %803 = vmatmul.bf16.gmra.mxu0 %v722
      %v804 = vpop.f32.mrf.mxu0
      %v805 = vadd.f32 0.0, %v804
      %v806 = vpop.f32.mrf.mxu0
      %v807 = vadd.f32 0.0, %v806
      %808 = vmatmul.bf16.gmra.mxu0 %v725
      %v809 = vpop.f32.mrf.mxu0
      %v810 = vadd.f32 0.0, %v809
      %v811 = vpop.f32.mrf.mxu0
      %v812 = vadd.f32 0.0, %v811
      %813 = vmatmul.bf16.gmra.mxu0 %v728
      %v814 = vpop.f32.mrf.mxu0
      %v815 = vadd.f32 0.0, %v814
      %v816 = vpop.f32.mrf.mxu0
      %v817 = vadd.f32 0.0, %v816
      %818 = vmatmul.bf16.gmra.mxu0 %v731
      %v819 = vpop.f32.mrf.mxu0
      %v820 = vadd.f32 0.0, %v819
      %v821 = vpop.f32.mrf.mxu0
      %v822 = vadd.f32 0.0, %v821
      %823 = vmatmul.bf16.gmra.mxu0 %v734
      %v824 = vpop.f32.mrf.mxu0
      %v825 = vadd.f32 0.0, %v824
      %v826 = vpop.f32.mrf.mxu0
      %v827 = vadd.f32 0.0, %v826
      %828 = vdwg.mxu0
      %v861 = vunpack.c.l.b16 %v201
      %v862 = vunpack.c.l.b16 %v202
      %v863 = vunpack.c.l.b16 %v203
      %v864 = vunpack.c.l.b16 %v204
      %v865 = vunpack.c.l.b16 %v205
      %v866 = vunpack.c.l.b16 %v206
      %v867 = vunpack.c.l.b16 %v207
      %v868 = vunpack.c.l.b16 %v208
      %v869 = vunpack.c.l.b16 %v209
      %v870 = vunpack.c.l.b16 %v210
      %v871 = vunpack.c.l.b16 %v211
      %v872 = vunpack.c.l.b16 %v212
      %v873 = vunpack.c.l.b16 %v213
      %v874 = vunpack.c.l.b16 %v214
      %v875 = vunpack.c.l.b16 %v215
      %v876 = vunpack.c.l.b16 %v216
      %v877 = vunpack.c.l.b16 %v217
      %v878 = vunpack.c.l.b16 %v218
      %v879 = vunpack.c.l.b16 %v219
      %v880 = vunpack.c.l.b16 %v220
      %v881 = vunpack.c.l.b16 %v221
      %v882 = vunpack.c.l.b16 %v222
      %v883 = vunpack.c.l.b16 %v223
      %v884 = vunpack.c.l.b16 %v224
      %v885 = vunpack.c.l.b16 %v225
      %v886 = vunpack.c.l.b16 %v226
      %v887 = vunpack.c.l.b16 %v227
      %v888 = vunpack.c.l.b16 %v228
      %v889 = vunpack.c.l.b16 %v229
      %v890 = vunpack.c.l.b16 %v230
      %v891 = vunpack.c.l.b16 %v231
      %v892 = vunpack.c.l.b16 %v232
      %v893 = vpack.c.b16 %v862, %v861
      %v894 = vpack.c.b16 %v864, %v863
      %v895 = vpack.c.b16 %v866, %v865
      %v896 = vpack.c.b16 %v868, %v867
      %v897 = vpack.c.b16 %v870, %v869
      %v898 = vpack.c.b16 %v872, %v871
      %v899 = vpack.c.b16 %v874, %v873
      %v900 = vpack.c.b16 %v876, %v875
      %v901 = vpack.c.b16 %v878, %v877
      %v902 = vpack.c.b16 %v880, %v879
      %v903 = vpack.c.b16 %v882, %v881
      %v904 = vpack.c.b16 %v884, %v883
      %v905 = vpack.c.b16 %v886, %v885
      %v906 = vpack.c.b16 %v888, %v887
      %v907 = vpack.c.b16 %v890, %v889
      %v908 = vpack.c.b16 %v892, %v891
      %v910 = vsel %vm687, %v893, 0
      %v913 = vsel %vm687, %v894, 0
      %v916 = vsel %vm687, %v895, 0
      %v919 = vsel %vm687, %v896, 0
      %v922 = vsel %vm687, %v897, 0
      %v925 = vsel %vm687, %v898, 0
      %v928 = vsel %vm687, %v899, 0
      %v931 = vsel %vm687, %v900, 0
      %v934 = vsel %vm687, %v901, 0
      %v937 = vsel %vm687, %v902, 0
      %v940 = vsel %vm687, %v903, 0
      %v943 = vsel %vm687, %v904, 0
      %v946 = vsel %vm687, %v905, 0
      %v949 = vsel %vm687, %v906, 0
      %v952 = vsel %vm687, %v907, 0
      %v955 = vsel %vm687, %v908, 0
      %v958 = vsel %vm736, %v233, 0
      %960 = vmatpush.bf16.msra.mxu0 0
      %961 = vmatpush.bf16.msra.mxu0 0
      %962 = vmatpush.bf16.msra.mxu0 0
      %963 = vmatpush.bf16.msra.mxu0 0
      %964 = vmatpush.bf16.msra.mxu0 0
      %965 = vmatpush.bf16.msra.mxu0 0
      %966 = vmatpush.bf16.msra.mxu0 0
      %967 = vmatpush.bf16.msra.mxu0 %v958
      %968 = vmatmul.bf16.gmra.mxu0 %v910
      %v969 = vpop.f32.mrf.mxu0
      %v970 = vadd.f32 %v750, %v969
      %v971 = vpop.f32.mrf.mxu0
      %v972 = vadd.f32 %v752, %v971
      %973 = vmatmul.bf16.gmra.mxu0 %v913
      %v974 = vpop.f32.mrf.mxu0
      %v975 = vadd.f32 %v755, %v974
      %v976 = vpop.f32.mrf.mxu0
      %v977 = vadd.f32 %v757, %v976
      %978 = vmatmul.bf16.gmra.mxu0 %v916
      %v979 = vpop.f32.mrf.mxu0
      %v980 = vadd.f32 %v760, %v979
      %v981 = vpop.f32.mrf.mxu0
      %v982 = vadd.f32 %v762, %v981
      %983 = vmatmul.bf16.gmra.mxu0 %v919
      %v984 = vpop.f32.mrf.mxu0
      %v985 = vadd.f32 %v765, %v984
      %v986 = vpop.f32.mrf.mxu0
      %v987 = vadd.f32 %v767, %v986
      %988 = vmatmul.bf16.gmra.mxu0 %v922
      %v989 = vpop.f32.mrf.mxu0
      %v990 = vadd.f32 %v770, %v989
      %v991 = vpop.f32.mrf.mxu0
      %v992 = vadd.f32 %v772, %v991
      %993 = vmatmul.bf16.gmra.mxu0 %v925
      %v994 = vpop.f32.mrf.mxu0
      %v995 = vadd.f32 %v775, %v994
      %v996 = vpop.f32.mrf.mxu0
      %v997 = vadd.f32 %v777, %v996
      %998 = vmatmul.bf16.gmra.mxu0 %v928
      %v999 = vpop.f32.mrf.mxu0
      %v1000 = vadd.f32 %v780, %v999
      %v1001 = vpop.f32.mrf.mxu0
      %v1002 = vadd.f32 %v782, %v1001
      %1003 = vmatmul.bf16.gmra.mxu0 %v931
      %v1004 = vpop.f32.mrf.mxu0
      %v1005 = vadd.f32 %v785, %v1004
      %v1006 = vpop.f32.mrf.mxu0
      %v1007 = vadd.f32 %v787, %v1006
      %1008 = vmatmul.bf16.gmra.mxu0 %v934
      %v1009 = vpop.f32.mrf.mxu0
      %v1010 = vadd.f32 %v790, %v1009
      %v1011 = vpop.f32.mrf.mxu0
      %v1012 = vadd.f32 %v792, %v1011
      %1013 = vmatmul.bf16.gmra.mxu0 %v937
      %v1014 = vpop.f32.mrf.mxu0
      %v1015 = vadd.f32 %v795, %v1014
      %v1016 = vpop.f32.mrf.mxu0
      %v1017 = vadd.f32 %v797, %v1016
      %1018 = vmatmul.bf16.gmra.mxu0 %v940
      %v1019 = vpop.f32.mrf.mxu0
      %v1020 = vadd.f32 %v800, %v1019
      %v1021 = vpop.f32.mrf.mxu0
      %v1022 = vadd.f32 %v802, %v1021
      %1023 = vmatmul.bf16.gmra.mxu0 %v943
      %v1024 = vpop.f32.mrf.mxu0
      %v1025 = vadd.f32 %v805, %v1024
      %v1026 = vpop.f32.mrf.mxu0
      %v1027 = vadd.f32 %v807, %v1026
      %1028 = vmatmul.bf16.gmra.mxu0 %v946
      %v1029 = vpop.f32.mrf.mxu0
      %v1030 = vadd.f32 %v810, %v1029
      %v1031 = vpop.f32.mrf.mxu0
      %v1032 = vadd.f32 %v812, %v1031
      %1033 = vmatmul.bf16.gmra.mxu0 %v949
      %v1034 = vpop.f32.mrf.mxu0
      %v1035 = vadd.f32 %v815, %v1034
      %v1036 = vpop.f32.mrf.mxu0
      %v1037 = vadd.f32 %v817, %v1036
      %1038 = vmatmul.bf16.gmra.mxu0 %v952
      %v1039 = vpop.f32.mrf.mxu0
      %v1040 = vadd.f32 %v820, %v1039
      %v1041 = vpop.f32.mrf.mxu0
      %v1042 = vadd.f32 %v822, %v1041
      %1043 = vmatmul.bf16.gmra.mxu0 %v955
      %v1044 = vpop.f32.mrf.mxu0
      %v1045 = vadd.f32 %v825, %v1044
      %v1046 = vpop.f32.mrf.mxu0
      %v1047 = vadd.f32 %v827, %v1046
      %1048 = vdwg.mxu0
      %v1049 = vld [vmem:[%s200] sm:$0xe]
      %v1050 = vld [vmem:[%s200 + $0xc] sm:$0xe]
      %v1051 = vld [vmem:[%s200 + $0x18] sm:$0xe]
      %v1052 = vld [vmem:[%s200 + $0x24] sm:$0xe]
      %v1053 = vld [vmem:[%s200 + $0x30] sm:$0xe]
      %v1054 = vld [vmem:[%s200 + $0x3c] sm:$0xe]
      %v1055 = vld [vmem:[%s200 + $0x48] sm:$0xe]
      %v1056 = vld [vmem:[%s200 + $0x54] sm:$0xe]
      %v1057 = vld [vmem:[%s200 + $0x60] sm:$0xe]
      %v1058 = vld [vmem:[%s200 + $0x6c] sm:$0xe]
      %v1059 = vld [vmem:[%s200 + $0x78] sm:$0xe]
      %v1060 = vld [vmem:[%s200 + $0x84] sm:$0xe]
      %v1061 = vld [vmem:[%s200 + $0x90] sm:$0xe]
      %v1062 = vld [vmem:[%s200 + $0x9c] sm:$0xe]
      %v1063 = vld [vmem:[%s200 + $0xa8] sm:$0xe]
      %v1064 = vld [vmem:[%s200 + $0xb4] sm:$0xe]
      %vm1097 = vcmask 1042432
      %vm1098 = vcmask 1046532
      %vm1099 = vmor %vm1097, %vm1098
      %v1100 = vrot.slane %v1049, 5
      %v1101 = vrot.slane %v1100, 4
      %v1102 = vrot.slane %v202, 5
      %v1103 = vsel %vm1099, %v1101, %v1102
      %v1104 = vrot.slane %v1102, 4
      %v1105 = vrot.slane %v234, 5
      %v1106 = vsel %vm1099, %v1104, %v1105
      %v1107 = vrot.slane %v1050, 5
      %v1108 = vrot.slane %v1107, 4
      %v1109 = vrot.slane %v204, 5
      %v1110 = vsel %vm1099, %v1108, %v1109
      %v1111 = vrot.slane %v1109, 4
      %v1112 = vrot.slane %v235, 5
      %v1113 = vsel %vm1099, %v1111, %v1112
      %v1114 = vrot.slane %v1051, 5
      %v1115 = vrot.slane %v1114, 4
      %v1116 = vrot.slane %v206, 5
      %v1117 = vsel %vm1099, %v1115, %v1116
      %v1118 = vrot.slane %v1116, 4
      %v1119 = vrot.slane %v236, 5
      %v1120 = vsel %vm1099, %v1118, %v1119
      %v1121 = vrot.slane %v1052, 5
      %v1122 = vrot.slane %v1121, 4
      %v1123 = vrot.slane %v208, 5
      %v1124 = vsel %vm1099, %v1122, %v1123
      %v1125 = vrot.slane %v1123, 4
      %v1126 = vrot.slane %v237, 5
      %v1127 = vsel %vm1099, %v1125, %v1126
      %v1128 = vrot.slane %v1053, 5
      %v1129 = vrot.slane %v1128, 4
      %v1130 = vrot.slane %v210, 5
      %v1131 = vsel %vm1099, %v1129, %v1130
      %v1132 = vrot.slane %v1130, 4
      %v1133 = vrot.slane %v238, 5
      %v1134 = vsel %vm1099, %v1132, %v1133
      %v1135 = vrot.slane %v1054, 5
      %v1136 = vrot.slane %v1135, 4
      %v1137 = vrot.slane %v212, 5
      %v1138 = vsel %vm1099, %v1136, %v1137
      %v1139 = vrot.slane %v1137, 4
      %v1140 = vrot.slane %v239, 5
      %v1141 = vsel %vm1099, %v1139, %v1140
      %v1142 = vrot.slane %v1055, 5
      %v1143 = vrot.slane %v1142, 4
      %v1144 = vrot.slane %v214, 5
      %v1145 = vsel %vm1099, %v1143, %v1144
      %v1146 = vrot.slane %v1144, 4
      %v1147 = vrot.slane %v240, 5
      %v1148 = vsel %vm1099, %v1146, %v1147
      %v1149 = vrot.slane %v1056, 5
      %v1150 = vrot.slane %v1149, 4
      %v1151 = vrot.slane %v216, 5
      %v1152 = vsel %vm1099, %v1150, %v1151
      %v1153 = vrot.slane %v1151, 4
      %v1154 = vrot.slane %v241, 5
      %v1155 = vsel %vm1099, %v1153, %v1154
      %v1156 = vrot.slane %v1057, 5
      %v1157 = vrot.slane %v1156, 4
      %v1158 = vrot.slane %v218, 5
      %v1159 = vsel %vm1099, %v1157, %v1158
      %v1160 = vrot.slane %v1158, 4
      %v1161 = vrot.slane %v242, 5
      %v1162 = vsel %vm1099, %v1160, %v1161
      %v1163 = vrot.slane %v1058, 5
      %v1164 = vrot.slane %v1163, 4
      %v1165 = vrot.slane %v220, 5
      %v1166 = vsel %vm1099, %v1164, %v1165
      %v1167 = vrot.slane %v1165, 4
      %v1168 = vrot.slane %v243, 5
      %v1169 = vsel %vm1099, %v1167, %v1168
      %v1170 = vrot.slane %v1059, 5
      %v1171 = vrot.slane %v1170, 4
      %v1172 = vrot.slane %v222, 5
      %v1173 = vsel %vm1099, %v1171, %v1172
      %v1174 = vrot.slane %v1172, 4
      %v1175 = vrot.slane %v244, 5
      %v1176 = vsel %vm1099, %v1174, %v1175
      %v1177 = vrot.slane %v1060, 5
      %v1178 = vrot.slane %v1177, 4
      %v1179 = vrot.slane %v224, 5
      %v1180 = vsel %vm1099, %v1178, %v1179
      %v1181 = vrot.slane %v1179, 4
      %v1182 = vrot.slane %v245, 5
      %v1183 = vsel %vm1099, %v1181, %v1182
      %v1184 = vrot.slane %v1061, 5
      %v1185 = vrot.slane %v1184, 4
      %v1186 = vrot.slane %v226, 5
      %v1187 = vsel %vm1099, %v1185, %v1186
      %v1188 = vrot.slane %v1186, 4
      %v1189 = vrot.slane %v246, 5
      %v1190 = vsel %vm1099, %v1188, %v1189
      %v1191 = vrot.slane %v1062, 5
      %v1192 = vrot.slane %v1191, 4
      %v1193 = vrot.slane %v228, 5
      %v1194 = vsel %vm1099, %v1192, %v1193
      %v1195 = vrot.slane %v1193, 4
      %v1196 = vrot.slane %v247, 5
      %v1197 = vsel %vm1099, %v1195, %v1196
      %v1198 = vrot.slane %v1063, 5
      %v1199 = vrot.slane %v1198, 4
      %v1200 = vrot.slane %v230, 5
      %v1201 = vsel %vm1099, %v1199, %v1200
      %v1202 = vrot.slane %v1200, 4
      %v1203 = vrot.slane %v248, 5
      %v1204 = vsel %vm1099, %v1202, %v1203
      %v1205 = vrot.slane %v1064, 5
      %v1206 = vrot.slane %v1205, 4
      %v1207 = vrot.slane %v232, 5
      %v1208 = vsel %vm1099, %v1206, %v1207
      %v1209 = vrot.slane %v1207, 4
      %v1210 = vrot.slane %v249, 5
      %v1211 = vsel %vm1099, %v1209, %v1210
      %s1212 = scalar_lea.vmem %s1, 4
      %v1213 = vld [vmem:[%s1212] sm:$0x3]
      %v1214 = vunpack.c.l.b16 %v1103
      %v1215 = vunpack.c.l.b16 %v1106
      %v1216 = vunpack.c.l.b16 %v1110
      %v1217 = vunpack.c.l.b16 %v1113
      %v1218 = vunpack.c.l.b16 %v1117
      %v1219 = vunpack.c.l.b16 %v1120
      %v1220 = vunpack.c.l.b16 %v1124
      %v1221 = vunpack.c.l.b16 %v1127
      %v1222 = vunpack.c.l.b16 %v1131
      %v1223 = vunpack.c.l.b16 %v1134
      %v1224 = vunpack.c.l.b16 %v1138
      %v1225 = vunpack.c.l.b16 %v1141
      %v1226 = vunpack.c.l.b16 %v1145
      %v1227 = vunpack.c.l.b16 %v1148
      %v1228 = vunpack.c.l.b16 %v1152
      %v1229 = vunpack.c.l.b16 %v1155
      %v1230 = vunpack.c.l.b16 %v1159
      %v1231 = vunpack.c.l.b16 %v1162
      %v1232 = vunpack.c.l.b16 %v1166
      %v1233 = vunpack.c.l.b16 %v1169
      %v1234 = vunpack.c.l.b16 %v1173
      %v1235 = vunpack.c.l.b16 %v1176
      %v1236 = vunpack.c.l.b16 %v1180
      %v1237 = vunpack.c.l.b16 %v1183
      %v1238 = vunpack.c.l.b16 %v1187
      %v1239 = vunpack.c.l.b16 %v1190
      %v1240 = vunpack.c.l.b16 %v1194
      %v1241 = vunpack.c.l.b16 %v1197
      %v1242 = vunpack.c.l.b16 %v1201
      %v1243 = vunpack.c.l.b16 %v1204
      %v1244 = vunpack.c.l.b16 %v1208
      %v1245 = vunpack.c.l.b16 %v1211
      %v1246 = vpack.c.b16 %v1215, %v1214
      %v1247 = vpack.c.b16 %v1217, %v1216
      %v1248 = vpack.c.b16 %v1219, %v1218
      %v1249 = vpack.c.b16 %v1221, %v1220
      %v1250 = vpack.c.b16 %v1223, %v1222
      %v1251 = vpack.c.b16 %v1225, %v1224
      %v1252 = vpack.c.b16 %v1227, %v1226
      %v1253 = vpack.c.b16 %v1229, %v1228
      %v1254 = vpack.c.b16 %v1231, %v1230
      %v1255 = vpack.c.b16 %v1233, %v1232
      %v1256 = vpack.c.b16 %v1235, %v1234
      %v1257 = vpack.c.b16 %v1237, %v1236
      %v1258 = vpack.c.b16 %v1239, %v1238
      %v1259 = vpack.c.b16 %v1241, %v1240
      %v1260 = vpack.c.b16 %v1243, %v1242
      %v1261 = vpack.c.b16 %v1245, %v1244
      %v1263 = vsel %vm687, %v1246, 0
      %v1266 = vsel %vm687, %v1247, 0
      %v1269 = vsel %vm687, %v1248, 0
      %v1272 = vsel %vm687, %v1249, 0
      %v1275 = vsel %vm687, %v1250, 0
      %v1278 = vsel %vm687, %v1251, 0
      %v1281 = vsel %vm687, %v1252, 0
      %v1284 = vsel %vm687, %v1253, 0
      %v1287 = vsel %vm687, %v1254, 0
      %v1290 = vsel %vm687, %v1255, 0
      %v1293 = vsel %vm687, %v1256, 0
      %v1296 = vsel %vm687, %v1257, 0
      %v1299 = vsel %vm687, %v1258, 0
      %v1302 = vsel %vm687, %v1259, 0
      %v1305 = vsel %vm687, %v1260, 0
      %v1308 = vsel %vm687, %v1261, 0
      %v1311 = vsel %vm736, %v1213, 0
      %1313 = vmatpush.bf16.msra.mxu0 0
      %1314 = vmatpush.bf16.msra.mxu0 0
      %1315 = vmatpush.bf16.msra.mxu0 0
      %1316 = vmatpush.bf16.msra.mxu0 0
      %1317 = vmatpush.bf16.msra.mxu0 0
      %1318 = vmatpush.bf16.msra.mxu0 0
      %1319 = vmatpush.bf16.msra.mxu0 0
      %1320 = vmatpush.bf16.msra.mxu0 %v1311
      %1321 = vmatmul.bf16.gmra.mxu0 %v1263
      %v1322 = vpop.f32.mrf.mxu0
      %v1323 = vadd.f32 0.0, %v1322
      %v1324 = vpop.f32.mrf.mxu0
      %v1325 = vadd.f32 0.0, %v1324
      %1326 = vmatmul.bf16.gmra.mxu0 %v1266
      %v1327 = vpop.f32.mrf.mxu0
      %v1328 = vadd.f32 0.0, %v1327
      %v1329 = vpop.f32.mrf.mxu0
      %v1330 = vadd.f32 0.0, %v1329
      %1331 = vmatmul.bf16.gmra.mxu0 %v1269
      %v1332 = vpop.f32.mrf.mxu0
      %v1333 = vadd.f32 0.0, %v1332
      %v1334 = vpop.f32.mrf.mxu0
      %v1335 = vadd.f32 0.0, %v1334
      %1336 = vmatmul.bf16.gmra.mxu0 %v1272
      %v1337 = vpop.f32.mrf.mxu0
      %v1338 = vadd.f32 0.0, %v1337
      %v1339 = vpop.f32.mrf.mxu0
      %v1340 = vadd.f32 0.0, %v1339
      %1341 = vmatmul.bf16.gmra.mxu0 %v1275
      %v1342 = vpop.f32.mrf.mxu0
      %v1343 = vadd.f32 0.0, %v1342
      %v1344 = vpop.f32.mrf.mxu0
      %v1345 = vadd.f32 0.0, %v1344
      %1346 = vmatmul.bf16.gmra.mxu0 %v1278
      %v1347 = vpop.f32.mrf.mxu0
      %v1348 = vadd.f32 0.0, %v1347
      %v1349 = vpop.f32.mrf.mxu0
      %v1350 = vadd.f32 0.0, %v1349
      %1351 = vmatmul.bf16.gmra.mxu0 %v1281
      %v1352 = vpop.f32.mrf.mxu0
      %v1353 = vadd.f32 0.0, %v1352
      %v1354 = vpop.f32.mrf.mxu0
      %v1355 = vadd.f32 0.0, %v1354
      %1356 = vmatmul.bf16.gmra.mxu0 %v1284
      %v1357 = vpop.f32.mrf.mxu0
      %v1358 = vadd.f32 0.0, %v1357
      %v1359 = vpop.f32.mrf.mxu0
      %v1360 = vadd.f32 0.0, %v1359
      %1361 = vmatmul.bf16.gmra.mxu0 %v1287
      %v1362 = vpop.f32.mrf.mxu0
      %v1363 = vadd.f32 0.0, %v1362
      %v1364 = vpop.f32.mrf.mxu0
      %v1365 = vadd.f32 0.0, %v1364
      %1366 = vmatmul.bf16.gmra.mxu0 %v1290
      %v1367 = vpop.f32.mrf.mxu0
      %v1368 = vadd.f32 0.0, %v1367
      %v1369 = vpop.f32.mrf.mxu0
      %v1370 = vadd.f32 0.0, %v1369
      %1371 = vmatmul.bf16.gmra.mxu0 %v1293
      %v1372 = vpop.f32.mrf.mxu0
      %v1373 = vadd.f32 0.0, %v1372
      %v1374 = vpop.f32.mrf.mxu0
      %v1375 = vadd.f32 0.0, %v1374
      %1376 = vmatmul.bf16.gmra.mxu0 %v1296
      %v1377 = vpop.f32.mrf.mxu0
      %v1378 = vadd.f32 0.0, %v1377
      %v1379 = vpop.f32.mrf.mxu0
      %v1380 = vadd.f32 0.0, %v1379
      %1381 = vmatmul.bf16.gmra.mxu0 %v1299
      %v1382 = vpop.f32.mrf.mxu0
      %v1383 = vadd.f32 0.0, %v1382
      %v1384 = vpop.f32.mrf.mxu0
      %v1385 = vadd.f32 0.0, %v1384
      %1386 = vmatmul.bf16.gmra.mxu0 %v1302
      %v1387 = vpop.f32.mrf.mxu0
      %v1388 = vadd.f32 0.0, %v1387
      %v1389 = vpop.f32.mrf.mxu0
      %v1390 = vadd.f32 0.0, %v1389
      %1391 = vmatmul.bf16.gmra.mxu0 %v1305
      %v1392 = vpop.f32.mrf.mxu0
      %v1393 = vadd.f32 0.0, %v1392
      %v1394 = vpop.f32.mrf.mxu0
      %v1395 = vadd.f32 0.0, %v1394
      %1396 = vmatmul.bf16.gmra.mxu0 %v1308
      %v1397 = vpop.f32.mrf.mxu0
      %v1398 = vadd.f32 0.0, %v1397
      %v1399 = vpop.f32.mrf.mxu0
      %v1400 = vadd.f32 0.0, %v1399
      %1401 = vdwg.mxu0
      %v1402 = vadd.f32 %v970, %v1323
      %v1403 = vadd.f32 %v972, %v1325
      %v1404 = vadd.f32 %v975, %v1328
      %v1405 = vadd.f32 %v977, %v1330
      %v1406 = vadd.f32 %v980, %v1333
      %v1407 = vadd.f32 %v982, %v1335
      %v1408 = vadd.f32 %v985, %v1338
      %v1409 = vadd.f32 %v987, %v1340
      %v1410 = vadd.f32 %v990, %v1343
      %v1411 = vadd.f32 %v992, %v1345
      %v1412 = vadd.f32 %v995, %v1348
      %v1413 = vadd.f32 %v997, %v1350
      %v1414 = vadd.f32 %v1000, %v1353
      %v1415 = vadd.f32 %v1002, %v1355
      %v1416 = vadd.f32 %v1005, %v1358
      %v1417 = vadd.f32 %v1007, %v1360
      %v1418 = vadd.f32 %v1010, %v1363
      %v1419 = vadd.f32 %v1012, %v1365
      %v1420 = vadd.f32 %v1015, %v1368
      %v1421 = vadd.f32 %v1017, %v1370
      %v1422 = vadd.f32 %v1020, %v1373
      %v1423 = vadd.f32 %v1022, %v1375
      %v1424 = vadd.f32 %v1025, %v1378
      %v1425 = vadd.f32 %v1027, %v1380
      %v1426 = vadd.f32 %v1030, %v1383
      %v1427 = vadd.f32 %v1032, %v1385
      %v1428 = vadd.f32 %v1035, %v1388
      %v1429 = vadd.f32 %v1037, %v1390
      %v1430 = vadd.f32 %v1040, %v1393
      %v1431 = vadd.f32 %v1042, %v1395
      %v1432 = vadd.f32 %v1045, %v1398
      %v1433 = vadd.f32 %v1047, %v1400
      %s1434 = sadd.s32 %s197, 1
      %s1435 = smul.u32 %s1434, 3
      %s1436 = smul.addr %s1435, 4
      %s1437 = scalar_lea.vmem %s184, %s1436
      %v1438 = vld [vmem:[%s1437] sm:$0xf]
      %v1439 = vld [vmem:[%s1437 + $0x4] sm:$0xf]
      %v1440 = vld [vmem:[%s1437 + $0xc] sm:$0xf]
      %v1441 = vld [vmem:[%s1437 + $0x10] sm:$0xf]
      %v1442 = vld [vmem:[%s1437 + $0x18] sm:$0xf]
      %v1443 = vld [vmem:[%s1437 + $0x1c] sm:$0xf]
      %v1444 = vld [vmem:[%s1437 + $0x24] sm:$0xf]
      %v1445 = vld [vmem:[%s1437 + $0x28] sm:$0xf]
      %v1446 = vld [vmem:[%s1437 + $0x30] sm:$0xf]
      %v1447 = vld [vmem:[%s1437 + $0x34] sm:$0xf]
      %v1448 = vld [vmem:[%s1437 + $0x3c] sm:$0xf]
      %v1449 = vld [vmem:[%s1437 + $0x40] sm:$0xf]
      %v1450 = vld [vmem:[%s1437 + $0x48] sm:$0xf]
      %v1451 = vld [vmem:[%s1437 + $0x4c] sm:$0xf]
      %v1452 = vld [vmem:[%s1437 + $0x54] sm:$0xf]
      %v1453 = vld [vmem:[%s1437 + $0x58] sm:$0xf]
      %v1454 = vld [vmem:[%s1437 + $0x60] sm:$0xf]
      %v1455 = vld [vmem:[%s1437 + $0x64] sm:$0xf]
      %v1456 = vld [vmem:[%s1437 + $0x6c] sm:$0xf]
      %v1457 = vld [vmem:[%s1437 + $0x70] sm:$0xf]
      %v1458 = vld [vmem:[%s1437 + $0x78] sm:$0xf]
      %v1459 = vld [vmem:[%s1437 + $0x7c] sm:$0xf]
      %v1460 = vld [vmem:[%s1437 + $0x84] sm:$0xf]
      %v1461 = vld [vmem:[%s1437 + $0x88] sm:$0xf]
      %v1462 = vld [vmem:[%s1437 + $0x90] sm:$0xf]
      %v1463 = vld [vmem:[%s1437 + $0x94] sm:$0xf]
      %v1464 = vld [vmem:[%s1437 + $0x9c] sm:$0xf]
      %v1465 = vld [vmem:[%s1437 + $0xa0] sm:$0xf]
      %v1466 = vld [vmem:[%s1437 + $0xa8] sm:$0xf]
      %v1467 = vld [vmem:[%s1437 + $0xac] sm:$0xf]
      %v1468 = vld [vmem:[%s1437 + $0xb4] sm:$0xf]
      %v1469 = vld [vmem:[%s1437 + $0xb8] sm:$0xf]
      %s1470 = scalar_lea.vmem %s1, 6
      %v1471 = vld [vmem:[%s1470] sm:$0x3]
      %v1504 = vunpack.c.l.b16 %v1438
      %v1505 = vunpack.c.l.b16 %v1439
      %v1506 = vunpack.c.l.b16 %v1440
      %v1507 = vunpack.c.l.b16 %v1441
      %v1508 = vunpack.c.l.b16 %v1442
      %v1509 = vunpack.c.l.b16 %v1443
      %v1510 = vunpack.c.l.b16 %v1444
      %v1511 = vunpack.c.l.b16 %v1445
      %v1512 = vunpack.c.l.b16 %v1446
      %v1513 = vunpack.c.l.b16 %v1447
      %v1514 = vunpack.c.l.b16 %v1448
      %v1515 = vunpack.c.l.b16 %v1449
      %v1516 = vunpack.c.l.b16 %v1450
      %v1517 = vunpack.c.l.b16 %v1451
      %v1518 = vunpack.c.l.b16 %v1452
      %v1519 = vunpack.c.l.b16 %v1453
      %v1520 = vunpack.c.l.b16 %v1454
      %v1521 = vunpack.c.l.b16 %v1455
      %v1522 = vunpack.c.l.b16 %v1456
      %v1523 = vunpack.c.l.b16 %v1457
      %v1524 = vunpack.c.l.b16 %v1458
      %v1525 = vunpack.c.l.b16 %v1459
      %v1526 = vunpack.c.l.b16 %v1460
      %v1527 = vunpack.c.l.b16 %v1461
      %v1528 = vunpack.c.l.b16 %v1462
      %v1529 = vunpack.c.l.b16 %v1463
      %v1530 = vunpack.c.l.b16 %v1464
      %v1531 = vunpack.c.l.b16 %v1465
      %v1532 = vunpack.c.l.b16 %v1466
      %v1533 = vunpack.c.l.b16 %v1467
      %v1534 = vunpack.c.l.b16 %v1468
      %v1535 = vunpack.c.l.b16 %v1469
      %v1536 = vpack.c.b16 %v1505, %v1504
      %v1537 = vpack.c.b16 %v1507, %v1506
      %v1538 = vpack.c.b16 %v1509, %v1508
      %v1539 = vpack.c.b16 %v1511, %v1510
      %v1540 = vpack.c.b16 %v1513, %v1512
      %v1541 = vpack.c.b16 %v1515, %v1514
      %v1542 = vpack.c.b16 %v1517, %v1516
      %v1543 = vpack.c.b16 %v1519, %v1518
      %v1544 = vpack.c.b16 %v1521, %v1520
      %v1545 = vpack.c.b16 %v1523, %v1522
      %v1546 = vpack.c.b16 %v1525, %v1524
      %v1547 = vpack.c.b16 %v1527, %v1526
      %v1548 = vpack.c.b16 %v1529, %v1528
      %v1549 = vpack.c.b16 %v1531, %v1530
      %v1550 = vpack.c.b16 %v1533, %v1532
      %v1551 = vpack.c.b16 %v1535, %v1534
      %v1553 = vsel %vm687, %v1536, 0
      %v1556 = vsel %vm687, %v1537, 0
      %v1559 = vsel %vm687, %v1538, 0
      %v1562 = vsel %vm687, %v1539, 0
      %v1565 = vsel %vm687, %v1540, 0
      %v1568 = vsel %vm687, %v1541, 0
      %v1571 = vsel %vm687, %v1542, 0
      %v1574 = vsel %vm687, %v1543, 0
      %v1577 = vsel %vm687, %v1544, 0
      %v1580 = vsel %vm687, %v1545, 0
      %v1583 = vsel %vm687, %v1546, 0
      %v1586 = vsel %vm687, %v1547, 0
      %v1589 = vsel %vm687, %v1548, 0
      %v1592 = vsel %vm687, %v1549, 0
      %v1595 = vsel %vm687, %v1550, 0
      %v1598 = vsel %vm687, %v1551, 0
      %v1601 = vsel %vm736, %v1471, 0
      %1603 = vmatpush.bf16.msra.mxu0 0
      %1604 = vmatpush.bf16.msra.mxu0 0
      %1605 = vmatpush.bf16.msra.mxu0 0
      %1606 = vmatpush.bf16.msra.mxu0 0
      %1607 = vmatpush.bf16.msra.mxu0 0
      %1608 = vmatpush.bf16.msra.mxu0 0
      %1609 = vmatpush.bf16.msra.mxu0 0
      %1610 = vmatpush.bf16.msra.mxu0 %v1601
      %1611 = vmatmul.bf16.gmra.mxu0 %v1553
      %v1612 = vpop.f32.mrf.mxu0
      %v1613 = vadd.f32 0.0, %v1612
      %v1614 = vpop.f32.mrf.mxu0
      %v1615 = vadd.f32 0.0, %v1614
      %1616 = vmatmul.bf16.gmra.mxu0 %v1556
      %v1617 = vpop.f32.mrf.mxu0
      %v1618 = vadd.f32 0.0, %v1617
      %v1619 = vpop.f32.mrf.mxu0
      %v1620 = vadd.f32 0.0, %v1619
      %1621 = vmatmul.bf16.gmra.mxu0 %v1559
      %v1622 = vpop.f32.mrf.mxu0
      %v1623 = vadd.f32 0.0, %v1622
      %v1624 = vpop.f32.mrf.mxu0
      %v1625 = vadd.f32 0.0, %v1624
      %1626 = vmatmul.bf16.gmra.mxu0 %v1562
      %v1627 = vpop.f32.mrf.mxu0
      %v1628 = vadd.f32 0.0, %v1627
      %v1629 = vpop.f32.mrf.mxu0
      %v1630 = vadd.f32 0.0, %v1629
      %1631 = vmatmul.bf16.gmra.mxu0 %v1565
      %v1632 = vpop.f32.mrf.mxu0
      %v1633 = vadd.f32 0.0, %v1632
      %v1634 = vpop.f32.mrf.mxu0
      %v1635 = vadd.f32 0.0, %v1634
      %1636 = vmatmul.bf16.gmra.mxu0 %v1568
      %v1637 = vpop.f32.mrf.mxu0
      %v1638 = vadd.f32 0.0, %v1637
      %v1639 = vpop.f32.mrf.mxu0
      %v1640 = vadd.f32 0.0, %v1639
      %1641 = vmatmul.bf16.gmra.mxu0 %v1571
      %v1642 = vpop.f32.mrf.mxu0
      %v1643 = vadd.f32 0.0, %v1642
      %v1644 = vpop.f32.mrf.mxu0
      %v1645 = vadd.f32 0.0, %v1644
      %1646 = vmatmul.bf16.gmra.mxu0 %v1574
      %v1647 = vpop.f32.mrf.mxu0
      %v1648 = vadd.f32 0.0, %v1647
      %v1649 = vpop.f32.mrf.mxu0
      %v1650 = vadd.f32 0.0, %v1649
      %1651 = vmatmul.bf16.gmra.mxu0 %v1577
      %v1652 = vpop.f32.mrf.mxu0
      %v1653 = vadd.f32 0.0, %v1652
      %v1654 = vpop.f32.mrf.mxu0
      %v1655 = vadd.f32 0.0, %v1654
      %1656 = vmatmul.bf16.gmra.mxu0 %v1580
      %v1657 = vpop.f32.mrf.mxu0
      %v1658 = vadd.f32 0.0, %v1657
      %v1659 = vpop.f32.mrf.mxu0
      %v1660 = vadd.f32 0.0, %v1659
      %1661 = vmatmul.bf16.gmra.mxu0 %v1583
      %v1662 = vpop.f32.mrf.mxu0
      %v1663 = vadd.f32 0.0, %v1662
      %v1664 = vpop.f32.mrf.mxu0
      %v1665 = vadd.f32 0.0, %v1664
      %1666 = vmatmul.bf16.gmra.mxu0 %v1586
      %v1667 = vpop.f32.mrf.mxu0
      %v1668 = vadd.f32 0.0, %v1667
      %v1669 = vpop.f32.mrf.mxu0
      %v1670 = vadd.f32 0.0, %v1669
      %1671 = vmatmul.bf16.gmra.mxu0 %v1589
      %v1672 = vpop.f32.mrf.mxu0
      %v1673 = vadd.f32 0.0, %v1672
      %v1674 = vpop.f32.mrf.mxu0
      %v1675 = vadd.f32 0.0, %v1674
      %1676 = vmatmul.bf16.gmra.mxu0 %v1592
      %v1677 = vpop.f32.mrf.mxu0
      %v1678 = vadd.f32 0.0, %v1677
      %v1679 = vpop.f32.mrf.mxu0
      %v1680 = vadd.f32 0.0, %v1679
      %1681 = vmatmul.bf16.gmra.mxu0 %v1595
      %v1682 = vpop.f32.mrf.mxu0
      %v1683 = vadd.f32 0.0, %v1682
      %v1684 = vpop.f32.mrf.mxu0
      %v1685 = vadd.f32 0.0, %v1684
      %1686 = vmatmul.bf16.gmra.mxu0 %v1598
      %v1687 = vpop.f32.mrf.mxu0
      %v1688 = vadd.f32 0.0, %v1687
      %v1689 = vpop.f32.mrf.mxu0
      %v1690 = vadd.f32 0.0, %v1689
      %1691 = vdwg.mxu0
      %v1692 = vadd.f32 %v1402, %v1613
      %v1693 = vadd.f32 %v1403, %v1615
      %v1694 = vadd.f32 %v1404, %v1618
      %v1695 = vadd.f32 %v1405, %v1620
      %v1696 = vadd.f32 %v1406, %v1623
      %v1697 = vadd.f32 %v1407, %v1625
      %v1698 = vadd.f32 %v1408, %v1628
      %v1699 = vadd.f32 %v1409, %v1630
      %v1700 = vadd.f32 %v1410, %v1633
      %v1701 = vadd.f32 %v1411, %v1635
      %v1702 = vadd.f32 %v1412, %v1638
      %v1703 = vadd.f32 %v1413, %v1640
      %v1704 = vadd.f32 %v1414, %v1643
      %v1705 = vadd.f32 %v1415, %v1645
      %v1706 = vadd.f32 %v1416, %v1648
      %v1707 = vadd.f32 %v1417, %v1650
      %v1708 = vadd.f32 %v1418, %v1653
      %v1709 = vadd.f32 %v1419, %v1655
      %v1710 = vadd.f32 %v1420, %v1658
      %v1711 = vadd.f32 %v1421, %v1660
      %v1712 = vadd.f32 %v1422, %v1663
      %v1713 = vadd.f32 %v1423, %v1665
      %v1714 = vadd.f32 %v1424, %v1668
      %v1715 = vadd.f32 %v1425, %v1670
      %v1716 = vadd.f32 %v1426, %v1673
      %v1717 = vadd.f32 %v1427, %v1675
      %v1718 = vadd.f32 %v1428, %v1678
      %v1719 = vadd.f32 %v1429, %v1680
      %v1720 = vadd.f32 %v1430, %v1683
      %v1721 = vadd.f32 %v1431, %v1685
      %v1722 = vadd.f32 %v1432, %v1688
      %v1723 = vadd.f32 %v1433, %v1690
      %v1724 = vld [vmem:[%s1437] sm:$0xf]
      %v1725 = vld [vmem:[%s1437 + $0x4] sm:$0xf]
      %v1726 = vld [vmem:[%s1437 + $0x8] sm:$0x1]
      %v1727 = vld [vmem:[%s1437 + $0xc] sm:$0xf]
      %v1728 = vld [vmem:[%s1437 + $0x10] sm:$0xf]
      %v1729 = vld [vmem:[%s1437 + $0x14] sm:$0x1]
      %v1730 = vld [vmem:[%s1437 + $0x18] sm:$0xf]
      %v1731 = vld [vmem:[%s1437 + $0x1c] sm:$0xf]
      %v1732 = vld [vmem:[%s1437 + $0x20] sm:$0x1]
      %v1733 = vld [vmem:[%s1437 + $0x24] sm:$0xf]
      %v1734 = vld [vmem:[%s1437 + $0x28] sm:$0xf]
      %v1735 = vld [vmem:[%s1437 + $0x2c] sm:$0x1]
      %v1736 = vld [vmem:[%s1437 + $0x30] sm:$0xf]
      %v1737 = vld [vmem:[%s1437 + $0x34] sm:$0xf]
      %v1738 = vld [vmem:[%s1437 + $0x38] sm:$0x1]
      %v1739 = vld [vmem:[%s1437 + $0x3c] sm:$0xf]
      %v1740 = vld [vmem:[%s1437 + $0x40] sm:$0xf]
      %v1741 = vld [vmem:[%s1437 + $0x44] sm:$0x1]
      %v1742 = vld [vmem:[%s1437 + $0x48] sm:$0xf]
      %v1743 = vld [vmem:[%s1437 + $0x4c] sm:$0xf]
      %v1744 = vld [vmem:[%s1437 + $0x50] sm:$0x1]
      %v1745 = vld [vmem:[%s1437 + $0x54] sm:$0xf]
      %v1746 = vld [vmem:[%s1437 + $0x58] sm:$0xf]
      %v1747 = vld [vmem:[%s1437 + $0x5c] sm:$0x1]
      %v1748 = vld [vmem:[%s1437 + $0x60] sm:$0xf]
      %v1749 = vld [vmem:[%s1437 + $0x64] sm:$0xf]
      %v1750 = vld [vmem:[%s1437 + $0x68] sm:$0x1]
      %v1751 = vld [vmem:[%s1437 + $0x6c] sm:$0xf]
      %v1752 = vld [vmem:[%s1437 + $0x70] sm:$0xf]
      %v1753 = vld [vmem:[%s1437 + $0x74] sm:$0x1]
      %v1754 = vld [vmem:[%s1437 + $0x78] sm:$0xf]
      %v1755 = vld [vmem:[%s1437 + $0x7c] sm:$0xf]
      %v1756 = vld [vmem:[%s1437 + $0x80] sm:$0x1]
      %v1757 = vld [vmem:[%s1437 + $0x84] sm:$0xf]
      %v1758 = vld [vmem:[%s1437 + $0x88] sm:$0xf]
      %v1759 = vld [vmem:[%s1437 + $0x8c] sm:$0x1]
      %v1760 = vld [vmem:[%s1437 + $0x90] sm:$0xf]
      %v1761 = vld [vmem:[%s1437 + $0x94] sm:$0xf]
      %v1762 = vld [vmem:[%s1437 + $0x98] sm:$0x1]
      %v1763 = vld [vmem:[%s1437 + $0x9c] sm:$0xf]
      %v1764 = vld [vmem:[%s1437 + $0xa0] sm:$0xf]
      %v1765 = vld [vmem:[%s1437 + $0xa4] sm:$0x1]
      %v1766 = vld [vmem:[%s1437 + $0xa8] sm:$0xf]
      %v1767 = vld [vmem:[%s1437 + $0xac] sm:$0xf]
      %v1768 = vld [vmem:[%s1437 + $0xb0] sm:$0x1]
      %v1769 = vld [vmem:[%s1437 + $0xb4] sm:$0xf]
      %v1770 = vld [vmem:[%s1437 + $0xb8] sm:$0xf]
      %v1771 = vld [vmem:[%s1437 + $0xbc] sm:$0x1]
      %v1773 = vshrl.u32 %v1724, 16
      %v1775 = vrot.slane %v1773, 4
      %v1776 = vshll.u32 %v1724, 16
      %v1778 = vrot.slane %v1776, 5
      %v1779 = vor.u32 %v1775, %v1778
      %v1780 = vrot.slane %v1779, 4
      %v1782 = vshll.u32 %v1725, 16
      %v1784 = vrot.slane %v1782, 5
      %v1785 = vsel %vm252, %v1780, %v1784
      %v1786 = vshrl.u32 %v1725, 16
      %v1788 = vrot.slane %v1786, 4
      %v1789 = vor.u32 %v1788, %v1784
      %v1790 = vrot.slane %v1789, 4
      %v1792 = vshll.u32 %v1726, 16
      %v1794 = vrot.slane %v1792, 5
      %v1795 = vsel %vm252, %v1790, %v1794
      %v1797 = vshrl.u32 %v1727, 16
      %v1799 = vrot.slane %v1797, 4
      %v1800 = vshll.u32 %v1727, 16
      %v1802 = vrot.slane %v1800, 5
      %v1803 = vor.u32 %v1799, %v1802
      %v1804 = vrot.slane %v1803, 4
      %v1806 = vshll.u32 %v1728, 16
      %v1808 = vrot.slane %v1806, 5
      %v1809 = vsel %vm252, %v1804, %v1808
      %v1810 = vshrl.u32 %v1728, 16
      %v1812 = vrot.slane %v1810, 4
      %v1813 = vor.u32 %v1812, %v1808
      %v1814 = vrot.slane %v1813, 4
      %v1816 = vshll.u32 %v1729, 16
      %v1818 = vrot.slane %v1816, 5
      %v1819 = vsel %vm252, %v1814, %v1818
      %v1821 = vshrl.u32 %v1730, 16
      %v1823 = vrot.slane %v1821, 4
      %v1824 = vshll.u32 %v1730, 16
      %v1826 = vrot.slane %v1824, 5
      %v1827 = vor.u32 %v1823, %v1826
      %v1828 = vrot.slane %v1827, 4
      %v1830 = vshll.u32 %v1731, 16
      %v1832 = vrot.slane %v1830, 5
      %v1833 = vsel %vm252, %v1828, %v1832
      %v1834 = vshrl.u32 %v1731, 16
      %v1836 = vrot.slane %v1834, 4
      %v1837 = vor.u32 %v1836, %v1832
      %v1838 = vrot.slane %v1837, 4
      %v1840 = vshll.u32 %v1732, 16
      %v1842 = vrot.slane %v1840, 5
      %v1843 = vsel %vm252, %v1838, %v1842
      %v1845 = vshrl.u32 %v1733, 16
      %v1847 = vrot.slane %v1845, 4
      %v1848 = vshll.u32 %v1733, 16
      %v1850 = vrot.slane %v1848, 5
      %v1851 = vor.u32 %v1847, %v1850
      %v1852 = vrot.slane %v1851, 4
      %v1854 = vshll.u32 %v1734, 16
      %v1856 = vrot.slane %v1854, 5
      %v1857 = vsel %vm252, %v1852, %v1856
      %v1858 = vshrl.u32 %v1734, 16
      %v1860 = vrot.slane %v1858, 4
      %v1861 = vor.u32 %v1860, %v1856
      %v1862 = vrot.slane %v1861, 4
      %v1864 = vshll.u32 %v1735, 16
      %v1866 = vrot.slane %v1864, 5
      %v1867 = vsel %vm252, %v1862, %v1866
      %v1869 = vshrl.u32 %v1736, 16
      %v1871 = vrot.slane %v1869, 4
      %v1872 = vshll.u32 %v1736, 16
      %v1874 = vrot.slane %v1872, 5
      %v1875 = vor.u32 %v1871, %v1874
      %v1876 = vrot.slane %v1875, 4
      %v1878 = vshll.u32 %v1737, 16
      %v1880 = vrot.slane %v1878, 5
      %v1881 = vsel %vm252, %v1876, %v1880
      %v1882 = vshrl.u32 %v1737, 16
      %v1884 = vrot.slane %v1882, 4
      %v1885 = vor.u32 %v1884, %v1880
      %v1886 = vrot.slane %v1885, 4
      %v1888 = vshll.u32 %v1738, 16
      %v1890 = vrot.slane %v1888, 5
      %v1891 = vsel %vm252, %v1886, %v1890
      %v1893 = vshrl.u32 %v1739, 16
      %v1895 = vrot.slane %v1893, 4
      %v1896 = vshll.u32 %v1739, 16
      %v1898 = vrot.slane %v1896, 5
      %v1899 = vor.u32 %v1895, %v1898
      %v1900 = vrot.slane %v1899, 4
      %v1902 = vshll.u32 %v1740, 16
      %v1904 = vrot.slane %v1902, 5
      %v1905 = vsel %vm252, %v1900, %v1904
      %v1906 = vshrl.u32 %v1740, 16
      %v1908 = vrot.slane %v1906, 4
      %v1909 = vor.u32 %v1908, %v1904
      %v1910 = vrot.slane %v1909, 4
      %v1912 = vshll.u32 %v1741, 16
      %v1914 = vrot.slane %v1912, 5
      %v1915 = vsel %vm252, %v1910, %v1914
      %v1917 = vshrl.u32 %v1742, 16
      %v1919 = vrot.slane %v1917, 4
      %v1920 = vshll.u32 %v1742, 16
      %v1922 = vrot.slane %v1920, 5
      %v1923 = vor.u32 %v1919, %v1922
      %v1924 = vrot.slane %v1923, 4
      %v1926 = vshll.u32 %v1743, 16
      %v1928 = vrot.slane %v1926, 5
      %v1929 = vsel %vm252, %v1924, %v1928
      %v1930 = vshrl.u32 %v1743, 16
      %v1932 = vrot.slane %v1930, 4
      %v1933 = vor.u32 %v1932, %v1928
      %v1934 = vrot.slane %v1933, 4
      %v1936 = vshll.u32 %v1744, 16
      %v1938 = vrot.slane %v1936, 5
      %v1939 = vsel %vm252, %v1934, %v1938
      %v1941 = vshrl.u32 %v1745, 16
      %v1943 = vrot.slane %v1941, 4
      %v1944 = vshll.u32 %v1745, 16
      %v1946 = vrot.slane %v1944, 5
      %v1947 = vor.u32 %v1943, %v1946
      %v1948 = vrot.slane %v1947, 4
      %v1950 = vshll.u32 %v1746, 16
      %v1952 = vrot.slane %v1950, 5
      %v1953 = vsel %vm252, %v1948, %v1952
      %v1954 = vshrl.u32 %v1746, 16
      %v1956 = vrot.slane %v1954, 4
      %v1957 = vor.u32 %v1956, %v1952
      %v1958 = vrot.slane %v1957, 4
      %v1960 = vshll.u32 %v1747, 16
      %v1962 = vrot.slane %v1960, 5
      %v1963 = vsel %vm252, %v1958, %v1962
      %v1965 = vshrl.u32 %v1748, 16
      %v1967 = vrot.slane %v1965, 4
      %v1968 = vshll.u32 %v1748, 16
      %v1970 = vrot.slane %v1968, 5
      %v1971 = vor.u32 %v1967, %v1970
      %v1972 = vrot.slane %v1971, 4
      %v1974 = vshll.u32 %v1749, 16
      %v1976 = vrot.slane %v1974, 5
      %v1977 = vsel %vm252, %v1972, %v1976
      %v1978 = vshrl.u32 %v1749, 16
      %v1980 = vrot.slane %v1978, 4
      %v1981 = vor.u32 %v1980, %v1976
      %v1982 = vrot.slane %v1981, 4
      %v1984 = vshll.u32 %v1750, 16
      %v1986 = vrot.slane %v1984, 5
      %v1987 = vsel %vm252, %v1982, %v1986
      %v1989 = vshrl.u32 %v1751, 16
      %v1991 = vrot.slane %v1989, 4
      %v1992 = vshll.u32 %v1751, 16
      %v1994 = vrot.slane %v1992, 5
      %v1995 = vor.u32 %v1991, %v1994
      %v1996 = vrot.slane %v1995, 4
      %v1998 = vshll.u32 %v1752, 16
      %v2000 = vrot.slane %v1998, 5
      %v2001 = vsel %vm252, %v1996, %v2000
      %v2002 = vshrl.u32 %v1752, 16
      %v2004 = vrot.slane %v2002, 4
      %v2005 = vor.u32 %v2004, %v2000
      %v2006 = vrot.slane %v2005, 4
      %v2008 = vshll.u32 %v1753, 16
      %v2010 = vrot.slane %v2008, 5
      %v2011 = vsel %vm252, %v2006, %v2010
      %v2013 = vshrl.u32 %v1754, 16
      %v2015 = vrot.slane %v2013, 4
      %v2016 = vshll.u32 %v1754, 16
      %v2018 = vrot.slane %v2016, 5
      %v2019 = vor.u32 %v2015, %v2018
      %v2020 = vrot.slane %v2019, 4
      %v2022 = vshll.u32 %v1755, 16
      %v2024 = vrot.slane %v2022, 5
      %v2025 = vsel %vm252, %v2020, %v2024
      %v2026 = vshrl.u32 %v1755, 16
      %v2028 = vrot.slane %v2026, 4
      %v2029 = vor.u32 %v2028, %v2024
      %v2030 = vrot.slane %v2029, 4
      %v2032 = vshll.u32 %v1756, 16
      %v2034 = vrot.slane %v2032, 5
      %v2035 = vsel %vm252, %v2030, %v2034
      %v2037 = vshrl.u32 %v1757, 16
      %v2039 = vrot.slane %v2037, 4
      %v2040 = vshll.u32 %v1757, 16
      %v2042 = vrot.slane %v2040, 5
      %v2043 = vor.u32 %v2039, %v2042
      %v2044 = vrot.slane %v2043, 4
      %v2046 = vshll.u32 %v1758, 16
      %v2048 = vrot.slane %v2046, 5
      %v2049 = vsel %vm252, %v2044, %v2048
      %v2050 = vshrl.u32 %v1758, 16
      %v2052 = vrot.slane %v2050, 4
      %v2053 = vor.u32 %v2052, %v2048
      %v2054 = vrot.slane %v2053, 4
      %v2056 = vshll.u32 %v1759, 16
      %v2058 = vrot.slane %v2056, 5
      %v2059 = vsel %vm252, %v2054, %v2058
      %v2061 = vshrl.u32 %v1760, 16
      %v2063 = vrot.slane %v2061, 4
      %v2064 = vshll.u32 %v1760, 16
      %v2066 = vrot.slane %v2064, 5
      %v2067 = vor.u32 %v2063, %v2066
      %v2068 = vrot.slane %v2067, 4
      %v2070 = vshll.u32 %v1761, 16
      %v2072 = vrot.slane %v2070, 5
      %v2073 = vsel %vm252, %v2068, %v2072
      %v2074 = vshrl.u32 %v1761, 16
      %v2076 = vrot.slane %v2074, 4
      %v2077 = vor.u32 %v2076, %v2072
      %v2078 = vrot.slane %v2077, 4
      %v2080 = vshll.u32 %v1762, 16
      %v2082 = vrot.slane %v2080, 5
      %v2083 = vsel %vm252, %v2078, %v2082
      %v2085 = vshrl.u32 %v1763, 16
      %v2087 = vrot.slane %v2085, 4
      %v2088 = vshll.u32 %v1763, 16
      %v2090 = vrot.slane %v2088, 5
      %v2091 = vor.u32 %v2087, %v2090
      %v2092 = vrot.slane %v2091, 4
      %v2094 = vshll.u32 %v1764, 16
      %v2096 = vrot.slane %v2094, 5
      %v2097 = vsel %vm252, %v2092, %v2096
      %v2098 = vshrl.u32 %v1764, 16
      %v2100 = vrot.slane %v2098, 4
      %v2101 = vor.u32 %v2100, %v2096
      %v2102 = vrot.slane %v2101, 4
      %v2104 = vshll.u32 %v1765, 16
      %v2106 = vrot.slane %v2104, 5
      %v2107 = vsel %vm252, %v2102, %v2106
      %v2109 = vshrl.u32 %v1766, 16
      %v2111 = vrot.slane %v2109, 4
      %v2112 = vshll.u32 %v1766, 16
      %v2114 = vrot.slane %v2112, 5
      %v2115 = vor.u32 %v2111, %v2114
      %v2116 = vrot.slane %v2115, 4
      %v2118 = vshll.u32 %v1767, 16
      %v2120 = vrot.slane %v2118, 5
      %v2121 = vsel %vm252, %v2116, %v2120
      %v2122 = vshrl.u32 %v1767, 16
      %v2124 = vrot.slane %v2122, 4
      %v2125 = vor.u32 %v2124, %v2120
      %v2126 = vrot.slane %v2125, 4
      %v2128 = vshll.u32 %v1768, 16
      %v2130 = vrot.slane %v2128, 5
      %v2131 = vsel %vm252, %v2126, %v2130
      %v2133 = vshrl.u32 %v1769, 16
      %v2135 = vrot.slane %v2133, 4
      %v2136 = vshll.u32 %v1769, 16
      %v2138 = vrot.slane %v2136, 5
      %v2139 = vor.u32 %v2135, %v2138
      %v2140 = vrot.slane %v2139, 4
      %v2142 = vshll.u32 %v1770, 16
      %v2144 = vrot.slane %v2142, 5
      %v2145 = vsel %vm252, %v2140, %v2144
      %v2146 = vshrl.u32 %v1770, 16
      %v2148 = vrot.slane %v2146, 4
      %v2149 = vor.u32 %v2148, %v2144
      %v2150 = vrot.slane %v2149, 4
      %v2152 = vshll.u32 %v1771, 16
      %v2154 = vrot.slane %v2152, 5
      %v2155 = vsel %vm252, %v2150, %v2154
      %s2156 = scalar_lea.vmem %s1, 8
      %v2157 = vld [vmem:[%s2156] sm:$0x3]
      %v2158 = vunpack.c.l.b16 %v1785
      %v2159 = vunpack.c.l.b16 %v1795
      %v2160 = vunpack.c.l.b16 %v1809
      %v2161 = vunpack.c.l.b16 %v1819
      %v2162 = vunpack.c.l.b16 %v1833
      %v2163 = vunpack.c.l.b16 %v1843
      %v2164 = vunpack.c.l.b16 %v1857
      %v2165 = vunpack.c.l.b16 %v1867
      %v2166 = vunpack.c.l.b16 %v1881
      %v2167 = vunpack.c.l.b16 %v1891
      %v2168 = vunpack.c.l.b16 %v1905
      %v2169 = vunpack.c.l.b16 %v1915
      %v2170 = vunpack.c.l.b16 %v1929
      %v2171 = vunpack.c.l.b16 %v1939
      %v2172 = vunpack.c.l.b16 %v1953
      %v2173 = vunpack.c.l.b16 %v1963
      %v2174 = vunpack.c.l.b16 %v1977
      %v2175 = vunpack.c.l.b16 %v1987
      %v2176 = vunpack.c.l.b16 %v2001
      %v2177 = vunpack.c.l.b16 %v2011
      %v2178 = vunpack.c.l.b16 %v2025
      %v2179 = vunpack.c.l.b16 %v2035
      %v2180 = vunpack.c.l.b16 %v2049
      %v2181 = vunpack.c.l.b16 %v2059
      %v2182 = vunpack.c.l.b16 %v2073
      %v2183 = vunpack.c.l.b16 %v2083
      %v2184 = vunpack.c.l.b16 %v2097
      %v2185 = vunpack.c.l.b16 %v2107
      %v2186 = vunpack.c.l.b16 %v2121
      %v2187 = vunpack.c.l.b16 %v2131
      %v2188 = vunpack.c.l.b16 %v2145
      %v2189 = vunpack.c.l.b16 %v2155
      %v2190 = vpack.c.b16 %v2159, %v2158
      %v2191 = vpack.c.b16 %v2161, %v2160
      %v2192 = vpack.c.b16 %v2163, %v2162
      %v2193 = vpack.c.b16 %v2165, %v2164
      %v2194 = vpack.c.b16 %v2167, %v2166
      %v2195 = vpack.c.b16 %v2169, %v2168
      %v2196 = vpack.c.b16 %v2171, %v2170
      %v2197 = vpack.c.b16 %v2173, %v2172
      %v2198 = vpack.c.b16 %v2175, %v2174
      %v2199 = vpack.c.b16 %v2177, %v2176
      %v2200 = vpack.c.b16 %v2179, %v2178
      %v2201 = vpack.c.b16 %v2181, %v2180
      %v2202 = vpack.c.b16 %v2183, %v2182
      %v2203 = vpack.c.b16 %v2185, %v2184
      %v2204 = vpack.c.b16 %v2187, %v2186
      %v2205 = vpack.c.b16 %v2189, %v2188
      %v2207 = vsel %vm687, %v2190, 0
      %v2210 = vsel %vm687, %v2191, 0
      %v2213 = vsel %vm687, %v2192, 0
      %v2216 = vsel %vm687, %v2193, 0
      %v2219 = vsel %vm687, %v2194, 0
      %v2222 = vsel %vm687, %v2195, 0
      %v2225 = vsel %vm687, %v2196, 0
      %v2228 = vsel %vm687, %v2197, 0
      %v2231 = vsel %vm687, %v2198, 0
      %v2234 = vsel %vm687, %v2199, 0
      %v2237 = vsel %vm687, %v2200, 0
      %v2240 = vsel %vm687, %v2201, 0
      %v2243 = vsel %vm687, %v2202, 0
      %v2246 = vsel %vm687, %v2203, 0
      %v2249 = vsel %vm687, %v2204, 0
      %v2252 = vsel %vm687, %v2205, 0
      %v2255 = vsel %vm736, %v2157, 0
      %2257 = vmatpush.bf16.msra.mxu0 0
      %2258 = vmatpush.bf16.msra.mxu0 0
      %2259 = vmatpush.bf16.msra.mxu0 0
      %2260 = vmatpush.bf16.msra.mxu0 0
      %2261 = vmatpush.bf16.msra.mxu0 0
      %2262 = vmatpush.bf16.msra.mxu0 0
      %2263 = vmatpush.bf16.msra.mxu0 0
      %2264 = vmatpush.bf16.msra.mxu0 %v2255
      %2265 = vmatmul.bf16.gmra.mxu0 %v2207
      %v2266 = vpop.f32.mrf.mxu0
      %v2267 = vadd.f32 0.0, %v2266
      %v2268 = vpop.f32.mrf.mxu0
      %v2269 = vadd.f32 0.0, %v2268
      %2270 = vmatmul.bf16.gmra.mxu0 %v2210
      %v2271 = vpop.f32.mrf.mxu0
      %v2272 = vadd.f32 0.0, %v2271
      %v2273 = vpop.f32.mrf.mxu0
      %v2274 = vadd.f32 0.0, %v2273
      %2275 = vmatmul.bf16.gmra.mxu0 %v2213
      %v2276 = vpop.f32.mrf.mxu0
      %v2277 = vadd.f32 0.0, %v2276
      %v2278 = vpop.f32.mrf.mxu0
      %v2279 = vadd.f32 0.0, %v2278
      %2280 = vmatmul.bf16.gmra.mxu0 %v2216
      %v2281 = vpop.f32.mrf.mxu0
      %v2282 = vadd.f32 0.0, %v2281
      %v2283 = vpop.f32.mrf.mxu0
      %v2284 = vadd.f32 0.0, %v2283
      %2285 = vmatmul.bf16.gmra.mxu0 %v2219
      %v2286 = vpop.f32.mrf.mxu0
      %v2287 = vadd.f32 0.0, %v2286
      %v2288 = vpop.f32.mrf.mxu0
      %v2289 = vadd.f32 0.0, %v2288
      %2290 = vmatmul.bf16.gmra.mxu0 %v2222
      %v2291 = vpop.f32.mrf.mxu0
      %v2292 = vadd.f32 0.0, %v2291
      %v2293 = vpop.f32.mrf.mxu0
      %v2294 = vadd.f32 0.0, %v2293
      %2295 = vmatmul.bf16.gmra.mxu0 %v2225
      %v2296 = vpop.f32.mrf.mxu0
      %v2297 = vadd.f32 0.0, %v2296
      %v2298 = vpop.f32.mrf.mxu0
      %v2299 = vadd.f32 0.0, %v2298
      %2300 = vmatmul.bf16.gmra.mxu0 %v2228
      %v2301 = vpop.f32.mrf.mxu0
      %v2302 = vadd.f32 0.0, %v2301
      %v2303 = vpop.f32.mrf.mxu0
      %v2304 = vadd.f32 0.0, %v2303
      %2305 = vmatmul.bf16.gmra.mxu0 %v2231
      %v2306 = vpop.f32.mrf.mxu0
      %v2307 = vadd.f32 0.0, %v2306
      %v2308 = vpop.f32.mrf.mxu0
      %v2309 = vadd.f32 0.0, %v2308
      %2310 = vmatmul.bf16.gmra.mxu0 %v2234
      %v2311 = vpop.f32.mrf.mxu0
      %v2312 = vadd.f32 0.0, %v2311
      %v2313 = vpop.f32.mrf.mxu0
      %v2314 = vadd.f32 0.0, %v2313
      %2315 = vmatmul.bf16.gmra.mxu0 %v2237
      %v2316 = vpop.f32.mrf.mxu0
      %v2317 = vadd.f32 0.0, %v2316
      %v2318 = vpop.f32.mrf.mxu0
      %v2319 = vadd.f32 0.0, %v2318
      %2320 = vmatmul.bf16.gmra.mxu0 %v2240
      %v2321 = vpop.f32.mrf.mxu0
      %v2322 = vadd.f32 0.0, %v2321
      %v2323 = vpop.f32.mrf.mxu0
      %v2324 = vadd.f32 0.0, %v2323
      %2325 = vmatmul.bf16.gmra.mxu0 %v2243
      %v2326 = vpop.f32.mrf.mxu0
      %v2327 = vadd.f32 0.0, %v2326
      %v2328 = vpop.f32.mrf.mxu0
      %v2329 = vadd.f32 0.0, %v2328
      %2330 = vmatmul.bf16.gmra.mxu0 %v2246
      %v2331 = vpop.f32.mrf.mxu0
      %v2332 = vadd.f32 0.0, %v2331
      %v2333 = vpop.f32.mrf.mxu0
      %v2334 = vadd.f32 0.0, %v2333
      %2335 = vmatmul.bf16.gmra.mxu0 %v2249
      %v2336 = vpop.f32.mrf.mxu0
      %v2337 = vadd.f32 0.0, %v2336
      %v2338 = vpop.f32.mrf.mxu0
      %v2339 = vadd.f32 0.0, %v2338
      %2340 = vmatmul.bf16.gmra.mxu0 %v2252
      %v2341 = vpop.f32.mrf.mxu0
      %v2342 = vadd.f32 0.0, %v2341
      %v2343 = vpop.f32.mrf.mxu0
      %v2344 = vadd.f32 0.0, %v2343
      %2345 = vdwg.mxu0
      %v2346 = vadd.f32 %v1692, %v2267
      %v2347 = vadd.f32 %v1693, %v2269
      %v2348 = vadd.f32 %v1694, %v2272
      %v2349 = vadd.f32 %v1695, %v2274
      %v2350 = vadd.f32 %v1696, %v2277
      %v2351 = vadd.f32 %v1697, %v2279
      %v2352 = vadd.f32 %v1698, %v2282
      %v2353 = vadd.f32 %v1699, %v2284
      %v2354 = vadd.f32 %v1700, %v2287
      %v2355 = vadd.f32 %v1701, %v2289
      %v2356 = vadd.f32 %v1702, %v2292
      %v2357 = vadd.f32 %v1703, %v2294
      %v2358 = vadd.f32 %v1704, %v2297
      %v2359 = vadd.f32 %v1705, %v2299
      %v2360 = vadd.f32 %v1706, %v2302
      %v2361 = vadd.f32 %v1707, %v2304
      %v2362 = vadd.f32 %v1708, %v2307
      %v2363 = vadd.f32 %v1709, %v2309
      %v2364 = vadd.f32 %v1710, %v2312
      %v2365 = vadd.f32 %v1711, %v2314
      %v2366 = vadd.f32 %v1712, %v2317
      %v2367 = vadd.f32 %v1713, %v2319
      %v2368 = vadd.f32 %v1714, %v2322
      %v2369 = vadd.f32 %v1715, %v2324
      %v2370 = vadd.f32 %v1716, %v2327
      %v2371 = vadd.f32 %v1717, %v2329
      %v2372 = vadd.f32 %v1718, %v2332
      %v2373 = vadd.f32 %v1719, %v2334
      %v2374 = vadd.f32 %v1720, %v2337
      %v2375 = vadd.f32 %v1721, %v2339
      %v2376 = vadd.f32 %v1722, %v2342
      %v2377 = vadd.f32 %v1723, %v2344
      %v2378 = vld [vmem:[%s1437] sm:$0xe]
      %v2379 = vld [vmem:[%s1437 + $0xc] sm:$0xe]
      %v2380 = vld [vmem:[%s1437 + $0x18] sm:$0xe]
      %v2381 = vld [vmem:[%s1437 + $0x24] sm:$0xe]
      %v2382 = vld [vmem:[%s1437 + $0x30] sm:$0xe]
      %v2383 = vld [vmem:[%s1437 + $0x3c] sm:$0xe]
      %v2384 = vld [vmem:[%s1437 + $0x48] sm:$0xe]
      %v2385 = vld [vmem:[%s1437 + $0x54] sm:$0xe]
      %v2386 = vld [vmem:[%s1437 + $0x60] sm:$0xe]
      %v2387 = vld [vmem:[%s1437 + $0x6c] sm:$0xe]
      %v2388 = vld [vmem:[%s1437 + $0x78] sm:$0xe]
      %v2389 = vld [vmem:[%s1437 + $0x84] sm:$0xe]
      %v2390 = vld [vmem:[%s1437 + $0x90] sm:$0xe]
      %v2391 = vld [vmem:[%s1437 + $0x9c] sm:$0xe]
      %v2392 = vld [vmem:[%s1437 + $0xa8] sm:$0xe]
      %v2393 = vld [vmem:[%s1437 + $0xb4] sm:$0xe]
      %v2442 = vrot.slane %v2378, 5
      %v2443 = vrot.slane %v2442, 4
      %v2444 = vrot.slane %v1725, 5
      %v2445 = vsel %vm1099, %v2443, %v2444
      %v2446 = vrot.slane %v2444, 4
      %v2447 = vrot.slane %v1726, 5
      %v2448 = vsel %vm1099, %v2446, %v2447
      %v2449 = vrot.slane %v2379, 5
      %v2450 = vrot.slane %v2449, 4
      %v2451 = vrot.slane %v1728, 5
      %v2452 = vsel %vm1099, %v2450, %v2451
      %v2453 = vrot.slane %v2451, 4
      %v2454 = vrot.slane %v1729, 5
      %v2455 = vsel %vm1099, %v2453, %v2454
      %v2456 = vrot.slane %v2380, 5
      %v2457 = vrot.slane %v2456, 4
      %v2458 = vrot.slane %v1731, 5
      %v2459 = vsel %vm1099, %v2457, %v2458
      %v2460 = vrot.slane %v2458, 4
      %v2461 = vrot.slane %v1732, 5
      %v2462 = vsel %vm1099, %v2460, %v2461
      %v2463 = vrot.slane %v2381, 5
      %v2464 = vrot.slane %v2463, 4
      %v2465 = vrot.slane %v1734, 5
      %v2466 = vsel %vm1099, %v2464, %v2465
      %v2467 = vrot.slane %v2465, 4
      %v2468 = vrot.slane %v1735, 5
      %v2469 = vsel %vm1099, %v2467, %v2468
      %v2470 = vrot.slane %v2382, 5
      %v2471 = vrot.slane %v2470, 4
      %v2472 = vrot.slane %v1737, 5
      %v2473 = vsel %vm1099, %v2471, %v2472
      %v2474 = vrot.slane %v2472, 4
      %v2475 = vrot.slane %v1738, 5
      %v2476 = vsel %vm1099, %v2474, %v2475
      %v2477 = vrot.slane %v2383, 5
      %v2478 = vrot.slane %v2477, 4
      %v2479 = vrot.slane %v1740, 5
      %v2480 = vsel %vm1099, %v2478, %v2479
      %v2481 = vrot.slane %v2479, 4
      %v2482 = vrot.slane %v1741, 5
      %v2483 = vsel %vm1099, %v2481, %v2482
      %v2484 = vrot.slane %v2384, 5
      %v2485 = vrot.slane %v2484, 4
      %v2486 = vrot.slane %v1743, 5
      %v2487 = vsel %vm1099, %v2485, %v2486
      %v2488 = vrot.slane %v2486, 4
      %v2489 = vrot.slane %v1744, 5
      %v2490 = vsel %vm1099, %v2488, %v2489
      %v2491 = vrot.slane %v2385, 5
      %v2492 = vrot.slane %v2491, 4
      %v2493 = vrot.slane %v1746, 5
      %v2494 = vsel %vm1099, %v2492, %v2493
      %v2495 = vrot.slane %v2493, 4
      %v2496 = vrot.slane %v1747, 5
      %v2497 = vsel %vm1099, %v2495, %v2496
      %v2498 = vrot.slane %v2386, 5
      %v2499 = vrot.slane %v2498, 4
      %v2500 = vrot.slane %v1749, 5
      %v2501 = vsel %vm1099, %v2499, %v2500
      %v2502 = vrot.slane %v2500, 4
      %v2503 = vrot.slane %v1750, 5
      %v2504 = vsel %vm1099, %v2502, %v2503
      %v2505 = vrot.slane %v2387, 5
      %v2506 = vrot.slane %v2505, 4
      %v2507 = vrot.slane %v1752, 5
      %v2508 = vsel %vm1099, %v2506, %v2507
      %v2509 = vrot.slane %v2507, 4
      %v2510 = vrot.slane %v1753, 5
      %v2511 = vsel %vm1099, %v2509, %v2510
      %v2512 = vrot.slane %v2388, 5
      %v2513 = vrot.slane %v2512, 4
      %v2514 = vrot.slane %v1755, 5
      %v2515 = vsel %vm1099, %v2513, %v2514
      %v2516 = vrot.slane %v2514, 4
      %v2517 = vrot.slane %v1756, 5
      %v2518 = vsel %vm1099, %v2516, %v2517
      %v2519 = vrot.slane %v2389, 5
      %v2520 = vrot.slane %v2519, 4
      %v2521 = vrot.slane %v1758, 5
      %v2522 = vsel %vm1099, %v2520, %v2521
      %v2523 = vrot.slane %v2521, 4
      %v2524 = vrot.slane %v1759, 5
      %v2525 = vsel %vm1099, %v2523, %v2524
      %v2526 = vrot.slane %v2390, 5
      %v2527 = vrot.slane %v2526, 4
      %v2528 = vrot.slane %v1761, 5
      %v2529 = vsel %vm1099, %v2527, %v2528
      %v2530 = vrot.slane %v2528, 4
      %v2531 = vrot.slane %v1762, 5
      %v2532 = vsel %vm1099, %v2530, %v2531
      %v2533 = vrot.slane %v2391, 5
      %v2534 = vrot.slane %v2533, 4
      %v2535 = vrot.slane %v1764, 5
      %v2536 = vsel %vm1099, %v2534, %v2535
      %v2537 = vrot.slane %v2535, 4
      %v2538 = vrot.slane %v1765, 5
      %v2539 = vsel %vm1099, %v2537, %v2538
      %v2540 = vrot.slane %v2392, 5
      %v2541 = vrot.slane %v2540, 4
      %v2542 = vrot.slane %v1767, 5
      %v2543 = vsel %vm1099, %v2541, %v2542
      %v2544 = vrot.slane %v2542, 4
      %v2545 = vrot.slane %v1768, 5
      %v2546 = vsel %vm1099, %v2544, %v2545
      %v2547 = vrot.slane %v2393, 5
      %v2548 = vrot.slane %v2547, 4
      %v2549 = vrot.slane %v1770, 5
      %v2550 = vsel %vm1099, %v2548, %v2549
      %v2551 = vrot.slane %v2549, 4
      %v2552 = vrot.slane %v1771, 5
      %v2553 = vsel %vm1099, %v2551, %v2552
      %s2554 = scalar_lea.vmem %s1, 10
      %v2555 = vld [vmem:[%s2554] sm:$0x3]
      %v2556 = vunpack.c.l.b16 %v2445
      %v2557 = vunpack.c.l.b16 %v2448
      %v2558 = vunpack.c.l.b16 %v2452
      %v2559 = vunpack.c.l.b16 %v2455
      %v2560 = vunpack.c.l.b16 %v2459
      %v2561 = vunpack.c.l.b16 %v2462
      %v2562 = vunpack.c.l.b16 %v2466
      %v2563 = vunpack.c.l.b16 %v2469
      %v2564 = vunpack.c.l.b16 %v2473
      %v2565 = vunpack.c.l.b16 %v2476
      %v2566 = vunpack.c.l.b16 %v2480
      %v2567 = vunpack.c.l.b16 %v2483
      %v2568 = vunpack.c.l.b16 %v2487
      %v2569 = vunpack.c.l.b16 %v2490
      %v2570 = vunpack.c.l.b16 %v2494
      %v2571 = vunpack.c.l.b16 %v2497
      %v2572 = vunpack.c.l.b16 %v2501
      %v2573 = vunpack.c.l.b16 %v2504
      %v2574 = vunpack.c.l.b16 %v2508
      %v2575 = vunpack.c.l.b16 %v2511
      %v2576 = vunpack.c.l.b16 %v2515
      %v2577 = vunpack.c.l.b16 %v2518
      %v2578 = vunpack.c.l.b16 %v2522
      %v2579 = vunpack.c.l.b16 %v2525
      %v2580 = vunpack.c.l.b16 %v2529
      %v2581 = vunpack.c.l.b16 %v2532
      %v2582 = vunpack.c.l.b16 %v2536
      %v2583 = vunpack.c.l.b16 %v2539
      %v2584 = vunpack.c.l.b16 %v2543
      %v2585 = vunpack.c.l.b16 %v2546
      %v2586 = vunpack.c.l.b16 %v2550
      %v2587 = vunpack.c.l.b16 %v2553
      %v2588 = vpack.c.b16 %v2557, %v2556
      %v2589 = vpack.c.b16 %v2559, %v2558
      %v2590 = vpack.c.b16 %v2561, %v2560
      %v2591 = vpack.c.b16 %v2563, %v2562
      %v2592 = vpack.c.b16 %v2565, %v2564
      %v2593 = vpack.c.b16 %v2567, %v2566
      %v2594 = vpack.c.b16 %v2569, %v2568
      %v2595 = vpack.c.b16 %v2571, %v2570
      %v2596 = vpack.c.b16 %v2573, %v2572
      %v2597 = vpack.c.b16 %v2575, %v2574
      %v2598 = vpack.c.b16 %v2577, %v2576
      %v2599 = vpack.c.b16 %v2579, %v2578
      %v2600 = vpack.c.b16 %v2581, %v2580
      %v2601 = vpack.c.b16 %v2583, %v2582
      %v2602 = vpack.c.b16 %v2585, %v2584
      %v2603 = vpack.c.b16 %v2587, %v2586
      %v2605 = vsel %vm687, %v2588, 0
      %v2608 = vsel %vm687, %v2589, 0
      %v2611 = vsel %vm687, %v2590, 0
      %v2614 = vsel %vm687, %v2591, 0
      %v2617 = vsel %vm687, %v2592, 0
      %v2620 = vsel %vm687, %v2593, 0
      %v2623 = vsel %vm687, %v2594, 0
      %v2626 = vsel %vm687, %v2595, 0
      %v2629 = vsel %vm687, %v2596, 0
      %v2632 = vsel %vm687, %v2597, 0
      %v2635 = vsel %vm687, %v2598, 0
      %v2638 = vsel %vm687, %v2599, 0
      %v2641 = vsel %vm687, %v2600, 0
      %v2644 = vsel %vm687, %v2601, 0
      %v2647 = vsel %vm687, %v2602, 0
      %v2650 = vsel %vm687, %v2603, 0
      %v2653 = vsel %vm736, %v2555, 0
      %2655 = vmatpush.bf16.msra.mxu0 0
      %2656 = vmatpush.bf16.msra.mxu0 0
      %2657 = vmatpush.bf16.msra.mxu0 0
      %2658 = vmatpush.bf16.msra.mxu0 0
      %2659 = vmatpush.bf16.msra.mxu0 0
      %2660 = vmatpush.bf16.msra.mxu0 0
      %2661 = vmatpush.bf16.msra.mxu0 0
      %2662 = vmatpush.bf16.msra.mxu0 %v2653
      %2663 = vmatmul.bf16.gmra.mxu0 %v2605
      %v2664 = vpop.f32.mrf.mxu0
      %v2665 = vadd.f32 0.0, %v2664
      %v2666 = vpop.f32.mrf.mxu0
      %v2667 = vadd.f32 0.0, %v2666
      %2668 = vmatmul.bf16.gmra.mxu0 %v2608
      %v2669 = vpop.f32.mrf.mxu0
      %v2670 = vadd.f32 0.0, %v2669
      %v2671 = vpop.f32.mrf.mxu0
      %v2672 = vadd.f32 0.0, %v2671
      %2673 = vmatmul.bf16.gmra.mxu0 %v2611
      %v2674 = vpop.f32.mrf.mxu0
      %v2675 = vadd.f32 0.0, %v2674
      %v2676 = vpop.f32.mrf.mxu0
      %v2677 = vadd.f32 0.0, %v2676
      %2678 = vmatmul.bf16.gmra.mxu0 %v2614
      %v2679 = vpop.f32.mrf.mxu0
      %v2680 = vadd.f32 0.0, %v2679
      %v2681 = vpop.f32.mrf.mxu0
      %v2682 = vadd.f32 0.0, %v2681
      %2683 = vmatmul.bf16.gmra.mxu0 %v2617
      %v2684 = vpop.f32.mrf.mxu0
      %v2685 = vadd.f32 0.0, %v2684
      %v2686 = vpop.f32.mrf.mxu0
      %v2687 = vadd.f32 0.0, %v2686
      %2688 = vmatmul.bf16.gmra.mxu0 %v2620
      %v2689 = vpop.f32.mrf.mxu0
      %v2690 = vadd.f32 0.0, %v2689
      %v2691 = vpop.f32.mrf.mxu0
      %v2692 = vadd.f32 0.0, %v2691
      %2693 = vmatmul.bf16.gmra.mxu0 %v2623
      %v2694 = vpop.f32.mrf.mxu0
      %v2695 = vadd.f32 0.0, %v2694
      %v2696 = vpop.f32.mrf.mxu0
      %v2697 = vadd.f32 0.0, %v2696
      %2698 = vmatmul.bf16.gmra.mxu0 %v2626
      %v2699 = vpop.f32.mrf.mxu0
      %v2700 = vadd.f32 0.0, %v2699
      %v2701 = vpop.f32.mrf.mxu0
      %v2702 = vadd.f32 0.0, %v2701
      %2703 = vmatmul.bf16.gmra.mxu0 %v2629
      %v2704 = vpop.f32.mrf.mxu0
      %v2705 = vadd.f32 0.0, %v2704
      %v2706 = vpop.f32.mrf.mxu0
      %v2707 = vadd.f32 0.0, %v2706
      %2708 = vmatmul.bf16.gmra.mxu0 %v2632
      %v2709 = vpop.f32.mrf.mxu0
      %v2710 = vadd.f32 0.0, %v2709
      %v2711 = vpop.f32.mrf.mxu0
      %v2712 = vadd.f32 0.0, %v2711
      %2713 = vmatmul.bf16.gmra.mxu0 %v2635
      %v2714 = vpop.f32.mrf.mxu0
      %v2715 = vadd.f32 0.0, %v2714
      %v2716 = vpop.f32.mrf.mxu0
      %v2717 = vadd.f32 0.0, %v2716
      %2718 = vmatmul.bf16.gmra.mxu0 %v2638
      %v2719 = vpop.f32.mrf.mxu0
      %v2720 = vadd.f32 0.0, %v2719
      %v2721 = vpop.f32.mrf.mxu0
      %v2722 = vadd.f32 0.0, %v2721
      %2723 = vmatmul.bf16.gmra.mxu0 %v2641
      %v2724 = vpop.f32.mrf.mxu0
      %v2725 = vadd.f32 0.0, %v2724
      %v2726 = vpop.f32.mrf.mxu0
      %v2727 = vadd.f32 0.0, %v2726
      %2728 = vmatmul.bf16.gmra.mxu0 %v2644
      %v2729 = vpop.f32.mrf.mxu0
      %v2730 = vadd.f32 0.0, %v2729
      %v2731 = vpop.f32.mrf.mxu0
      %v2732 = vadd.f32 0.0, %v2731
      %2733 = vmatmul.bf16.gmra.mxu0 %v2647
      %v2734 = vpop.f32.mrf.mxu0
      %v2735 = vadd.f32 0.0, %v2734
      %v2736 = vpop.f32.mrf.mxu0
      %v2737 = vadd.f32 0.0, %v2736
      %2738 = vmatmul.bf16.gmra.mxu0 %v2650
      %v2739 = vpop.f32.mrf.mxu0
      %v2740 = vadd.f32 0.0, %v2739
      %v2741 = vpop.f32.mrf.mxu0
      %v2742 = vadd.f32 0.0, %v2741
      %2743 = vdwg.mxu0
      %v2744 = vadd.f32 %v2346, %v2665
      %v2745 = vadd.f32 %v2347, %v2667
      %v2746 = vadd.f32 %v2348, %v2670
      %v2747 = vadd.f32 %v2349, %v2672
      %v2748 = vadd.f32 %v2350, %v2675
      %v2749 = vadd.f32 %v2351, %v2677
      %v2750 = vadd.f32 %v2352, %v2680
      %v2751 = vadd.f32 %v2353, %v2682
      %v2752 = vadd.f32 %v2354, %v2685
      %v2753 = vadd.f32 %v2355, %v2687
      %v2754 = vadd.f32 %v2356, %v2690
      %v2755 = vadd.f32 %v2357, %v2692
      %v2756 = vadd.f32 %v2358, %v2695
      %v2757 = vadd.f32 %v2359, %v2697
      %v2758 = vadd.f32 %v2360, %v2700
      %v2759 = vadd.f32 %v2361, %v2702
      %v2760 = vadd.f32 %v2362, %v2705
      %v2761 = vadd.f32 %v2363, %v2707
      %v2762 = vadd.f32 %v2364, %v2710
      %v2763 = vadd.f32 %v2365, %v2712
      %v2764 = vadd.f32 %v2366, %v2715
      %v2765 = vadd.f32 %v2367, %v2717
      %v2766 = vadd.f32 %v2368, %v2720
      %v2767 = vadd.f32 %v2369, %v2722
      %v2768 = vadd.f32 %v2370, %v2725
      %v2769 = vadd.f32 %v2371, %v2727
      %v2770 = vadd.f32 %v2372, %v2730
      %v2771 = vadd.f32 %v2373, %v2732
      %v2772 = vadd.f32 %v2374, %v2735
      %v2773 = vadd.f32 %v2375, %v2737
      %v2774 = vadd.f32 %v2376, %v2740
      %v2775 = vadd.f32 %v2377, %v2742
      %s2776 = sadd.s32 %s197, 2
      %s2777 = smul.u32 %s2776, 3
      %s2778 = smul.addr %s2777, 4
      %s2779 = scalar_lea.vmem %s184, %s2778
      %v2780 = vld [vmem:[%s2779] sm:$0xf]
      %v2781 = vld [vmem:[%s2779 + $0x4] sm:$0xf]
      %v2782 = vld [vmem:[%s2779 + $0xc] sm:$0xf]
      %v2783 = vld [vmem:[%s2779 + $0x10] sm:$0xf]
      %v2784 = vld [vmem:[%s2779 + $0x18] sm:$0xf]
      %v2785 = vld [vmem:[%s2779 + $0x1c] sm:$0xf]
      %v2786 = vld [vmem:[%s2779 + $0x24] sm:$0xf]
      %v2787 = vld [vmem:[%s2779 + $0x28] sm:$0xf]
      %v2788 = vld [vmem:[%s2779 + $0x30] sm:$0xf]
      %v2789 = vld [vmem:[%s2779 + $0x34] sm:$0xf]
      %v2790 = vld [vmem:[%s2779 + $0x3c] sm:$0xf]
      %v2791 = vld [vmem:[%s2779 + $0x40] sm:$0xf]
      %v2792 = vld [vmem:[%s2779 + $0x48] sm:$0xf]
      %v2793 = vld [vmem:[%s2779 + $0x4c] sm:$0xf]
      %v2794 = vld [vmem:[%s2779 + $0x54] sm:$0xf]
      %v2795 = vld [vmem:[%s2779 + $0x58] sm:$0xf]
      %v2796 = vld [vmem:[%s2779 + $0x60] sm:$0xf]
      %v2797 = vld [vmem:[%s2779 + $0x64] sm:$0xf]
      %v2798 = vld [vmem:[%s2779 + $0x6c] sm:$0xf]
      %v2799 = vld [vmem:[%s2779 + $0x70] sm:$0xf]
      %v2800 = vld [vmem:[%s2779 + $0x78] sm:$0xf]
      %v2801 = vld [vmem:[%s2779 + $0x7c] sm:$0xf]
      %v2802 = vld [vmem:[%s2779 + $0x84] sm:$0xf]
      %v2803 = vld [vmem:[%s2779 + $0x88] sm:$0xf]
      %v2804 = vld [vmem:[%s2779 + $0x90] sm:$0xf]
      %v2805 = vld [vmem:[%s2779 + $0x94] sm:$0xf]
      %v2806 = vld [vmem:[%s2779 + $0x9c] sm:$0xf]
      %v2807 = vld [vmem:[%s2779 + $0xa0] sm:$0xf]
      %v2808 = vld [vmem:[%s2779 + $0xa8] sm:$0xf]
      %v2809 = vld [vmem:[%s2779 + $0xac] sm:$0xf]
      %v2810 = vld [vmem:[%s2779 + $0xb4] sm:$0xf]
      %v2811 = vld [vmem:[%s2779 + $0xb8] sm:$0xf]
      %s2812 = scalar_lea.vmem %s1, 12
      %v2813 = vld [vmem:[%s2812] sm:$0x3]
      %v2846 = vunpack.c.l.b16 %v2780
      %v2847 = vunpack.c.l.b16 %v2781
      %v2848 = vunpack.c.l.b16 %v2782
      %v2849 = vunpack.c.l.b16 %v2783
      %v2850 = vunpack.c.l.b16 %v2784
      %v2851 = vunpack.c.l.b16 %v2785
      %v2852 = vunpack.c.l.b16 %v2786
      %v2853 = vunpack.c.l.b16 %v2787
      %v2854 = vunpack.c.l.b16 %v2788
      %v2855 = vunpack.c.l.b16 %v2789
      %v2856 = vunpack.c.l.b16 %v2790
      %v2857 = vunpack.c.l.b16 %v2791
      %v2858 = vunpack.c.l.b16 %v2792
      %v2859 = vunpack.c.l.b16 %v2793
      %v2860 = vunpack.c.l.b16 %v2794
      %v2861 = vunpack.c.l.b16 %v2795
      %v2862 = vunpack.c.l.b16 %v2796
      %v2863 = vunpack.c.l.b16 %v2797
      %v2864 = vunpack.c.l.b16 %v2798
      %v2865 = vunpack.c.l.b16 %v2799
      %v2866 = vunpack.c.l.b16 %v2800
      %v2867 = vunpack.c.l.b16 %v2801
      %v2868 = vunpack.c.l.b16 %v2802
      %v2869 = vunpack.c.l.b16 %v2803
      %v2870 = vunpack.c.l.b16 %v2804
      %v2871 = vunpack.c.l.b16 %v2805
      %v2872 = vunpack.c.l.b16 %v2806
      %v2873 = vunpack.c.l.b16 %v2807
      %v2874 = vunpack.c.l.b16 %v2808
      %v2875 = vunpack.c.l.b16 %v2809
      %v2876 = vunpack.c.l.b16 %v2810
      %v2877 = vunpack.c.l.b16 %v2811
      %v2878 = vpack.c.b16 %v2847, %v2846
      %v2879 = vpack.c.b16 %v2849, %v2848
      %v2880 = vpack.c.b16 %v2851, %v2850
      %v2881 = vpack.c.b16 %v2853, %v2852
      %v2882 = vpack.c.b16 %v2855, %v2854
      %v2883 = vpack.c.b16 %v2857, %v2856
      %v2884 = vpack.c.b16 %v2859, %v2858
      %v2885 = vpack.c.b16 %v2861, %v2860
      %v2886 = vpack.c.b16 %v2863, %v2862
      %v2887 = vpack.c.b16 %v2865, %v2864
      %v2888 = vpack.c.b16 %v2867, %v2866
      %v2889 = vpack.c.b16 %v2869, %v2868
      %v2890 = vpack.c.b16 %v2871, %v2870
      %v2891 = vpack.c.b16 %v2873, %v2872
      %v2892 = vpack.c.b16 %v2875, %v2874
      %v2893 = vpack.c.b16 %v2877, %v2876
      %v2895 = vsel %vm687, %v2878, 0
      %v2898 = vsel %vm687, %v2879, 0
      %v2901 = vsel %vm687, %v2880, 0
      %v2904 = vsel %vm687, %v2881, 0
      %v2907 = vsel %vm687, %v2882, 0
      %v2910 = vsel %vm687, %v2883, 0
      %v2913 = vsel %vm687, %v2884, 0
      %v2916 = vsel %vm687, %v2885, 0
      %v2919 = vsel %vm687, %v2886, 0
      %v2922 = vsel %vm687, %v2887, 0
      %v2925 = vsel %vm687, %v2888, 0
      %v2928 = vsel %vm687, %v2889, 0
      %v2931 = vsel %vm687, %v2890, 0
      %v2934 = vsel %vm687, %v2891, 0
      %v2937 = vsel %vm687, %v2892, 0
      %v2940 = vsel %vm687, %v2893, 0
      %v2943 = vsel %vm736, %v2813, 0
      %2945 = vmatpush.bf16.msra.mxu0 0
      %2946 = vmatpush.bf16.msra.mxu0 0
      %2947 = vmatpush.bf16.msra.mxu0 0
      %2948 = vmatpush.bf16.msra.mxu0 0
      %2949 = vmatpush.bf16.msra.mxu0 0
      %2950 = vmatpush.bf16.msra.mxu0 0
      %2951 = vmatpush.bf16.msra.mxu0 0
      %2952 = vmatpush.bf16.msra.mxu0 %v2943
      %2953 = vmatmul.bf16.gmra.mxu0 %v2895
      %v2954 = vpop.f32.mrf.mxu0
      %v2955 = vadd.f32 0.0, %v2954
      %v2956 = vpop.f32.mrf.mxu0
      %v2957 = vadd.f32 0.0, %v2956
      %2958 = vmatmul.bf16.gmra.mxu0 %v2898
      %v2959 = vpop.f32.mrf.mxu0
      %v2960 = vadd.f32 0.0, %v2959
      %v2961 = vpop.f32.mrf.mxu0
      %v2962 = vadd.f32 0.0, %v2961
      %2963 = vmatmul.bf16.gmra.mxu0 %v2901
      %v2964 = vpop.f32.mrf.mxu0
      %v2965 = vadd.f32 0.0, %v2964
      %v2966 = vpop.f32.mrf.mxu0
      %v2967 = vadd.f32 0.0, %v2966
      %2968 = vmatmul.bf16.gmra.mxu0 %v2904
      %v2969 = vpop.f32.mrf.mxu0
      %v2970 = vadd.f32 0.0, %v2969
      %v2971 = vpop.f32.mrf.mxu0
      %v2972 = vadd.f32 0.0, %v2971
      %2973 = vmatmul.bf16.gmra.mxu0 %v2907
      %v2974 = vpop.f32.mrf.mxu0
      %v2975 = vadd.f32 0.0, %v2974
      %v2976 = vpop.f32.mrf.mxu0
      %v2977 = vadd.f32 0.0, %v2976
      %2978 = vmatmul.bf16.gmra.mxu0 %v2910
      %v2979 = vpop.f32.mrf.mxu0
      %v2980 = vadd.f32 0.0, %v2979
      %v2981 = vpop.f32.mrf.mxu0
      %v2982 = vadd.f32 0.0, %v2981
      %2983 = vmatmul.bf16.gmra.mxu0 %v2913
      %v2984 = vpop.f32.mrf.mxu0
      %v2985 = vadd.f32 0.0, %v2984
      %v2986 = vpop.f32.mrf.mxu0
      %v2987 = vadd.f32 0.0, %v2986
      %2988 = vmatmul.bf16.gmra.mxu0 %v2916
      %v2989 = vpop.f32.mrf.mxu0
      %v2990 = vadd.f32 0.0, %v2989
      %v2991 = vpop.f32.mrf.mxu0
      %v2992 = vadd.f32 0.0, %v2991
      %2993 = vmatmul.bf16.gmra.mxu0 %v2919
      %v2994 = vpop.f32.mrf.mxu0
      %v2995 = vadd.f32 0.0, %v2994
      %v2996 = vpop.f32.mrf.mxu0
      %v2997 = vadd.f32 0.0, %v2996
      %2998 = vmatmul.bf16.gmra.mxu0 %v2922
      %v2999 = vpop.f32.mrf.mxu0
      %v3000 = vadd.f32 0.0, %v2999
      %v3001 = vpop.f32.mrf.mxu0
      %v3002 = vadd.f32 0.0, %v3001
      %3003 = vmatmul.bf16.gmra.mxu0 %v2925
      %v3004 = vpop.f32.mrf.mxu0
      %v3005 = vadd.f32 0.0, %v3004
      %v3006 = vpop.f32.mrf.mxu0
      %v3007 = vadd.f32 0.0, %v3006
      %3008 = vmatmul.bf16.gmra.mxu0 %v2928
      %v3009 = vpop.f32.mrf.mxu0
      %v3010 = vadd.f32 0.0, %v3009
      %v3011 = vpop.f32.mrf.mxu0
      %v3012 = vadd.f32 0.0, %v3011
      %3013 = vmatmul.bf16.gmra.mxu0 %v2931
      %v3014 = vpop.f32.mrf.mxu0
      %v3015 = vadd.f32 0.0, %v3014
      %v3016 = vpop.f32.mrf.mxu0
      %v3017 = vadd.f32 0.0, %v3016
      %3018 = vmatmul.bf16.gmra.mxu0 %v2934
      %v3019 = vpop.f32.mrf.mxu0
      %v3020 = vadd.f32 0.0, %v3019
      %v3021 = vpop.f32.mrf.mxu0
      %v3022 = vadd.f32 0.0, %v3021
      %3023 = vmatmul.bf16.gmra.mxu0 %v2937
      %v3024 = vpop.f32.mrf.mxu0
      %v3025 = vadd.f32 0.0, %v3024
      %v3026 = vpop.f32.mrf.mxu0
      %v3027 = vadd.f32 0.0, %v3026
      %3028 = vmatmul.bf16.gmra.mxu0 %v2940
      %v3029 = vpop.f32.mrf.mxu0
      %v3030 = vadd.f32 0.0, %v3029
      %v3031 = vpop.f32.mrf.mxu0
      %v3032 = vadd.f32 0.0, %v3031
      %3033 = vdwg.mxu0
      %v3034 = vadd.f32 %v2744, %v2955
      %v3035 = vadd.f32 %v2745, %v2957
      %v3036 = vadd.f32 %v2746, %v2960
      %v3037 = vadd.f32 %v2747, %v2962
      %v3038 = vadd.f32 %v2748, %v2965
      %v3039 = vadd.f32 %v2749, %v2967
      %v3040 = vadd.f32 %v2750, %v2970
      %v3041 = vadd.f32 %v2751, %v2972
      %v3042 = vadd.f32 %v2752, %v2975
      %v3043 = vadd.f32 %v2753, %v2977
      %v3044 = vadd.f32 %v2754, %v2980
      %v3045 = vadd.f32 %v2755, %v2982
      %v3046 = vadd.f32 %v2756, %v2985
      %v3047 = vadd.f32 %v2757, %v2987
      %v3048 = vadd.f32 %v2758, %v2990
      %v3049 = vadd.f32 %v2759, %v2992
      %v3050 = vadd.f32 %v2760, %v2995
      %v3051 = vadd.f32 %v2761, %v2997
      %v3052 = vadd.f32 %v2762, %v3000
      %v3053 = vadd.f32 %v2763, %v3002
      %v3054 = vadd.f32 %v2764, %v3005
      %v3055 = vadd.f32 %v2765, %v3007
      %v3056 = vadd.f32 %v2766, %v3010
      %v3057 = vadd.f32 %v2767, %v3012
      %v3058 = vadd.f32 %v2768, %v3015
      %v3059 = vadd.f32 %v2769, %v3017
      %v3060 = vadd.f32 %v2770, %v3020
      %v3061 = vadd.f32 %v2771, %v3022
      %v3062 = vadd.f32 %v2772, %v3025
      %v3063 = vadd.f32 %v2773, %v3027
      %v3064 = vadd.f32 %v2774, %v3030
      %v3065 = vadd.f32 %v2775, %v3032
      %v3066 = vld [vmem:[%s2779] sm:$0xf]
      %v3067 = vld [vmem:[%s2779 + $0x4] sm:$0xf]
      %v3068 = vld [vmem:[%s2779 + $0x8] sm:$0x1]
      %v3069 = vld [vmem:[%s2779 + $0xc] sm:$0xf]
      %v3070 = vld [vmem:[%s2779 + $0x10] sm:$0xf]
      %v3071 = vld [vmem:[%s2779 + $0x14] sm:$0x1]
      %v3072 = vld [vmem:[%s2779 + $0x18] sm:$0xf]
      %v3073 = vld [vmem:[%s2779 + $0x1c] sm:$0xf]
      %v3074 = vld [vmem:[%s2779 + $0x20] sm:$0x1]
      %v3075 = vld [vmem:[%s2779 + $0x24] sm:$0xf]
      %v3076 = vld [vmem:[%s2779 + $0x28] sm:$0xf]
      %v3077 = vld [vmem:[%s2779 + $0x2c] sm:$0x1]
      %v3078 = vld [vmem:[%s2779 + $0x30] sm:$0xf]
      %v3079 = vld [vmem:[%s2779 + $0x34] sm:$0xf]
      %v3080 = vld [vmem:[%s2779 + $0x38] sm:$0x1]
      %v3081 = vld [vmem:[%s2779 + $0x3c] sm:$0xf]
      %v3082 = vld [vmem:[%s2779 + $0x40] sm:$0xf]
      %v3083 = vld [vmem:[%s2779 + $0x44] sm:$0x1]
      %v3084 = vld [vmem:[%s2779 + $0x48] sm:$0xf]
      %v3085 = vld [vmem:[%s2779 + $0x4c] sm:$0xf]
      %v3086 = vld [vmem:[%s2779 + $0x50] sm:$0x1]
      %v3087 = vld [vmem:[%s2779 + $0x54] sm:$0xf]
      %v3088 = vld [vmem:[%s2779 + $0x58] sm:$0xf]
      %v3089 = vld [vmem:[%s2779 + $0x5c] sm:$0x1]
      %v3090 = vld [vmem:[%s2779 + $0x60] sm:$0xf]
      %v3091 = vld [vmem:[%s2779 + $0x64] sm:$0xf]
      %v3092 = vld [vmem:[%s2779 + $0x68] sm:$0x1]
      %v3093 = vld [vmem:[%s2779 + $0x6c] sm:$0xf]
      %v3094 = vld [vmem:[%s2779 + $0x70] sm:$0xf]
      %v3095 = vld [vmem:[%s2779 + $0x74] sm:$0x1]
      %v3096 = vld [vmem:[%s2779 + $0x78] sm:$0xf]
      %v3097 = vld [vmem:[%s2779 + $0x7c] sm:$0xf]
      %v3098 = vld [vmem:[%s2779 + $0x80] sm:$0x1]
      %v3099 = vld [vmem:[%s2779 + $0x84] sm:$0xf]
      %v3100 = vld [vmem:[%s2779 + $0x88] sm:$0xf]
      %v3101 = vld [vmem:[%s2779 + $0x8c] sm:$0x1]
      %v3102 = vld [vmem:[%s2779 + $0x90] sm:$0xf]
      %v3103 = vld [vmem:[%s2779 + $0x94] sm:$0xf]
      %v3104 = vld [vmem:[%s2779 + $0x98] sm:$0x1]
      %v3105 = vld [vmem:[%s2779 + $0x9c] sm:$0xf]
      %v3106 = vld [vmem:[%s2779 + $0xa0] sm:$0xf]
      %v3107 = vld [vmem:[%s2779 + $0xa4] sm:$0x1]
      %v3108 = vld [vmem:[%s2779 + $0xa8] sm:$0xf]
      %v3109 = vld [vmem:[%s2779 + $0xac] sm:$0xf]
      %v3110 = vld [vmem:[%s2779 + $0xb0] sm:$0x1]
      %v3111 = vld [vmem:[%s2779 + $0xb4] sm:$0xf]
      %v3112 = vld [vmem:[%s2779 + $0xb8] sm:$0xf]
      %v3113 = vld [vmem:[%s2779 + $0xbc] sm:$0x1]
      %v3115 = vshrl.u32 %v3066, 16
      %v3117 = vrot.slane %v3115, 4
      %v3118 = vshll.u32 %v3066, 16
      %v3120 = vrot.slane %v3118, 5
      %v3121 = vor.u32 %v3117, %v3120
      %v3122 = vrot.slane %v3121, 4
      %v3124 = vshll.u32 %v3067, 16
      %v3126 = vrot.slane %v3124, 5
      %v3127 = vsel %vm252, %v3122, %v3126
      %v3128 = vshrl.u32 %v3067, 16
      %v3130 = vrot.slane %v3128, 4
      %v3131 = vor.u32 %v3130, %v3126
      %v3132 = vrot.slane %v3131, 4
      %v3134 = vshll.u32 %v3068, 16
      %v3136 = vrot.slane %v3134, 5
      %v3137 = vsel %vm252, %v3132, %v3136
      %v3139 = vshrl.u32 %v3069, 16
      %v3141 = vrot.slane %v3139, 4
      %v3142 = vshll.u32 %v3069, 16
      %v3144 = vrot.slane %v3142, 5
      %v3145 = vor.u32 %v3141, %v3144
      %v3146 = vrot.slane %v3145, 4
      %v3148 = vshll.u32 %v3070, 16
      %v3150 = vrot.slane %v3148, 5
      %v3151 = vsel %vm252, %v3146, %v3150
      %v3152 = vshrl.u32 %v3070, 16
      %v3154 = vrot.slane %v3152, 4
      %v3155 = vor.u32 %v3154, %v3150
      %v3156 = vrot.slane %v3155, 4
      %v3158 = vshll.u32 %v3071, 16
      %v3160 = vrot.slane %v3158, 5
      %v3161 = vsel %vm252, %v3156, %v3160
      %v3163 = vshrl.u32 %v3072, 16
      %v3165 = vrot.slane %v3163, 4
      %v3166 = vshll.u32 %v3072, 16
      %v3168 = vrot.slane %v3166, 5
      %v3169 = vor.u32 %v3165, %v3168
      %v3170 = vrot.slane %v3169, 4
      %v3172 = vshll.u32 %v3073, 16
      %v3174 = vrot.slane %v3172, 5
      %v3175 = vsel %vm252, %v3170, %v3174
      %v3176 = vshrl.u32 %v3073, 16
      %v3178 = vrot.slane %v3176, 4
      %v3179 = vor.u32 %v3178, %v3174
      %v3180 = vrot.slane %v3179, 4
      %v3182 = vshll.u32 %v3074, 16
      %v3184 = vrot.slane %v3182, 5
      %v3185 = vsel %vm252, %v3180, %v3184
      %v3187 = vshrl.u32 %v3075, 16
      %v3189 = vrot.slane %v3187, 4
      %v3190 = vshll.u32 %v3075, 16
      %v3192 = vrot.slane %v3190, 5
      %v3193 = vor.u32 %v3189, %v3192
      %v3194 = vrot.slane %v3193, 4
      %v3196 = vshll.u32 %v3076, 16
      %v3198 = vrot.slane %v3196, 5
      %v3199 = vsel %vm252, %v3194, %v3198
      %v3200 = vshrl.u32 %v3076, 16
      %v3202 = vrot.slane %v3200, 4
      %v3203 = vor.u32 %v3202, %v3198
      %v3204 = vrot.slane %v3203, 4
      %v3206 = vshll.u32 %v3077, 16
      %v3208 = vrot.slane %v3206, 5
      %v3209 = vsel %vm252, %v3204, %v3208
      %v3211 = vshrl.u32 %v3078, 16
      %v3213 = vrot.slane %v3211, 4
      %v3214 = vshll.u32 %v3078, 16
      %v3216 = vrot.slane %v3214, 5
      %v3217 = vor.u32 %v3213, %v3216
      %v3218 = vrot.slane %v3217, 4
      %v3220 = vshll.u32 %v3079, 16
      %v3222 = vrot.slane %v3220, 5
      %v3223 = vsel %vm252, %v3218, %v3222
      %v3224 = vshrl.u32 %v3079, 16
      %v3226 = vrot.slane %v3224, 4
      %v3227 = vor.u32 %v3226, %v3222
      %v3228 = vrot.slane %v3227, 4
      %v3230 = vshll.u32 %v3080, 16
      %v3232 = vrot.slane %v3230, 5
      %v3233 = vsel %vm252, %v3228, %v3232
      %v3235 = vshrl.u32 %v3081, 16
      %v3237 = vrot.slane %v3235, 4
      %v3238 = vshll.u32 %v3081, 16
      %v3240 = vrot.slane %v3238, 5
      %v3241 = vor.u32 %v3237, %v3240
      %v3242 = vrot.slane %v3241, 4
      %v3244 = vshll.u32 %v3082, 16
      %v3246 = vrot.slane %v3244, 5
      %v3247 = vsel %vm252, %v3242, %v3246
      %v3248 = vshrl.u32 %v3082, 16
      %v3250 = vrot.slane %v3248, 4
      %v3251 = vor.u32 %v3250, %v3246
      %v3252 = vrot.slane %v3251, 4
      %v3254 = vshll.u32 %v3083, 16
      %v3256 = vrot.slane %v3254, 5
      %v3257 = vsel %vm252, %v3252, %v3256
      %v3259 = vshrl.u32 %v3084, 16
      %v3261 = vrot.slane %v3259, 4
      %v3262 = vshll.u32 %v3084, 16
      %v3264 = vrot.slane %v3262, 5
      %v3265 = vor.u32 %v3261, %v3264
      %v3266 = vrot.slane %v3265, 4
      %v3268 = vshll.u32 %v3085, 16
      %v3270 = vrot.slane %v3268, 5
      %v3271 = vsel %vm252, %v3266, %v3270
      %v3272 = vshrl.u32 %v3085, 16
      %v3274 = vrot.slane %v3272, 4
      %v3275 = vor.u32 %v3274, %v3270
      %v3276 = vrot.slane %v3275, 4
      %v3278 = vshll.u32 %v3086, 16
      %v3280 = vrot.slane %v3278, 5
      %v3281 = vsel %vm252, %v3276, %v3280
      %v3283 = vshrl.u32 %v3087, 16
      %v3285 = vrot.slane %v3283, 4
      %v3286 = vshll.u32 %v3087, 16
      %v3288 = vrot.slane %v3286, 5
      %v3289 = vor.u32 %v3285, %v3288
      %v3290 = vrot.slane %v3289, 4
      %v3292 = vshll.u32 %v3088, 16
      %v3294 = vrot.slane %v3292, 5
      %v3295 = vsel %vm252, %v3290, %v3294
      %v3296 = vshrl.u32 %v3088, 16
      %v3298 = vrot.slane %v3296, 4
      %v3299 = vor.u32 %v3298, %v3294
      %v3300 = vrot.slane %v3299, 4
      %v3302 = vshll.u32 %v3089, 16
      %v3304 = vrot.slane %v3302, 5
      %v3305 = vsel %vm252, %v3300, %v3304
      %v3307 = vshrl.u32 %v3090, 16
      %v3309 = vrot.slane %v3307, 4
      %v3310 = vshll.u32 %v3090, 16
      %v3312 = vrot.slane %v3310, 5
      %v3313 = vor.u32 %v3309, %v3312
      %v3314 = vrot.slane %v3313, 4
      %v3316 = vshll.u32 %v3091, 16
      %v3318 = vrot.slane %v3316, 5
      %v3319 = vsel %vm252, %v3314, %v3318
      %v3320 = vshrl.u32 %v3091, 16
      %v3322 = vrot.slane %v3320, 4
      %v3323 = vor.u32 %v3322, %v3318
      %v3324 = vrot.slane %v3323, 4
      %v3326 = vshll.u32 %v3092, 16
      %v3328 = vrot.slane %v3326, 5
      %v3329 = vsel %vm252, %v3324, %v3328
      %v3331 = vshrl.u32 %v3093, 16
      %v3333 = vrot.slane %v3331, 4
      %v3334 = vshll.u32 %v3093, 16
      %v3336 = vrot.slane %v3334, 5
      %v3337 = vor.u32 %v3333, %v3336
      %v3338 = vrot.slane %v3337, 4
      %v3340 = vshll.u32 %v3094, 16
      %v3342 = vrot.slane %v3340, 5
      %v3343 = vsel %vm252, %v3338, %v3342
      %v3344 = vshrl.u32 %v3094, 16
      %v3346 = vrot.slane %v3344, 4
      %v3347 = vor.u32 %v3346, %v3342
      %v3348 = vrot.slane %v3347, 4
      %v3350 = vshll.u32 %v3095, 16
      %v3352 = vrot.slane %v3350, 5
      %v3353 = vsel %vm252, %v3348, %v3352
      %v3355 = vshrl.u32 %v3096, 16
      %v3357 = vrot.slane %v3355, 4
      %v3358 = vshll.u32 %v3096, 16
      %v3360 = vrot.slane %v3358, 5
      %v3361 = vor.u32 %v3357, %v3360
      %v3362 = vrot.slane %v3361, 4
      %v3364 = vshll.u32 %v3097, 16
      %v3366 = vrot.slane %v3364, 5
      %v3367 = vsel %vm252, %v3362, %v3366
      %v3368 = vshrl.u32 %v3097, 16
      %v3370 = vrot.slane %v3368, 4
      %v3371 = vor.u32 %v3370, %v3366
      %v3372 = vrot.slane %v3371, 4
      %v3374 = vshll.u32 %v3098, 16
      %v3376 = vrot.slane %v3374, 5
      %v3377 = vsel %vm252, %v3372, %v3376
      %v3379 = vshrl.u32 %v3099, 16
      %v3381 = vrot.slane %v3379, 4
      %v3382 = vshll.u32 %v3099, 16
      %v3384 = vrot.slane %v3382, 5
      %v3385 = vor.u32 %v3381, %v3384
      %v3386 = vrot.slane %v3385, 4
      %v3388 = vshll.u32 %v3100, 16
      %v3390 = vrot.slane %v3388, 5
      %v3391 = vsel %vm252, %v3386, %v3390
      %v3392 = vshrl.u32 %v3100, 16
      %v3394 = vrot.slane %v3392, 4
      %v3395 = vor.u32 %v3394, %v3390
      %v3396 = vrot.slane %v3395, 4
      %v3398 = vshll.u32 %v3101, 16
      %v3400 = vrot.slane %v3398, 5
      %v3401 = vsel %vm252, %v3396, %v3400
      %v3403 = vshrl.u32 %v3102, 16
      %v3405 = vrot.slane %v3403, 4
      %v3406 = vshll.u32 %v3102, 16
      %v3408 = vrot.slane %v3406, 5
      %v3409 = vor.u32 %v3405, %v3408
      %v3410 = vrot.slane %v3409, 4
      %v3412 = vshll.u32 %v3103, 16
      %v3414 = vrot.slane %v3412, 5
      %v3415 = vsel %vm252, %v3410, %v3414
      %v3416 = vshrl.u32 %v3103, 16
      %v3418 = vrot.slane %v3416, 4
      %v3419 = vor.u32 %v3418, %v3414
      %v3420 = vrot.slane %v3419, 4
      %v3422 = vshll.u32 %v3104, 16
      %v3424 = vrot.slane %v3422, 5
      %v3425 = vsel %vm252, %v3420, %v3424
      %v3427 = vshrl.u32 %v3105, 16
      %v3429 = vrot.slane %v3427, 4
      %v3430 = vshll.u32 %v3105, 16
      %v3432 = vrot.slane %v3430, 5
      %v3433 = vor.u32 %v3429, %v3432
      %v3434 = vrot.slane %v3433, 4
      %v3436 = vshll.u32 %v3106, 16
      %v3438 = vrot.slane %v3436, 5
      %v3439 = vsel %vm252, %v3434, %v3438
      %v3440 = vshrl.u32 %v3106, 16
      %v3442 = vrot.slane %v3440, 4
      %v3443 = vor.u32 %v3442, %v3438
      %v3444 = vrot.slane %v3443, 4
      %v3446 = vshll.u32 %v3107, 16
      %v3448 = vrot.slane %v3446, 5
      %v3449 = vsel %vm252, %v3444, %v3448
      %v3451 = vshrl.u32 %v3108, 16
      %v3453 = vrot.slane %v3451, 4
      %v3454 = vshll.u32 %v3108, 16
      %v3456 = vrot.slane %v3454, 5
      %v3457 = vor.u32 %v3453, %v3456
      %v3458 = vrot.slane %v3457, 4
      %v3460 = vshll.u32 %v3109, 16
      %v3462 = vrot.slane %v3460, 5
      %v3463 = vsel %vm252, %v3458, %v3462
      %v3464 = vshrl.u32 %v3109, 16
      %v3466 = vrot.slane %v3464, 4
      %v3467 = vor.u32 %v3466, %v3462
      %v3468 = vrot.slane %v3467, 4
      %v3470 = vshll.u32 %v3110, 16
      %v3472 = vrot.slane %v3470, 5
      %v3473 = vsel %vm252, %v3468, %v3472
      %v3475 = vshrl.u32 %v3111, 16
      %v3477 = vrot.slane %v3475, 4
      %v3478 = vshll.u32 %v3111, 16
      %v3480 = vrot.slane %v3478, 5
      %v3481 = vor.u32 %v3477, %v3480
      %v3482 = vrot.slane %v3481, 4
      %v3484 = vshll.u32 %v3112, 16
      %v3486 = vrot.slane %v3484, 5
      %v3487 = vsel %vm252, %v3482, %v3486
      %v3488 = vshrl.u32 %v3112, 16
      %v3490 = vrot.slane %v3488, 4
      %v3491 = vor.u32 %v3490, %v3486
      %v3492 = vrot.slane %v3491, 4
      %v3494 = vshll.u32 %v3113, 16
      %v3496 = vrot.slane %v3494, 5
      %v3497 = vsel %vm252, %v3492, %v3496
      %s3498 = scalar_lea.vmem %s1, 14
      %v3499 = vld [vmem:[%s3498] sm:$0x3]
      %v3500 = vunpack.c.l.b16 %v3127
      %v3501 = vunpack.c.l.b16 %v3137
      %v3502 = vunpack.c.l.b16 %v3151
      %v3503 = vunpack.c.l.b16 %v3161
      %v3504 = vunpack.c.l.b16 %v3175
      %v3505 = vunpack.c.l.b16 %v3185
      %v3506 = vunpack.c.l.b16 %v3199
      %v3507 = vunpack.c.l.b16 %v3209
      %v3508 = vunpack.c.l.b16 %v3223
      %v3509 = vunpack.c.l.b16 %v3233
      %v3510 = vunpack.c.l.b16 %v3247
      %v3511 = vunpack.c.l.b16 %v3257
      %v3512 = vunpack.c.l.b16 %v3271
      %v3513 = vunpack.c.l.b16 %v3281
      %v3514 = vunpack.c.l.b16 %v3295
      %v3515 = vunpack.c.l.b16 %v3305
      %v3516 = vunpack.c.l.b16 %v3319
      %v3517 = vunpack.c.l.b16 %v3329
      %v3518 = vunpack.c.l.b16 %v3343
      %v3519 = vunpack.c.l.b16 %v3353
      %v3520 = vunpack.c.l.b16 %v3367
      %v3521 = vunpack.c.l.b16 %v3377
      %v3522 = vunpack.c.l.b16 %v3391
      %v3523 = vunpack.c.l.b16 %v3401
      %v3524 = vunpack.c.l.b16 %v3415
      %v3525 = vunpack.c.l.b16 %v3425
      %v3526 = vunpack.c.l.b16 %v3439
      %v3527 = vunpack.c.l.b16 %v3449
      %v3528 = vunpack.c.l.b16 %v3463
      %v3529 = vunpack.c.l.b16 %v3473
      %v3530 = vunpack.c.l.b16 %v3487
      %v3531 = vunpack.c.l.b16 %v3497
      %v3532 = vpack.c.b16 %v3501, %v3500
      %v3533 = vpack.c.b16 %v3503, %v3502
      %v3534 = vpack.c.b16 %v3505, %v3504
      %v3535 = vpack.c.b16 %v3507, %v3506
      %v3536 = vpack.c.b16 %v3509, %v3508
      %v3537 = vpack.c.b16 %v3511, %v3510
      %v3538 = vpack.c.b16 %v3513, %v3512
      %v3539 = vpack.c.b16 %v3515, %v3514
      %v3540 = vpack.c.b16 %v3517, %v3516
      %v3541 = vpack.c.b16 %v3519, %v3518
      %v3542 = vpack.c.b16 %v3521, %v3520
      %v3543 = vpack.c.b16 %v3523, %v3522
      %v3544 = vpack.c.b16 %v3525, %v3524
      %v3545 = vpack.c.b16 %v3527, %v3526
      %v3546 = vpack.c.b16 %v3529, %v3528
      %v3547 = vpack.c.b16 %v3531, %v3530
      %v3549 = vsel %vm687, %v3532, 0
      %v3552 = vsel %vm687, %v3533, 0
      %v3555 = vsel %vm687, %v3534, 0
      %v3558 = vsel %vm687, %v3535, 0
      %v3561 = vsel %vm687, %v3536, 0
      %v3564 = vsel %vm687, %v3537, 0
      %v3567 = vsel %vm687, %v3538, 0
      %v3570 = vsel %vm687, %v3539, 0
      %v3573 = vsel %vm687, %v3540, 0
      %v3576 = vsel %vm687, %v3541, 0
      %v3579 = vsel %vm687, %v3542, 0
      %v3582 = vsel %vm687, %v3543, 0
      %v3585 = vsel %vm687, %v3544, 0
      %v3588 = vsel %vm687, %v3545, 0
      %v3591 = vsel %vm687, %v3546, 0
      %v3594 = vsel %vm687, %v3547, 0
      %v3597 = vsel %vm736, %v3499, 0
      %3599 = vmatpush.bf16.msra.mxu0 0
      %3600 = vmatpush.bf16.msra.mxu0 0
      %3601 = vmatpush.bf16.msra.mxu0 0
      %3602 = vmatpush.bf16.msra.mxu0 0
      %3603 = vmatpush.bf16.msra.mxu0 0
      %3604 = vmatpush.bf16.msra.mxu0 0
      %3605 = vmatpush.bf16.msra.mxu0 0
      %3606 = vmatpush.bf16.msra.mxu0 %v3597
      %3607 = vmatmul.bf16.gmra.mxu0 %v3549
      %v3608 = vpop.f32.mrf.mxu0
      %v3609 = vadd.f32 0.0, %v3608
      %v3610 = vpop.f32.mrf.mxu0
      %v3611 = vadd.f32 0.0, %v3610
      %3612 = vmatmul.bf16.gmra.mxu0 %v3552
      %v3613 = vpop.f32.mrf.mxu0
      %v3614 = vadd.f32 0.0, %v3613
      %v3615 = vpop.f32.mrf.mxu0
      %v3616 = vadd.f32 0.0, %v3615
      %3617 = vmatmul.bf16.gmra.mxu0 %v3555
      %v3618 = vpop.f32.mrf.mxu0
      %v3619 = vadd.f32 0.0, %v3618
      %v3620 = vpop.f32.mrf.mxu0
      %v3621 = vadd.f32 0.0, %v3620
      %3622 = vmatmul.bf16.gmra.mxu0 %v3558
      %v3623 = vpop.f32.mrf.mxu0
      %v3624 = vadd.f32 0.0, %v3623
      %v3625 = vpop.f32.mrf.mxu0
      %v3626 = vadd.f32 0.0, %v3625
      %3627 = vmatmul.bf16.gmra.mxu0 %v3561
      %v3628 = vpop.f32.mrf.mxu0
      %v3629 = vadd.f32 0.0, %v3628
      %v3630 = vpop.f32.mrf.mxu0
      %v3631 = vadd.f32 0.0, %v3630
      %3632 = vmatmul.bf16.gmra.mxu0 %v3564
      %v3633 = vpop.f32.mrf.mxu0
      %v3634 = vadd.f32 0.0, %v3633
      %v3635 = vpop.f32.mrf.mxu0
      %v3636 = vadd.f32 0.0, %v3635
      %3637 = vmatmul.bf16.gmra.mxu0 %v3567
      %v3638 = vpop.f32.mrf.mxu0
      %v3639 = vadd.f32 0.0, %v3638
      %v3640 = vpop.f32.mrf.mxu0
      %v3641 = vadd.f32 0.0, %v3640
      %3642 = vmatmul.bf16.gmra.mxu0 %v3570
      %v3643 = vpop.f32.mrf.mxu0
      %v3644 = vadd.f32 0.0, %v3643
      %v3645 = vpop.f32.mrf.mxu0
      %v3646 = vadd.f32 0.0, %v3645
      %3647 = vmatmul.bf16.gmra.mxu0 %v3573
      %v3648 = vpop.f32.mrf.mxu0
      %v3649 = vadd.f32 0.0, %v3648
      %v3650 = vpop.f32.mrf.mxu0
      %v3651 = vadd.f32 0.0, %v3650
      %3652 = vmatmul.bf16.gmra.mxu0 %v3576
      %v3653 = vpop.f32.mrf.mxu0
      %v3654 = vadd.f32 0.0, %v3653
      %v3655 = vpop.f32.mrf.mxu0
      %v3656 = vadd.f32 0.0, %v3655
      %3657 = vmatmul.bf16.gmra.mxu0 %v3579
      %v3658 = vpop.f32.mrf.mxu0
      %v3659 = vadd.f32 0.0, %v3658
      %v3660 = vpop.f32.mrf.mxu0
      %v3661 = vadd.f32 0.0, %v3660
      %3662 = vmatmul.bf16.gmra.mxu0 %v3582
      %v3663 = vpop.f32.mrf.mxu0
      %v3664 = vadd.f32 0.0, %v3663
      %v3665 = vpop.f32.mrf.mxu0
      %v3666 = vadd.f32 0.0, %v3665
      %3667 = vmatmul.bf16.gmra.mxu0 %v3585
      %v3668 = vpop.f32.mrf.mxu0
      %v3669 = vadd.f32 0.0, %v3668
      %v3670 = vpop.f32.mrf.mxu0
      %v3671 = vadd.f32 0.0, %v3670
      %3672 = vmatmul.bf16.gmra.mxu0 %v3588
      %v3673 = vpop.f32.mrf.mxu0
      %v3674 = vadd.f32 0.0, %v3673
      %v3675 = vpop.f32.mrf.mxu0
      %v3676 = vadd.f32 0.0, %v3675
      %3677 = vmatmul.bf16.gmra.mxu0 %v3591
      %v3678 = vpop.f32.mrf.mxu0
      %v3679 = vadd.f32 0.0, %v3678
      %v3680 = vpop.f32.mrf.mxu0
      %v3681 = vadd.f32 0.0, %v3680
      %3682 = vmatmul.bf16.gmra.mxu0 %v3594
      %v3683 = vpop.f32.mrf.mxu0
      %v3684 = vadd.f32 0.0, %v3683
      %v3685 = vpop.f32.mrf.mxu0
      %v3686 = vadd.f32 0.0, %v3685
      %3687 = vdwg.mxu0
      %v3688 = vadd.f32 %v3034, %v3609
      %v3689 = vadd.f32 %v3035, %v3611
      %v3690 = vadd.f32 %v3036, %v3614
      %v3691 = vadd.f32 %v3037, %v3616
      %v3692 = vadd.f32 %v3038, %v3619
      %v3693 = vadd.f32 %v3039, %v3621
      %v3694 = vadd.f32 %v3040, %v3624
      %v3695 = vadd.f32 %v3041, %v3626
      %v3696 = vadd.f32 %v3042, %v3629
      %v3697 = vadd.f32 %v3043, %v3631
      %v3698 = vadd.f32 %v3044, %v3634
      %v3699 = vadd.f32 %v3045, %v3636
      %v3700 = vadd.f32 %v3046, %v3639
      %v3701 = vadd.f32 %v3047, %v3641
      %v3702 = vadd.f32 %v3048, %v3644
      %v3703 = vadd.f32 %v3049, %v3646
      %v3704 = vadd.f32 %v3050, %v3649
      %v3705 = vadd.f32 %v3051, %v3651
      %v3706 = vadd.f32 %v3052, %v3654
      %v3707 = vadd.f32 %v3053, %v3656
      %v3708 = vadd.f32 %v3054, %v3659
      %v3709 = vadd.f32 %v3055, %v3661
      %v3710 = vadd.f32 %v3056, %v3664
      %v3711 = vadd.f32 %v3057, %v3666
      %v3712 = vadd.f32 %v3058, %v3669
      %v3713 = vadd.f32 %v3059, %v3671
      %v3714 = vadd.f32 %v3060, %v3674
      %v3715 = vadd.f32 %v3061, %v3676
      %v3716 = vadd.f32 %v3062, %v3679
      %v3717 = vadd.f32 %v3063, %v3681
      %v3718 = vadd.f32 %v3064, %v3684
      %v3719 = vadd.f32 %v3065, %v3686
      %v3720 = vld [vmem:[%s2779] sm:$0xe]
      %v3721 = vld [vmem:[%s2779 + $0xc] sm:$0xe]
      %v3722 = vld [vmem:[%s2779 + $0x18] sm:$0xe]
      %v3723 = vld [vmem:[%s2779 + $0x24] sm:$0xe]
      %v3724 = vld [vmem:[%s2779 + $0x30] sm:$0xe]
      %v3725 = vld [vmem:[%s2779 + $0x3c] sm:$0xe]
      %v3726 = vld [vmem:[%s2779 + $0x48] sm:$0xe]
      %v3727 = vld [vmem:[%s2779 + $0x54] sm:$0xe]
      %v3728 = vld [vmem:[%s2779 + $0x60] sm:$0xe]
      %v3729 = vld [vmem:[%s2779 + $0x6c] sm:$0xe]
      %v3730 = vld [vmem:[%s2779 + $0x78] sm:$0xe]
      %v3731 = vld [vmem:[%s2779 + $0x84] sm:$0xe]
      %v3732 = vld [vmem:[%s2779 + $0x90] sm:$0xe]
      %v3733 = vld [vmem:[%s2779 + $0x9c] sm:$0xe]
      %v3734 = vld [vmem:[%s2779 + $0xa8] sm:$0xe]
      %v3735 = vld [vmem:[%s2779 + $0xb4] sm:$0xe]
      %v3784 = vrot.slane %v3720, 5
      %v3785 = vrot.slane %v3784, 4
      %v3786 = vrot.slane %v3067, 5
      %v3787 = vsel %vm1099, %v3785, %v3786
      %v3788 = vrot.slane %v3786, 4
      %v3789 = vrot.slane %v3068, 5
      %v3790 = vsel %vm1099, %v3788, %v3789
      %v3791 = vrot.slane %v3721, 5
      %v3792 = vrot.slane %v3791, 4
      %v3793 = vrot.slane %v3070, 5
      %v3794 = vsel %vm1099, %v3792, %v3793
      %v3795 = vrot.slane %v3793, 4
      %v3796 = vrot.slane %v3071, 5
      %v3797 = vsel %vm1099, %v3795, %v3796
      %v3798 = vrot.slane %v3722, 5
      %v3799 = vrot.slane %v3798, 4
      %v3800 = vrot.slane %v3073, 5
      %v3801 = vsel %vm1099, %v3799, %v3800
      %v3802 = vrot.slane %v3800, 4
      %v3803 = vrot.slane %v3074, 5
      %v3804 = vsel %vm1099, %v3802, %v3803
      %v3805 = vrot.slane %v3723, 5
      %v3806 = vrot.slane %v3805, 4
      %v3807 = vrot.slane %v3076, 5
      %v3808 = vsel %vm1099, %v3806, %v3807
      %v3809 = vrot.slane %v3807, 4
      %v3810 = vrot.slane %v3077, 5
      %v3811 = vsel %vm1099, %v3809, %v3810
      %v3812 = vrot.slane %v3724, 5
      %v3813 = vrot.slane %v3812, 4
      %v3814 = vrot.slane %v3079, 5
      %v3815 = vsel %vm1099, %v3813, %v3814
      %v3816 = vrot.slane %v3814, 4
      %v3817 = vrot.slane %v3080, 5
      %v3818 = vsel %vm1099, %v3816, %v3817
      %v3819 = vrot.slane %v3725, 5
      %v3820 = vrot.slane %v3819, 4
      %v3821 = vrot.slane %v3082, 5
      %v3822 = vsel %vm1099, %v3820, %v3821
      %v3823 = vrot.slane %v3821, 4
      %v3824 = vrot.slane %v3083, 5
      %v3825 = vsel %vm1099, %v3823, %v3824
      %v3826 = vrot.slane %v3726, 5
      %v3827 = vrot.slane %v3826, 4
      %v3828 = vrot.slane %v3085, 5
      %v3829 = vsel %vm1099, %v3827, %v3828
      %v3830 = vrot.slane %v3828, 4
      %v3831 = vrot.slane %v3086, 5
      %v3832 = vsel %vm1099, %v3830, %v3831
      %v3833 = vrot.slane %v3727, 5
      %v3834 = vrot.slane %v3833, 4
      %v3835 = vrot.slane %v3088, 5
      %v3836 = vsel %vm1099, %v3834, %v3835
      %v3837 = vrot.slane %v3835, 4
      %v3838 = vrot.slane %v3089, 5
      %v3839 = vsel %vm1099, %v3837, %v3838
      %v3840 = vrot.slane %v3728, 5
      %v3841 = vrot.slane %v3840, 4
      %v3842 = vrot.slane %v3091, 5
      %v3843 = vsel %vm1099, %v3841, %v3842
      %v3844 = vrot.slane %v3842, 4
      %v3845 = vrot.slane %v3092, 5
      %v3846 = vsel %vm1099, %v3844, %v3845
      %v3847 = vrot.slane %v3729, 5
      %v3848 = vrot.slane %v3847, 4
      %v3849 = vrot.slane %v3094, 5
      %v3850 = vsel %vm1099, %v3848, %v3849
      %v3851 = vrot.slane %v3849, 4
      %v3852 = vrot.slane %v3095, 5
      %v3853 = vsel %vm1099, %v3851, %v3852
      %v3854 = vrot.slane %v3730, 5
      %v3855 = vrot.slane %v3854, 4
      %v3856 = vrot.slane %v3097, 5
      %v3857 = vsel %vm1099, %v3855, %v3856
      %v3858 = vrot.slane %v3856, 4
      %v3859 = vrot.slane %v3098, 5
      %v3860 = vsel %vm1099, %v3858, %v3859
      %v3861 = vrot.slane %v3731, 5
      %v3862 = vrot.slane %v3861, 4
      %v3863 = vrot.slane %v3100, 5
      %v3864 = vsel %vm1099, %v3862, %v3863
      %v3865 = vrot.slane %v3863, 4
      %v3866 = vrot.slane %v3101, 5
      %v3867 = vsel %vm1099, %v3865, %v3866
      %v3868 = vrot.slane %v3732, 5
      %v3869 = vrot.slane %v3868, 4
      %v3870 = vrot.slane %v3103, 5
      %v3871 = vsel %vm1099, %v3869, %v3870
      %v3872 = vrot.slane %v3870, 4
      %v3873 = vrot.slane %v3104, 5
      %v3874 = vsel %vm1099, %v3872, %v3873
      %v3875 = vrot.slane %v3733, 5
      %v3876 = vrot.slane %v3875, 4
      %v3877 = vrot.slane %v3106, 5
      %v3878 = vsel %vm1099, %v3876, %v3877
      %v3879 = vrot.slane %v3877, 4
      %v3880 = vrot.slane %v3107, 5
      %v3881 = vsel %vm1099, %v3879, %v3880
      %v3882 = vrot.slane %v3734, 5
      %v3883 = vrot.slane %v3882, 4
      %v3884 = vrot.slane %v3109, 5
      %v3885 = vsel %vm1099, %v3883, %v3884
      %v3886 = vrot.slane %v3884, 4
      %v3887 = vrot.slane %v3110, 5
      %v3888 = vsel %vm1099, %v3886, %v3887
      %v3889 = vrot.slane %v3735, 5
      %v3890 = vrot.slane %v3889, 4
      %v3891 = vrot.slane %v3112, 5
      %v3892 = vsel %vm1099, %v3890, %v3891
      %v3893 = vrot.slane %v3891, 4
      %v3894 = vrot.slane %v3113, 5
      %v3895 = vsel %vm1099, %v3893, %v3894
      %s3896 = scalar_lea.vmem %s1, 16
      %v3897 = vld [vmem:[%s3896] sm:$0x3]
      %v3898 = vunpack.c.l.b16 %v3787
      %v3899 = vunpack.c.l.b16 %v3790
      %v3900 = vunpack.c.l.b16 %v3794
      %v3901 = vunpack.c.l.b16 %v3797
      %v3902 = vunpack.c.l.b16 %v3801
      %v3903 = vunpack.c.l.b16 %v3804
      %v3904 = vunpack.c.l.b16 %v3808
      %v3905 = vunpack.c.l.b16 %v3811
      %v3906 = vunpack.c.l.b16 %v3815
      %v3907 = vunpack.c.l.b16 %v3818
      %v3908 = vunpack.c.l.b16 %v3822
      %v3909 = vunpack.c.l.b16 %v3825
      %v3910 = vunpack.c.l.b16 %v3829
      %v3911 = vunpack.c.l.b16 %v3832
      %v3912 = vunpack.c.l.b16 %v3836
      %v3913 = vunpack.c.l.b16 %v3839
      %v3914 = vunpack.c.l.b16 %v3843
      %v3915 = vunpack.c.l.b16 %v3846
      %v3916 = vunpack.c.l.b16 %v3850
      %v3917 = vunpack.c.l.b16 %v3853
      %v3918 = vunpack.c.l.b16 %v3857
      %v3919 = vunpack.c.l.b16 %v3860
      %v3920 = vunpack.c.l.b16 %v3864
      %v3921 = vunpack.c.l.b16 %v3867
      %v3922 = vunpack.c.l.b16 %v3871
      %v3923 = vunpack.c.l.b16 %v3874
      %v3924 = vunpack.c.l.b16 %v3878
      %v3925 = vunpack.c.l.b16 %v3881
      %v3926 = vunpack.c.l.b16 %v3885
      %v3927 = vunpack.c.l.b16 %v3888
      %v3928 = vunpack.c.l.b16 %v3892
      %v3929 = vunpack.c.l.b16 %v3895
      %v3930 = vpack.c.b16 %v3899, %v3898
      %v3931 = vpack.c.b16 %v3901, %v3900
      %v3932 = vpack.c.b16 %v3903, %v3902
      %v3933 = vpack.c.b16 %v3905, %v3904
      %v3934 = vpack.c.b16 %v3907, %v3906
      %v3935 = vpack.c.b16 %v3909, %v3908
      %v3936 = vpack.c.b16 %v3911, %v3910
      %v3937 = vpack.c.b16 %v3913, %v3912
      %v3938 = vpack.c.b16 %v3915, %v3914
      %v3939 = vpack.c.b16 %v3917, %v3916
      %v3940 = vpack.c.b16 %v3919, %v3918
      %v3941 = vpack.c.b16 %v3921, %v3920
      %v3942 = vpack.c.b16 %v3923, %v3922
      %v3943 = vpack.c.b16 %v3925, %v3924
      %v3944 = vpack.c.b16 %v3927, %v3926
      %v3945 = vpack.c.b16 %v3929, %v3928
      %v3947 = vsel %vm687, %v3930, 0
      %v3950 = vsel %vm687, %v3931, 0
      %v3953 = vsel %vm687, %v3932, 0
      %v3956 = vsel %vm687, %v3933, 0
      %v3959 = vsel %vm687, %v3934, 0
      %v3962 = vsel %vm687, %v3935, 0
      %v3965 = vsel %vm687, %v3936, 0
      %v3968 = vsel %vm687, %v3937, 0
      %v3971 = vsel %vm687, %v3938, 0
      %v3974 = vsel %vm687, %v3939, 0
      %v3977 = vsel %vm687, %v3940, 0
      %v3980 = vsel %vm687, %v3941, 0
      %v3983 = vsel %vm687, %v3942, 0
      %v3986 = vsel %vm687, %v3943, 0
      %v3989 = vsel %vm687, %v3944, 0
      %v3992 = vsel %vm687, %v3945, 0
      %v3995 = vsel %vm736, %v3897, 0
      %3997 = vmatpush.bf16.msra.mxu0 0
      %3998 = vmatpush.bf16.msra.mxu0 0
      %3999 = vmatpush.bf16.msra.mxu0 0
      %4000 = vmatpush.bf16.msra.mxu0 0
      %4001 = vmatpush.bf16.msra.mxu0 0
      %4002 = vmatpush.bf16.msra.mxu0 0
      %4003 = vmatpush.bf16.msra.mxu0 0
      %4004 = vmatpush.bf16.msra.mxu0 %v3995
      %4005 = vmatmul.bf16.gmra.mxu0 %v3947
      %v4006 = vpop.f32.mrf.mxu0
      %v4007 = vadd.f32 0.0, %v4006
      %v4008 = vpop.f32.mrf.mxu0
      %v4009 = vadd.f32 0.0, %v4008
      %4010 = vmatmul.bf16.gmra.mxu0 %v3950
      %v4011 = vpop.f32.mrf.mxu0
      %v4012 = vadd.f32 0.0, %v4011
      %v4013 = vpop.f32.mrf.mxu0
      %v4014 = vadd.f32 0.0, %v4013
      %4015 = vmatmul.bf16.gmra.mxu0 %v3953
      %v4016 = vpop.f32.mrf.mxu0
      %v4017 = vadd.f32 0.0, %v4016
      %v4018 = vpop.f32.mrf.mxu0
      %v4019 = vadd.f32 0.0, %v4018
      %4020 = vmatmul.bf16.gmra.mxu0 %v3956
      %v4021 = vpop.f32.mrf.mxu0
      %v4022 = vadd.f32 0.0, %v4021
      %v4023 = vpop.f32.mrf.mxu0
      %v4024 = vadd.f32 0.0, %v4023
      %4025 = vmatmul.bf16.gmra.mxu0 %v3959
      %v4026 = vpop.f32.mrf.mxu0
      %v4027 = vadd.f32 0.0, %v4026
      %v4028 = vpop.f32.mrf.mxu0
      %v4029 = vadd.f32 0.0, %v4028
      %4030 = vmatmul.bf16.gmra.mxu0 %v3962
      %v4031 = vpop.f32.mrf.mxu0
      %v4032 = vadd.f32 0.0, %v4031
      %v4033 = vpop.f32.mrf.mxu0
      %v4034 = vadd.f32 0.0, %v4033
      %4035 = vmatmul.bf16.gmra.mxu0 %v3965
      %v4036 = vpop.f32.mrf.mxu0
      %v4037 = vadd.f32 0.0, %v4036
      %v4038 = vpop.f32.mrf.mxu0
      %v4039 = vadd.f32 0.0, %v4038
      %4040 = vmatmul.bf16.gmra.mxu0 %v3968
      %v4041 = vpop.f32.mrf.mxu0
      %v4042 = vadd.f32 0.0, %v4041
      %v4043 = vpop.f32.mrf.mxu0
      %v4044 = vadd.f32 0.0, %v4043
      %4045 = vmatmul.bf16.gmra.mxu0 %v3971
      %v4046 = vpop.f32.mrf.mxu0
      %v4047 = vadd.f32 0.0, %v4046
      %v4048 = vpop.f32.mrf.mxu0
      %v4049 = vadd.f32 0.0, %v4048
      %4050 = vmatmul.bf16.gmra.mxu0 %v3974
      %v4051 = vpop.f32.mrf.mxu0
      %v4052 = vadd.f32 0.0, %v4051
      %v4053 = vpop.f32.mrf.mxu0
      %v4054 = vadd.f32 0.0, %v4053
      %4055 = vmatmul.bf16.gmra.mxu0 %v3977
      %v4056 = vpop.f32.mrf.mxu0
      %v4057 = vadd.f32 0.0, %v4056
      %v4058 = vpop.f32.mrf.mxu0
      %v4059 = vadd.f32 0.0, %v4058
      %4060 = vmatmul.bf16.gmra.mxu0 %v3980
      %v4061 = vpop.f32.mrf.mxu0
      %v4062 = vadd.f32 0.0, %v4061
      %v4063 = vpop.f32.mrf.mxu0
      %v4064 = vadd.f32 0.0, %v4063
      %4065 = vmatmul.bf16.gmra.mxu0 %v3983
      %v4066 = vpop.f32.mrf.mxu0
      %v4067 = vadd.f32 0.0, %v4066
      %v4068 = vpop.f32.mrf.mxu0
      %v4069 = vadd.f32 0.0, %v4068
      %4070 = vmatmul.bf16.gmra.mxu0 %v3986
      %v4071 = vpop.f32.mrf.mxu0
      %v4072 = vadd.f32 0.0, %v4071
      %v4073 = vpop.f32.mrf.mxu0
      %v4074 = vadd.f32 0.0, %v4073
      %4075 = vmatmul.bf16.gmra.mxu0 %v3989
      %v4076 = vpop.f32.mrf.mxu0
      %v4077 = vadd.f32 0.0, %v4076
      %v4078 = vpop.f32.mrf.mxu0
      %v4079 = vadd.f32 0.0, %v4078
      %4080 = vmatmul.bf16.gmra.mxu0 %v3992
      %v4081 = vpop.f32.mrf.mxu0
      %v4082 = vadd.f32 0.0, %v4081
      %v4083 = vpop.f32.mrf.mxu0
      %v4084 = vadd.f32 0.0, %v4083
      %4085 = vdwg.mxu0
      %v4086 = vadd.f32 %v3688, %v4007
      %v4087 = vadd.f32 %v3689, %v4009
      %v4088 = vadd.f32 %v3690, %v4012
      %v4089 = vadd.f32 %v3691, %v4014
      %v4090 = vadd.f32 %v3692, %v4017
      %v4091 = vadd.f32 %v3693, %v4019
      %v4092 = vadd.f32 %v3694, %v4022
      %v4093 = vadd.f32 %v3695, %v4024
      %v4094 = vadd.f32 %v3696, %v4027
      %v4095 = vadd.f32 %v3697, %v4029
      %v4096 = vadd.f32 %v3698, %v4032
      %v4097 = vadd.f32 %v3699, %v4034
      %v4098 = vadd.f32 %v3700, %v4037
      %v4099 = vadd.f32 %v3701, %v4039
      %v4100 = vadd.f32 %v3702, %v4042
      %v4101 = vadd.f32 %v3703, %v4044
      %v4102 = vadd.f32 %v3704, %v4047
      %v4103 = vadd.f32 %v3705, %v4049
      %v4104 = vadd.f32 %v3706, %v4052
      %v4105 = vadd.f32 %v3707, %v4054
      %v4106 = vadd.f32 %v3708, %v4057
      %v4107 = vadd.f32 %v3709, %v4059
      %v4108 = vadd.f32 %v3710, %v4062
      %v4109 = vadd.f32 %v3711, %v4064
      %v4110 = vadd.f32 %v3712, %v4067
      %v4111 = vadd.f32 %v3713, %v4069
      %v4112 = vadd.f32 %v3714, %v4072
      %v4113 = vadd.f32 %v3715, %v4074
      %v4114 = vadd.f32 %v3716, %v4077
      %v4115 = vadd.f32 %v3717, %v4079
      %v4116 = vadd.f32 %v3718, %v4082
      %v4117 = vadd.f32 %v3719, %v4084
      %v4118 = vld [vmem:[%s2] sm:$0x1]
      %v4120 = vperm.slane %v4118, 0
      %v4122 = vadd.f32 %v4086, %v4120
      %v4123 = vadd.f32 %v4087, %v4120
      %v4124 = vadd.f32 %v4088, %v4120
      %v4125 = vadd.f32 %v4089, %v4120
      %v4126 = vadd.f32 %v4090, %v4120
      %v4127 = vadd.f32 %v4091, %v4120
      %v4128 = vadd.f32 %v4092, %v4120
      %v4129 = vadd.f32 %v4093, %v4120
      %v4130 = vadd.f32 %v4094, %v4120
      %v4131 = vadd.f32 %v4095, %v4120
      %v4132 = vadd.f32 %v4096, %v4120
      %v4133 = vadd.f32 %v4097, %v4120
      %v4134 = vadd.f32 %v4098, %v4120
      %v4135 = vadd.f32 %v4099, %v4120
      %v4136 = vadd.f32 %v4100, %v4120
      %v4137 = vadd.f32 %v4101, %v4120
      %v4138 = vadd.f32 %v4102, %v4120
      %v4139 = vadd.f32 %v4103, %v4120
      %v4140 = vadd.f32 %v4104, %v4120
      %v4141 = vadd.f32 %v4105, %v4120
      %v4142 = vadd.f32 %v4106, %v4120
      %v4143 = vadd.f32 %v4107, %v4120
      %v4144 = vadd.f32 %v4108, %v4120
      %v4145 = vadd.f32 %v4109, %v4120
      %v4146 = vadd.f32 %v4110, %v4120
      %v4147 = vadd.f32 %v4111, %v4120
      %v4148 = vadd.f32 %v4112, %v4120
      %v4149 = vadd.f32 %v4113, %v4120
      %v4150 = vadd.f32 %v4114, %v4120
      %v4151 = vadd.f32 %v4115, %v4120
      %v4152 = vadd.f32 %v4116, %v4120
      %v4153 = vadd.f32 %v4117, %v4120
      %v4154 = vmax.f32 %v4122, 0.0
      %v4155 = vmax.f32 %v4123, 0.0
      %v4156 = vmax.f32 %v4124, 0.0
      %v4157 = vmax.f32 %v4125, 0.0
      %v4158 = vmax.f32 %v4126, 0.0
      %v4159 = vmax.f32 %v4127, 0.0
      %v4160 = vmax.f32 %v4128, 0.0
      %v4161 = vmax.f32 %v4129, 0.0
      %v4162 = vmax.f32 %v4130, 0.0
      %v4163 = vmax.f32 %v4131, 0.0
      %v4164 = vmax.f32 %v4132, 0.0
      %v4165 = vmax.f32 %v4133, 0.0
      %v4166 = vmax.f32 %v4134, 0.0
      %v4167 = vmax.f32 %v4135, 0.0
      %v4168 = vmax.f32 %v4136, 0.0
      %v4169 = vmax.f32 %v4137, 0.0
      %v4170 = vmax.f32 %v4138, 0.0
      %v4171 = vmax.f32 %v4139, 0.0
      %v4172 = vmax.f32 %v4140, 0.0
      %v4173 = vmax.f32 %v4141, 0.0
      %v4174 = vmax.f32 %v4142, 0.0
      %v4175 = vmax.f32 %v4143, 0.0
      %v4176 = vmax.f32 %v4144, 0.0
      %v4177 = vmax.f32 %v4145, 0.0
      %v4178 = vmax.f32 %v4146, 0.0
      %v4179 = vmax.f32 %v4147, 0.0
      %v4180 = vmax.f32 %v4148, 0.0
      %v4181 = vmax.f32 %v4149, 0.0
      %v4182 = vmax.f32 %v4150, 0.0
      %v4183 = vmax.f32 %v4151, 0.0
      %v4184 = vmax.f32 %v4152, 0.0
      %v4185 = vmax.f32 %v4153, 0.0
      %v4186 = vpack.c.bf16 %v4154, %v4154
      %v4187 = vpack.c.bf16 %v4155, %v4155
      %v4188 = vpack.c.bf16 %v4156, %v4156
      %v4189 = vpack.c.bf16 %v4157, %v4157
      %v4190 = vpack.c.bf16 %v4158, %v4158
      %v4191 = vpack.c.bf16 %v4159, %v4159
      %v4192 = vpack.c.bf16 %v4160, %v4160
      %v4193 = vpack.c.bf16 %v4161, %v4161
      %v4194 = vpack.c.bf16 %v4162, %v4162
      %v4195 = vpack.c.bf16 %v4163, %v4163
      %v4196 = vpack.c.bf16 %v4164, %v4164
      %v4197 = vpack.c.bf16 %v4165, %v4165
      %v4198 = vpack.c.bf16 %v4166, %v4166
      %v4199 = vpack.c.bf16 %v4167, %v4167
      %v4200 = vpack.c.bf16 %v4168, %v4168
      %v4201 = vpack.c.bf16 %v4169, %v4169
      %v4202 = vpack.c.bf16 %v4170, %v4170
      %v4203 = vpack.c.bf16 %v4171, %v4171
      %v4204 = vpack.c.bf16 %v4172, %v4172
      %v4205 = vpack.c.bf16 %v4173, %v4173
      %v4206 = vpack.c.bf16 %v4174, %v4174
      %v4207 = vpack.c.bf16 %v4175, %v4175
      %v4208 = vpack.c.bf16 %v4176, %v4176
      %v4209 = vpack.c.bf16 %v4177, %v4177
      %v4210 = vpack.c.bf16 %v4178, %v4178
      %v4211 = vpack.c.bf16 %v4179, %v4179
      %v4212 = vpack.c.bf16 %v4180, %v4180
      %v4213 = vpack.c.bf16 %v4181, %v4181
      %v4214 = vpack.c.bf16 %v4182, %v4182
      %v4215 = vpack.c.bf16 %v4183, %v4183
      %v4216 = vpack.c.bf16 %v4184, %v4184
      %v4217 = vpack.c.bf16 %v4185, %v4185
      %4218 = vst [vmem:[%s194] sm:$0xf] %v4186
      %4219 = vst [vmem:[%s194 + $0x4] sm:$0xf] %v4187
      %4220 = vst [vmem:[%s194 + $0x8] sm:$0xf] %v4188
      %4221 = vst [vmem:[%s194 + $0xc] sm:$0xf] %v4189
      %4222 = vst [vmem:[%s194 + $0x10] sm:$0xf] %v4190
      %4223 = vst [vmem:[%s194 + $0x14] sm:$0xf] %v4191
      %4224 = vst [vmem:[%s194 + $0x18] sm:$0xf] %v4192
      %4225 = vst [vmem:[%s194 + $0x1c] sm:$0xf] %v4193
      %4226 = vst [vmem:[%s194 + $0x20] sm:$0xf] %v4194
      %4227 = vst [vmem:[%s194 + $0x24] sm:$0xf] %v4195
      %4228 = vst [vmem:[%s194 + $0x28] sm:$0xf] %v4196
      %4229 = vst [vmem:[%s194 + $0x2c] sm:$0xf] %v4197
      %4230 = vst [vmem:[%s194 + $0x30] sm:$0xf] %v4198
      %4231 = vst [vmem:[%s194 + $0x34] sm:$0xf] %v4199
      %4232 = vst [vmem:[%s194 + $0x38] sm:$0xf] %v4200
      %4233 = vst [vmem:[%s194 + $0x3c] sm:$0xf] %v4201
      %4234 = vst [vmem:[%s194 + $0x40] sm:$0xf] %v4202
      %4235 = vst [vmem:[%s194 + $0x44] sm:$0xf] %v4203
      %4236 = vst [vmem:[%s194 + $0x48] sm:$0xf] %v4204
      %4237 = vst [vmem:[%s194 + $0x4c] sm:$0xf] %v4205
      %4238 = vst [vmem:[%s194 + $0x50] sm:$0xf] %v4206
      %4239 = vst [vmem:[%s194 + $0x54] sm:$0xf] %v4207
      %4240 = vst [vmem:[%s194 + $0x58] sm:$0xf] %v4208
      %4241 = vst [vmem:[%s194 + $0x5c] sm:$0xf] %v4209
      %4242 = vst [vmem:[%s194 + $0x60] sm:$0xf] %v4210
      %4243 = vst [vmem:[%s194 + $0x64] sm:$0xf] %v4211
      %4244 = vst [vmem:[%s194 + $0x68] sm:$0xf] %v4212
      %4245 = vst [vmem:[%s194 + $0x6c] sm:$0xf] %v4213
      %4246 = vst [vmem:[%s194 + $0x70] sm:$0xf] %v4214
      %4247 = vst [vmem:[%s194 + $0x74] sm:$0xf] %v4215
      %4248 = vst [vmem:[%s194 + $0x78] sm:$0xf] %v4216
      %4249 = vst [vmem:[%s194 + $0x7c] sm:$0xf] %v4217
      %s4250 = smul.u32 16, %s19
      %p4251 = scmp.lt.s32.totalorder %s18, 1
      %s4252 = scalar_select %p4251, %s18, 1
      %p4253 = scmp.lt.s32.totalorder %s4250, 15
      %s4254 = scalar_select %p4253, %s4250, 15
      %s4255 = smul.addr %s4254, 2
      %s4256 = smul.addr %s4252, 32
      %s4257 = sadd.s32 %s4255, %s4256
      %s4258 = smul.addr %s4257, 4
      %s4259 = scalar_lea.vmem %s3, %s4258
      // Predicated region
      $region33: #{conv2d_block_forward.1} parent=31 // pred_check
        %p4260 = pneg %p114
      $region34: #{conv2d_block_forward.1} parent=31 // pred_check_branch
        %4262 = sbr.rel (%p4260) target = $region36
      $region35: #{conv2d_block_forward.1} parent=31 // pred_region
        %s4263 = smul.u32 16, %s19
      $region36: #{conv2d_block_forward.1} parent=31 // pred_fallthru
        _
    $region32: #{conv2d_block_forward.1} parent=5 // pred_fallthru
      _
    %p4264 = scmp.le.s32.totalorder 2, %s9
    // Predicated region
    $region37: #{conv2d_block_forward.1} parent=5 // pred_check
      %p4265 = pneg %p4264
    $region38: #{conv2d_block_forward.1} parent=5 // pred_check_branch
      %4267 = sbr.rel (%p4265) target = $region40
    $region39: #{conv2d_block_forward.1} parent=5 // pred_region
      %s4268 = ssub.s32 %s9, 2
      // Predicated region
      $region41: #{conv2d_block_forward.1} parent=39 // pred_check
        %p4269 = pneg %p120
      $region42: #{conv2d_block_forward.1} parent=39 // pred_check_branch
        %4271 = sbr.rel (%p4269) target = $region44
      $region43: #{conv2d_block_forward.1} parent=39 // pred_region
        %s4272 = smul.u32 16, %s21
        %p4273 = scmp.lt.s32.totalorder %s20, 1
        %s4274 = scalar_select %p4273, %s20, 1
        %p4275 = scmp.lt.s32.totalorder %s4272, 15
        %s4276 = scalar_select %p4275, %s4272, 15
        %s4277 = smul.addr %s4276, 2
        %s4278 = smul.addr %s4274, 32
        %s4279 = sadd.s32 %s4277, %s4278
        %s4280 = smul.addr %s4279, 4
        %s4281 = scalar_lea.vmem %s3, %s4280
      $region44: #{conv2d_block_forward.1} parent=39 // pred_fallthru
        _
    $region40: #{conv2d_block_forward.1} parent=5 // pred_fallthru
      _
  $region6: #{conv2d_block_forward.1} parent=0 // loop_footer
    %s13 = sadd.s32 1, %s9
  $region7: #{conv2d_block_forward.1} parent=0 // loop_footer_branch
    %8 = sbr.rel target = $region3
  $region8: #{conv2d_block_forward.1} parent=0 // loop_exit
    _

</llo_original>
